<compile_context>
chip_gen: v6e
topology: v6e:2x2x1
jax: 0.10.0
libtpu: 0.0.40
codegen_flags: <defaults>
</compile_context>

<pallas_src>
import functools

import jax
import jax.numpy as jnp
from jax.experimental import pallas as pl
from jax.experimental.pallas import tpu as pltpu


def _round_up(x, m):
    return (x + m - 1) // m * m


@functools.lru_cache(maxsize=None)
def _vmem_limit_bytes():
    """Explicit scoped-VMEM limit: ~80% of physical, clamped, safe fallback."""
    try:
        cap = int(pltpu.get_tpu_info().vmem_capacity_bytes)
        return max(32 << 20, min(int(cap * 0.8), 96 << 20))
    except Exception:
        return 48 << 20          # below v7x's 64 MiB physical, > default limits


# ----------------------------------------------------------------------------
# Pallas kernels
# ----------------------------------------------------------------------------

def _matmul_bias_relu_kernel(p_ref, w_ref, b_ref, o_ref):
    """Layer-1 (small Cin) conv as one im2col matmul + bias + ReLU.

    p_ref: (Tr, Kp)   bf16  im2col patches (K padded to 32)
    w_ref: (Kp, Cout) bf16
    b_ref: (1, Cout)  f32
    o_ref: (Tr, Cout) bf16
    """
    y = jnp.dot(p_ref[...], w_ref[...], preferred_element_type=jnp.float32)
    o_ref[...] = jnp.maximum(y + b_ref[...], 0.0).astype(o_ref.dtype)


def _conv3x3_phase_kernel(ph_ref, w_ref, b_ref, o_ref, *, Wpp, Lt):
    """Fused 3x3 / stride-2 / pad-1 conv + bias + ReLU for one output-row tile.

    The wrapper provides 6 phase planes (row parity x column tap) for this row
    tile, flattened spatially with one halo phase row.  Each of the 9 conv
    taps is a *contiguous, sublane-aligned* slab (start 0 or Wpp) of one
    plane; the tap matmuls accumulate into a local f32 value (no VMEM
    round-trip accumulator), then a single bias+ReLU+bf16 store.

    ph_ref: (6, (Tr+1)*Wpp, Cin) bf16
    w_ref : (9, Cin, Cout)       bf16   tap index = 3*di + dj
    b_ref : (1, Cout)            f32
    o_ref : (Lt, Cout)           bf16   Lt = Tr*Wpp
    """
    acc = None
    for di in range(3):
        for dj in range(3):
            q = 3 * (di % 2) + dj                 # phase plane index
            start = (di // 2) * Wpp               # aligned slab start (0 or Wpp)
            x = ph_ref[q, start:start + Lt, :]    # (Lt, Cin) contiguous slab
            # TODO(synk): on v6e/v7x optionally pack pairs of taps along K
            #             (concat two slabs -> K=256) to fill the 256-deep MXU.
            c = jnp.dot(x, w_ref[3 * di + dj], preferred_element_type=jnp.float32)
            acc = c if acc is None else acc + c
    o_ref[...] = jnp.maximum(acc + b_ref[...], 0.0).astype(o_ref.dtype)


def _aggregation_kernel(f_ref, w_ref, b_ref, o_ref, *, gem_p, gem_eps, l2_eps):
    """Fused L2Norm -> GeM -> Flatten -> Linear -> L2Norm for a batch tile.

    f_ref: (Bt, HW, C) bf16  backbone feature maps (spatial flattened)
    w_ref: (C, Dp)     bf16  Linear weight (transposed, zero-padded to Dp)
    b_ref: (1, Dp)     f32   Linear bias (zero-padded)
    o_ref: (Bt, Dp)    f32   L2-normalized descriptors (lane-dense)
    """
    f = f_ref[...].astype(jnp.float32)                         # (Bt, HW, C)

    # Channel L2Norm: x * rsqrt(max(||x||^2, eps^2))  (rsqrt -> EUP, no divide)
    inv = jax.lax.rsqrt(jnp.maximum(jnp.sum(f * f, axis=-1, keepdims=True),
                                    l2_eps * l2_eps))
    fn = f * inv

    # GeM pooling: mean over spatial of clamp(x, eps)^p, then ^(1/p)
    fc = jnp.maximum(fn, gem_eps)
    fp = fc * fc * fc if gem_p == 3.0 else jnp.exp(gem_p * jnp.log(fc))
    g = jnp.mean(fp, axis=1)                                   # (Bt, C)
    g = jnp.exp(jnp.log(g) * (1.0 / gem_p))                    # g >= eps^p > 0

    # Flatten -> Linear (bf16 operands, f32 accumulate).  Zero-padded columns
    # of w/b give zero outputs, so the L2 norm below is unaffected.
    y = jnp.dot(g.astype(jnp.bfloat16), w_ref[...],
                preferred_element_type=jnp.float32) + b_ref[...]

    # Output L2Norm
    inv_y = jax.lax.rsqrt(jnp.maximum(jnp.sum(y * y, axis=-1, keepdims=True),
                                      l2_eps * l2_eps))
    o_ref[...] = (y * inv_y).astype(o_ref.dtype)


# ----------------------------------------------------------------------------
# Wrappers (phase/patch construction, padding, pallas_call plumbing)
# ----------------------------------------------------------------------------

def conv3x3_s2_relu_im2col(x_nhwc, w_hwio, b, *, rows_per_tile=1024):
    """First-layer (small Cin) 3x3/stride-2/pad-1 conv + ReLU via explicit im2col.

    A lane dim of Cin=3 would be padded to 128 lanes (~42x waste); instead the
    wrapper builds (L, 9*Cin)->K=32 patches (9x of a tiny tensor) and the
    kernel does a single K=32 matmul per row tile.
    """
    B, H, W, Cin = x_nhwc.shape
    Cout = w_hwio.shape[-1]
    Ho = (H - 1) // 2 + 1
    Wo = (W - 1) // 2 + 1
    K = 9 * Cin
    Kp = _round_up(K, 32)
    L = Ho * Wo
    Tr = _round_up(min(rows_per_tile, _round_up(L, 16)), 16)
    Lp = _round_up(L, Tr)
    T = Lp // Tr

    xp = jnp.pad(x_nhwc.astype(jnp.bfloat16),
                 ((0, 0), (1, 2 * Ho + 1 - H), (1, 2 * Wo + 1 - W), (0, 0)))
    taps = [xp[:, di:di + 2 * Ho:2, dj:dj + 2 * Wo:2, :]
            for di in range(3) for dj in range(3)]
    patches = jnp.stack(taps, axis=3).reshape(B, L, K)       # im2col (B, L, 27)
    patches = jnp.pad(patches, ((0, 0), (0, Lp - L), (0, Kp - K)))

    wk = jnp.pad(w_hwio.reshape(K, Cout), ((0, Kp - K), (0, 0))).astype(jnp.bfloat16)
    b2 = b.reshape(1, Cout).astype(jnp.float32)

    out = pl.pallas_call(
        _matmul_bias_relu_kernel,
        out_shape=jax.ShapeDtypeStruct((B, Lp, Cout), jnp.bfloat16),
        grid=(B, T),
        in_specs=[
            pl.BlockSpec((None, Tr, Kp), lambda bi, ti: (bi, ti, 0)),
            pl.BlockSpec((Kp, Cout), lambda bi, ti: (0, 0)),
            pl.BlockSpec((1, Cout), lambda bi, ti: (0, 0)),
        ],
        out_specs=pl.BlockSpec((None, Tr, Cout), lambda bi, ti: (bi, ti, 0)),
        compiler_params=pltpu.CompilerParams(
            dimension_semantics=("parallel", "parallel"),
            vmem_limit_bytes=_vmem_limit_bytes()),
    )(patches, wk, b2)
    return out[:, :L, :].reshape(B, Ho, Wo, Cout)


def conv3x3_s2_relu_phases(x_nhwc, w_hwio, b, *, rows_per_tile=1024):
    """3x3/stride-2/pad-1 conv + ReLU with im2col fused into the Pallas kernel.

    The padded input is decomposed into 6 phase planes
        plane[3*(di%2) + dj][rr, cc] = xp[2*rr + di%2, 2*cc + dj]
    so every tap slab is contiguous and sublane-aligned (start 0 or Wpp).
    Grid = (batch, output-row-tiles); each tile window carries 1 halo row.
    """
    B, H, W, Cin = x_nhwc.shape
    Cout = w_hwio.shape[-1]
    Ho = (H - 1) // 2 + 1
    Wo = (W - 1) // 2 + 1
    Wpp = _round_up(Wo, 16)                       # aligned slab starts (bf16)
    Tr = max(1, min(Ho, rows_per_tile // Wpp))    # output rows per grid step
    Ho_pad = _round_up(Ho, Tr)
    T = Ho_pad // Tr
    Hpr = Ho_pad + 1                              # +1 halo phase row (di=2 taps)
    Lt = Tr * Wpp                                 # flattened rows per tile

    # One fused pad (input already bf16 after layer 1; cast folded otherwise).
    xp = jnp.pad(x_nhwc.astype(jnp.bfloat16),
                 ((0, 0), (1, 2 * Ho_pad + 1 - H), (1, 2 * Wpp - W), (0, 0)))
    # TODO(synk): for very large images build these windows with in-kernel
    #             strided DMA (memory_space=pl.ANY) instead of a wrapper pass.
    planes = jnp.stack(
        [xp[:, pr::2, dj::2, :][:, :Hpr, :Wpp, :]
         for pr in (0, 1) for dj in (0, 1, 2)], axis=1)       # (B,6,Hpr,Wpp,Cin)
    # Per-row-tile windows (1-row halo each), flattened for aligned slab slices.
    tiles = jnp.stack([planes[:, :, t * Tr:t * Tr + Tr + 1] for t in range(T)],
                      axis=1)                                 # (B,T,6,Tr+1,Wpp,Cin)
    tiles = tiles.reshape(B, T, 6, (Tr + 1) * Wpp, Cin)

    w9 = w_hwio.reshape(9, Cin, Cout).astype(jnp.bfloat16)
    b2 = b.reshape(1, Cout).astype(jnp.float32)

    kern = functools.partial(_conv3x3_phase_kernel, Wpp=Wpp, Lt=Lt)
    out = pl.pallas_call(
        kern,
        out_shape=jax.ShapeDtypeStruct((B, T, Lt, Cout), jnp.bfloat16),
        grid=(B, T),
        in_specs=[
            pl.BlockSpec((None, None, 6, (Tr + 1) * Wpp, Cin),
                         lambda bi, ti: (bi, ti, 0, 0, 0)),
            pl.BlockSpec((9, Cin, Cout), lambda bi, ti: (0, 0, 0)),
            pl.BlockSpec((1, Cout), lambda bi, ti: (0, 0)),
        ],
        out_specs=pl.BlockSpec((None, None, Lt, Cout),
                               lambda bi, ti: (bi, ti, 0, 0)),
        compiler_params=pltpu.CompilerParams(
            dimension_semantics=("parallel", "parallel"),
            vmem_limit_bytes=_vmem_limit_bytes()),
    )(tiles, w9, b2)

    out = out.reshape(B, Ho_pad, Wpp, Cout)       # undo row-tile packing
    return out[:, :Ho, :Wo, :]                    # drop padded rows / columns


def aggregation(feat_nhwc, w_fc, b_fc, *, gem_p=3.0, gem_eps=1e-6, l2_eps=1e-12,
                batch_tile=4):
    """L2Norm -> GeM -> Flatten -> Linear -> L2Norm, fused, batched over B."""
    # TODO(synk): for very large HW add an "arbitrary" HW grid axis with a
    #             (Bt, C) GeM partial-sum scratch and pl.when init/finalize.
    B, H, W, C = feat_nhwc.shape
    HW = H * W
    D = w_fc.shape[1]
    Dp = _round_up(D, 128)               # lane-dense output, sliced back below
    Bt = max(1, min(batch_tile, B))
    Bp = _round_up(B, Bt)

    f = feat_nhwc.reshape(B, HW, C).astype(jnp.bfloat16)
    if Bp != B:
        f = jnp.pad(f, ((0, Bp - B), (0, 0), (0, 0)))
    w = jnp.pad(w_fc, ((0, 0), (0, Dp - D))).astype(jnp.bfloat16)
    bb = jnp.pad(b_fc, (0, Dp - D)).reshape(1, Dp).astype(jnp.float32)

    kern = functools.partial(_aggregation_kernel,
                             gem_p=gem_p, gem_eps=gem_eps, l2_eps=l2_eps)
    out = pl.pallas_call(
        kern,
        out_shape=jax.ShapeDtypeStruct((Bp, Dp), jnp.float32),
        grid=(Bp // Bt,),
        in_specs=[
            pl.BlockSpec((Bt, HW, C), lambda i: (i, 0, 0)),
            pl.BlockSpec((C, Dp), lambda i: (0, 0)),
            pl.BlockSpec((1, Dp), lambda i: (0, 0)),
        ],
        out_specs=pl.BlockSpec((Bt, Dp), lambda i: (i, 0)),
        compiler_params=pltpu.CompilerParams(
            dimension_semantics=("parallel",),
            vmem_limit_bytes=_vmem_limit_bytes()),
    )(f, w, bb)
    return out[:B, :D]


# ----------------------------------------------------------------------------
# Model
# ----------------------------------------------------------------------------

def init_params(key, features_dim=128, fc_output_dim=64):
    """Deterministic synthetic parameters (lane-friendly 128-wide hidden convs)."""
    ks = jax.random.split(key, 8)
    scale = 0.05
    chans = [3, 128, 128, features_dim]
    params = {"convs": []}
    for li in range(3):
        cin, cout = chans[li], chans[li + 1]
        w = scale * jax.random.normal(ks[2 * li], (3, 3, cin, cout), jnp.float32)
        bb = scale * jax.random.normal(ks[2 * li + 1], (cout,), jnp.float32)
        params["convs"].append((w, bb))
    # Linear(features_dim, fc_output_dim); stored transposed: (C, D)
    params["w_fc"] = scale * jax.random.normal(ks[6], (features_dim, fc_output_dim),
                                               jnp.float32)
    params["b_fc"] = scale * jax.random.normal(ks[7], (fc_output_dim,), jnp.float32)
    return params


@jax.jit
def geo_localization_forward(params, x_nchw):
    """x_nchw: (B, 3, H, W) f32 (PyTorch NCHW).  Returns (B, fc_output_dim)."""
    x = jnp.transpose(x_nchw, (0, 2, 3, 1))                 # NCHW -> NHWC
    for (w, b) in params["convs"]:                          # synthetic backbone
        if x.shape[-1] <= 16:                               # small-Cin layer 1
            x = conv3x3_s2_relu_im2col(x, w, b)
        else:                                               # lane-wide layers
            x = conv3x3_s2_relu_phases(x, w, b)
    return aggregation(x, params["w_fc"], params["b_fc"])   # fused aggregation


@jax.jit
def reference_forward(params, x_nchw):
    """Pure-JAX reference with the same bf16-activation / f32-accumulate numerics."""
    x = jnp.transpose(x_nchw, (0, 2, 3, 1))
    for (w, b) in params["convs"]:
        y = jax.lax.conv_general_dilated(
            x.astype(jnp.bfloat16), w.astype(jnp.bfloat16),
            window_strides=(2, 2), padding=((1, 1), (1, 1)),
            dimension_numbers=("NHWC", "HWIO", "NHWC"),
            preferred_element_type=jnp.float32)
        x = jnp.maximum(y + b, 0.0).astype(jnp.bfloat16)    # bf16 activations
    B = x.shape[0]
    f = x.reshape(B, -1, x.shape[-1]).astype(jnp.float32)
    fn = f / jnp.maximum(jnp.linalg.norm(f, axis=-1, keepdims=True), 1e-12)
    g = jnp.mean(jnp.maximum(fn, 1e-6) ** 3, axis=1) ** (1.0 / 3.0)
    y = jnp.dot(g.astype(jnp.bfloat16), params["w_fc"].astype(jnp.bfloat16),
                preferred_element_type=jnp.float32) + params["b_fc"]
    return y / jnp.maximum(jnp.linalg.norm(y, axis=-1, keepdims=True), 1e-12)


if __name__ == "__main__":
    key = jax.random.PRNGKey(0)
    k_param, k_input = jax.random.split(key)

    params = init_params(k_param, features_dim=128, fc_output_dim=64)
    x = jax.random.normal(k_input, (2, 3, 16, 16), jnp.float32)   # NCHW input

    out = jax.block_until_ready(geo_localization_forward(params, x))
    assert out.shape == (2, 64), out.shape

    # Output rows are L2-normalized descriptors.
    norms = jnp.linalg.norm(out, axis=-1)
    assert bool(jnp.all(jnp.abs(norms - 1.0) < 1e-3)), norms

    # Check against a pure-JAX reference of the same forward pass.
    ref = jax.block_until_ready(reference_forward(params, x))
    err = float(jnp.max(jnp.abs(out - ref)))
    assert err < 1e-2, err

    print("KERNEL_OK")
</pallas_src>

<mosaic_0001>
module attributes {stable_mosaic.version = 11 : i64} {
  func.func @_matmul_bias_relu_kernel(%arg0: i32, %arg1: i32, %arg2: memref<1x64x32xbf16, #tpu.memory_space<vmem>>, %arg3: memref<32x128xbf16, #tpu.memory_space<vmem>>, %arg4: memref<1x128xf32, #tpu.memory_space<vmem>>, %arg5: memref<1x64x128xbf16, #tpu.memory_space<vmem>>) attributes {dimension_semantics = [#tpu.dimension_semantics<parallel>, #tpu.dimension_semantics<parallel>], iteration_bounds = array<i64: 2, 1>, scalar_prefetch = 0 : i64, scratch_operands = 0 : i64, tpu.core_type = #tpu.core_type<tc>, window_params = [{transform_indices = @transform_0, window_bounds = array<i64: 1, 64, 32>}, {pipeline_mode = #tpu.pipeline_mode<synchronous>, transform_indices = @transform_1, window_bounds = array<i64: 32, 128>}, {pipeline_mode = #tpu.pipeline_mode<synchronous>, transform_indices = @transform_2, window_bounds = array<i64: 1, 128>}, {transform_indices = @transform_3, window_bounds = array<i64: 1, 64, 128>}]} {
    %c0 = arith.constant 0 : index
    %c0_0 = arith.constant 0 : index
    %c0_1 = arith.constant 0 : index
    %0 = vector.load %arg2[%c0, %c0_0, %c0_1] : memref<1x64x32xbf16, #tpu.memory_space<vmem>>, vector<1x64x32xbf16>
    %1 = vector.shape_cast %0 : vector<1x64x32xbf16> to vector<64x32xbf16>
    %c0_2 = arith.constant 0 : index
    %c0_3 = arith.constant 0 : index
    %2 = vector.load %arg3[%c0_2, %c0_3] : memref<32x128xbf16, #tpu.memory_space<vmem>>, vector<32x128xbf16>
    %cst = arith.constant dense<0.000000e+00> : vector<64x128xf32>
    %3 = tpu.matmul %1, %2, %cst {dimension_numbers = #tpu.dot_dimension_numbers<[1], [0], [0], [1], [0, 0, 1, 1], [], []>} : vector<64x32xbf16>, vector<32x128xbf16>, vector<64x128xf32> -> vector<64x128xf32>
    %c0_4 = arith.constant 0 : index
    %c0_5 = arith.constant 0 : index
    %4 = vector.load %arg4[%c0_4, %c0_5] : memref<1x128xf32, #tpu.memory_space<vmem>>, vector<1x128xf32>
    %5 = vector.broadcast %4 : vector<1x128xf32> to vector<64x128xf32>
    %6 = arith.addf %3, %5 : vector<64x128xf32>
    %cst_6 = arith.constant 0.000000e+00 : f32
    %7 = vector.broadcast %cst_6 : f32 to vector<64x128xf32>
    %8 = arith.maximumf %6, %7 : vector<64x128xf32>
    %9 = arith.truncf %8 : vector<64x128xf32> to vector<64x128xbf16>
    %c0_7 = arith.constant 0 : index
    %c0_8 = arith.constant 0 : index
    %c0_9 = arith.constant 0 : index
    %10 = vector.load %arg5[%c0_7, %c0_8, %c0_9] : memref<1x64x128xbf16, #tpu.memory_space<vmem>>, vector<1x64x128xbf16>
    %11 = vector.shape_cast %10 : vector<1x64x128xbf16> to vector<64x128xbf16>
    %12 = vector.shape_cast %9 : vector<64x128xbf16> to vector<1x64x128xbf16>
    tpu.vector_store %arg5[%c0_7, %c0_8, %c0_9], %12 {strides = array<i32>} : memref<1x64x128xbf16, #tpu.memory_space<vmem>>, vector<1x64x128xbf16>,
    return
  }
  func.func @transform_0(%arg0: i32, %arg1: i32) -> (i32, i32, i32) {
    %c0_i32 = arith.constant 0 : i32
    %c0_i32_0 = arith.constant 0 : i32
    return %arg0, %arg1, %c0_i32 : i32, i32, i32
  }
  func.func @transform_1(%arg0: i32, %arg1: i32) -> (i32, i32) {
    %c0_i32 = arith.constant 0 : i32
    %c0_i32_0 = arith.constant 0 : i32
    %c0_i32_1 = arith.constant 0 : i32
    return %c0_i32, %c0_i32_0 : i32, i32
  }
  func.func @transform_2(%arg0: i32, %arg1: i32) -> (i32, i32) {
    %c0_i32 = arith.constant 0 : i32
    %c0_i32_0 = arith.constant 0 : i32
    %c0_i32_1 = arith.constant 0 : i32
    return %c0_i32, %c0_i32_0 : i32, i32
  }
  func.func @transform_3(%arg0: i32, %arg1: i32) -> (i32, i32, i32) {
    %c0_i32 = arith.constant 0 : i32
    %c0_i32_0 = arith.constant 0 : i32
    return %arg0, %arg1, %c0_i32 : i32, i32, i32
  }
}

module attributes {stable_mosaic.version = 11 : i64} {
  func.func @_conv3x3_phase_kernel(%arg0: i32, %arg1: i32, %arg2: memref<1x1x6x80x128xbf16, #tpu.memory_space<vmem>>, %arg3: memref<9x128x128xbf16, #tpu.memory_space<vmem>>, %arg4: memref<1x128xf32, #tpu.memory_space<vmem>>, %arg5: memref<1x1x64x128xbf16, #tpu.memory_space<vmem>>) attributes {dimension_semantics = [#tpu.dimension_semantics<parallel>, #tpu.dimension_semantics<parallel>], iteration_bounds = array<i64: 2, 1>, scalar_prefetch = 0 : i64, scratch_operands = 0 : i64, tpu.core_type = #tpu.core_type<tc>, window_params = [{transform_indices = @transform_0, window_bounds = array<i64: 1, 1, 6, 80, 128>}, {pipeline_mode = #tpu.pipeline_mode<synchronous>, transform_indices = @transform_1, window_bounds = array<i64: 9, 128, 128>}, {pipeline_mode = #tpu.pipeline_mode<synchronous>, transform_indices = @transform_2, window_bounds = array<i64: 1, 128>}, {transform_indices = @transform_3, window_bounds = array<i64: 1, 1, 64, 128>}]} {
    %c0 = arith.constant 0 : index
    %c0_0 = arith.constant 0 : index
    %c0_1 = arith.constant 0 : index
    %c0_2 = arith.constant 0 : index
    %c0_3 = arith.constant 0 : index
    %0 = vector.load %arg2[%c0, %c0_0, %c0_1, %c0_2, %c0_3] : memref<1x1x6x80x128xbf16, #tpu.memory_space<vmem>>, vector<1x1x1x64x128xbf16>
    %1 = vector.shape_cast %0 : vector<1x1x1x64x128xbf16> to vector<64x128xbf16>
    %c0_4 = arith.constant 0 : index
    %c0_5 = arith.constant 0 : index
    %c0_6 = arith.constant 0 : index
    %2 = vector.load %arg3[%c0_4, %c0_5, %c0_6] : memref<9x128x128xbf16, #tpu.memory_space<vmem>>, vector<1x128x128xbf16>
    %3 = vector.shape_cast %2 : vector<1x128x128xbf16> to vector<128x128xbf16>
    %cst = arith.constant dense<0.000000e+00> : vector<64x128xf32>
    %4 = tpu.matmul %1, %3, %cst {dimension_numbers = #tpu.dot_dimension_numbers<[1], [0], [0], [1], [0, 0, 1, 1], [], []>} : vector<64x128xbf16>, vector<128x128xbf16>, vector<64x128xf32> -> vector<64x128xf32>
    %c0_7 = arith.constant 0 : index
    %c0_8 = arith.constant 0 : index
    %c1 = arith.constant 1 : index
    %c0_9 = arith.constant 0 : index
    %c0_10 = arith.constant 0 : index
    %5 = vector.load %arg2[%c0_7, %c0_8, %c1, %c0_9, %c0_10] : memref<1x1x6x80x128xbf16, #tpu.memory_space<vmem>>, vector<1x1x1x64x128xbf16>
    %6 = vector.shape_cast %5 : vector<1x1x1x64x128xbf16> to vector<64x128xbf16>
    %c1_11 = arith.constant 1 : index
    %c0_12 = arith.constant 0 : index
    %c0_13 = arith.constant 0 : index
    %7 = vector.load %arg3[%c1_11, %c0_12, %c0_13] : memref<9x128x128xbf16, #tpu.memory_space<vmem>>, vector<1x128x128xbf16>
    %8 = vector.shape_cast %7 : vector<1x128x128xbf16> to vector<128x128xbf16>
    %cst_14 = arith.constant dense<0.000000e+00> : vector<64x128xf32>
    %9 = tpu.matmul %6, %8, %cst_14 {dimension_numbers = #tpu.dot_dimension_numbers<[1], [0], [0], [1], [0, 0, 1, 1], [], []>} : vector<64x128xbf16>, vector<128x128xbf16>, vector<64x128xf32> -> vector<64x128xf32>
    %10 = arith.addf %4, %9 : vector<64x128xf32>
    %c0_15 = arith.constant 0 : index
    %c0_16 = arith.constant 0 : index
    %c2 = arith.constant 2 : index
    %c0_17 = arith.constant 0 : index
    %c0_18 = arith.constant 0 : index
    %11 = vector.load %arg2[%c0_15, %c0_16, %c2, %c0_17, %c0_18] : memref<1x1x6x80x128xbf16, #tpu.memory_space<vmem>>, vector<1x1x1x64x128xbf16>
    %12 = vector.shape_cast %11 : vector<1x1x1x64x128xbf16> to vector<64x128xbf16>
    %c2_19 = arith.constant 2 : index
    %c0_20 = arith.constant 0 : index
    %c0_21 = arith.constant 0 : index
    %13 = vector.load %arg3[%c2_19, %c0_20, %c0_21] : memref<9x128x128xbf16, #tpu.memory_space<vmem>>, vector<1x128x128xbf16>
    %14 = vector.shape_cast %13 : vector<1x128x128xbf16> to vector<128x128xbf16>
    %cst_22 = arith.constant dense<0.000000e+00> : vector<64x128xf32>
    %15 = tpu.matmul %12, %14, %cst_22 {dimension_numbers = #tpu.dot_dimension_numbers<[1], [0], [0], [1], [0, 0, 1, 1], [], []>} : vector<64x128xbf16>, vector<128x128xbf16>, vector<64x128xf32> -> vector<64x128xf32>
    %16 = arith.addf %10, %15 : vector<64x128xf32>
    %c0_23 = arith.constant 0 : index
    %c0_24 = arith.constant 0 : index
    %c3 = arith.constant 3 : index
    %c0_25 = arith.constant 0 : index
    %c0_26 = arith.constant 0 : index
    %17 = vector.load %arg2[%c0_23, %c0_24, %c3, %c0_25, %c0_26] : memref<1x1x6x80x128xbf16, #tpu.memory_space<vmem>>, vector<1x1x1x64x128xbf16>
    %18 = vector.shape_cast %17 : vector<1x1x1x64x128xbf16> to vector<64x128xbf16>
    %c3_27 = arith.constant 3 : index
    %c0_28 = arith.constant 0 : index
    %c0_29 = arith.constant 0 : index
    %19 = vector.load %arg3[%c3_27, %c0_28, %c0_29] : memref<9x128x128xbf16, #tpu.memory_space<vmem>>, vector<1x128x128xbf16>
    %20 = vector.shape_cast %19 : vector<1x128x128xbf16> to vector<128x128xbf16>
    %cst_30 = arith.constant dense<0.000000e+00> : vector<64x128xf32>
    %21 = tpu.matmul %18, %20, %cst_30 {dimension_numbers = #tpu.dot_dimension_numbers<[1], [0], [0], [1], [0, 0, 1, 1], [], []>} : vector<64x128xbf16>, vector<128x128xbf16>, vector<64x128xf32> -> vector<64x128xf32>
    %22 = arith.addf %16, %21 : vector<64x128xf32>
    %c0_31 = arith.constant 0 : index
    %c0_32 = arith.constant 0 : index
    %c4 = arith.constant 4 : index
    %c0_33 = arith.constant 0 : index
    %c0_34 = arith.constant 0 : index
    %23 = vector.load %arg2[%c0_31, %c0_32, %c4, %c0_33, %c0_34] : memref<1x1x6x80x128xbf16, #tpu.memory_space<vmem>>, vector<1x1x1x64x128xbf16>
    %24 = vector.shape_cast %23 : vector<1x1x1x64x128xbf16> to vector<64x128xbf16>
    %c4_35 = arith.constant 4 : index
    %c0_36 = arith.constant 0 : index
    %c0_37 = arith.constant 0 : index
    %25 = vector.load %arg3[%c4_35, %c0_36, %c0_37] : memref<9x128x128xbf16, #tpu.memory_space<vmem>>, vector<1x128x128xbf16>
    %26 = vector.shape_cast %25 : vector<1x128x128xbf16> to vector<128x128xbf16>
    %cst_38 = arith.constant dense<0.000000e+00> : vector<64x128xf32>
    %27 = tpu.matmul %24, %26, %cst_38 {dimension_numbers = #tpu.dot_dimension_numbers<[1], [0], [0], [1], [0, 0, 1, 1], [], []>} : vector<64x128xbf16>, vector<128x128xbf16>, vector<64x128xf32> -> vector<64x128xf32>
    %28 = arith.addf %22, %27 : vector<64x128xf32>
    %c0_39 = arith.constant 0 : index
    %c0_40 = arith.constant 0 : index
    %c5 = arith.constant 5 : index
    %c0_41 = arith.constant 0 : index
    %c0_42 = arith.constant 0 : index
    %29 = vector.load %arg2[%c0_39, %c0_40, %c5, %c0_41, %c0_42] : memref<1x1x6x80x128xbf16, #tpu.memory_space<vmem>>, vector<1x1x1x64x128xbf16>
    %30 = vector.shape_cast %29 : vector<1x1x1x64x128xbf16> to vector<64x128xbf16>
    %c5_43 = arith.constant 5 : index
    %c0_44 = arith.constant 0 : index
    %c0_45 = arith.constant 0 : index
    %31 = vector.load %arg3[%c5_43, %c0_44, %c0_45] : memref<9x128x128xbf16, #tpu.memory_space<vmem>>, vector<1x128x128xbf16>
    %32 = vector.shape_cast %31 : vector<1x128x128xbf16> to vector<128x128xbf16>
    %cst_46 = arith.constant dense<0.000000e+00> : vector<64x128xf32>
    %33 = tpu.matmul %30, %32, %cst_46 {dimension_numbers = #tpu.dot_dimension_numbers<[1], [0], [0], [1], [0, 0, 1, 1], [], []>} : vector<64x128xbf16>, vector<128x128xbf16>, vector<64x128xf32> -> vector<64x128xf32>
    %34 = arith.addf %28, %33 : vector<64x128xf32>
    %c0_47 = arith.constant 0 : index
    %c0_48 = arith.constant 0 : index
    %c0_49 = arith.constant 0 : index
    %c16 = arith.constant 16 : index
    %c0_50 = arith.constant 0 : index
    %35 = vector.load %arg2[%c0_47, %c0_48, %c0_49, %c16, %c0_50] : memref<1x1x6x80x128xbf16, #tpu.memory_space<vmem>>, vector<1x1x1x64x128xbf16>
    %36 = vector.shape_cast %35 : vector<1x1x1x64x128xbf16> to vector<64x128xbf16>
    %c6 = arith.constant 6 : index
    %c0_51 = arith.constant 0 : index
    %c0_52 = arith.constant 0 : index
    %37 = vector.load %arg3[%c6, %c0_51, %c0_52] : memref<9x128x128xbf16, #tpu.memory_space<vmem>>, vector<1x128x128xbf16>
    %38 = vector.shape_cast %37 : vector<1x128x128xbf16> to vector<128x128xbf16>
    %cst_53 = arith.constant dense<0.000000e+00> : vector<64x128xf32>
    %39 = tpu.matmul %36, %38, %cst_53 {dimension_numbers = #tpu.dot_dimension_numbers<[1], [0], [0], [1], [0, 0, 1, 1], [], []>} : vector<64x128xbf16>, vector<128x128xbf16>, vector<64x128xf32> -> vector<64x128xf32>
    %40 = arith.addf %34, %39 : vector<64x128xf32>
    %c0_54 = arith.constant 0 : index
    %c0_55 = arith.constant 0 : index
    %c1_56 = arith.constant 1 : index
    %c16_57 = arith.constant 16 : index
    %c0_58 = arith.constant 0 : index
    %41 = vector.load %arg2[%c0_54, %c0_55, %c1_56, %c16_57, %c0_58] : memref<1x1x6x80x128xbf16, #tpu.memory_space<vmem>>, vector<1x1x1x64x128xbf16>
    %42 = vector.shape_cast %41 : vector<1x1x1x64x128xbf16> to vector<64x128xbf16>
    %c7 = arith.constant 7 : index
    %c0_59 = arith.constant 0 : index
    %c0_60 = arith.constant 0 : index
    %43 = vector.load %arg3[%c7, %c0_59, %c0_60] : memref<9x128x128xbf16, #tpu.memory_space<vmem>>, vector<1x128x128xbf16>
    %44 = vector.shape_cast %43 : vector<1x128x128xbf16> to vector<128x128xbf16>
    %cst_61 = arith.constant dense<0.000000e+00> : vector<64x128xf32>
    %45 = tpu.matmul %42, %44, %cst_61 {dimension_numbers = #tpu.dot_dimension_numbers<[1], [0], [0], [1], [0, 0, 1, 1], [], []>} : vector<64x128xbf16>, vector<128x128xbf16>, vector<64x128xf32> -> vector<64x128xf32>
    %46 = arith.addf %40, %45 : vector<64x128xf32>
    %c0_62 = arith.constant 0 : index
    %c0_63 = arith.constant 0 : index
    %c2_64 = arith.constant 2 : index
    %c16_65 = arith.constant 16 : index
    %c0_66 = arith.constant 0 : index
    %47 = vector.load %arg2[%c0_62, %c0_63, %c2_64, %c16_65, %c0_66] : memref<1x1x6x80x128xbf16, #tpu.memory_space<vmem>>, vector<1x1x1x64x128xbf16>
    %48 = vector.shape_cast %47 : vector<1x1x1x64x128xbf16> to vector<64x128xbf16>
    %c8 = arith.constant 8 : index
    %c0_67 = arith.constant 0 : index
    %c0_68 = arith.constant 0 : index
    %49 = vector.load %arg3[%c8, %c0_67, %c0_68] : memref<9x128x128xbf16, #tpu.memory_space<vmem>>, vector<1x128x128xbf16>
    %50 = vector.shape_cast %49 : vector<1x128x128xbf16> to vector<128x128xbf16>
    %cst_69 = arith.constant dense<0.000000e+00> : vector<64x128xf32>
    %51 = tpu.matmul %48, %50, %cst_69 {dimension_numbers = #tpu.dot_dimension_numbers<[1], [0], [0], [1], [0, 0, 1, 1], [], []>} : vector<64x128xbf16>, vector<128x128xbf16>, vector<64x128xf32> -> vector<64x128xf32>
    %52 = arith.addf %46, %51 : vector<64x128xf32>
    %c0_70 = arith.constant 0 : index
    %c0_71 = arith.constant 0 : index
    %53 = vector.load %arg4[%c0_70, %c0_71] : memref<1x128xf32, #tpu.memory_space<vmem>>, vector<1x128xf32>
    %54 = vector.broadcast %53 : vector<1x128xf32> to vector<64x128xf32>
    %55 = arith.addf %52, %54 : vector<64x128xf32>
    %cst_72 = arith.constant 0.000000e+00 : f32
    %56 = vector.broadcast %cst_72 : f32 to vector<64x128xf32>
    %57 = arith.maximumf %55, %56 : vector<64x128xf32>
    %58 = arith.truncf %57 : vector<64x128xf32> to vector<64x128xbf16>
    %c0_73 = arith.constant 0 : index
    %c0_74 = arith.constant 0 : index
    %c0_75 = arith.constant 0 : index
    %c0_76 = arith.constant 0 : index
    %59 = vector.load %arg5[%c0_73, %c0_74, %c0_75, %c0_76] : memref<1x1x64x128xbf16, #tpu.memory_space<vmem>>, vector<1x1x64x128xbf16>
    %60 = vector.shape_cast %59 : vector<1x1x64x128xbf16> to vector<64x128xbf16>
    %61 = vector.shape_cast %58 : vector<64x128xbf16> to vector<1x1x64x128xbf16>
    tpu.vector_store %arg5[%c0_73, %c0_74, %c0_75, %c0_76], %61 {strides = array<i32>} : memref<1x1x64x128xbf16, #tpu.memory_space<vmem>>, vector<1x1x64x128xbf16>,
    return
  }
  func.func @transform_0(%arg0: i32, %arg1: i32) -> (i32, i32, i32, i32, i32) {
    %c0_i32 = arith.constant 0 : i32
    %c0_i32_0 = arith.constant 0 : i32
    %c0_i32_1 = arith.constant 0 : i32
    %c0_i32_2 = arith.constant 0 : i32
    return %arg0, %arg1, %c0_i32, %c0_i32_0, %c0_i32_1 : i32, i32, i32, i32, i32
  }
  func.func @transform_1(%arg0: i32, %arg1: i32) -> (i32, i32, i32) {
    %c0_i32 = arith.constant 0 : i32
    %c0_i32_0 = arith.constant 0 : i32
    %c0_i32_1 = arith.constant 0 : i32
    %c0_i32_2 = arith.constant 0 : i32
    return %c0_i32, %c0_i32_0, %c0_i32_1 : i32, i32, i32
  }
  func.func @transform_2(%arg0: i32, %arg1: i32) -> (i32, i32) {
    %c0_i32 = arith.constant 0 : i32
    %c0_i32_0 = arith.constant 0 : i32
    %c0_i32_1 = arith.constant 0 : i32
    return %c0_i32, %c0_i32_0 : i32, i32
  }
  func.func @transform_3(%arg0: i32, %arg1: i32) -> (i32, i32, i32, i32) {
    %c0_i32 = arith.constant 0 : i32
    %c0_i32_0 = arith.constant 0 : i32
    %c0_i32_1 = arith.constant 0 : i32
    return %arg0, %arg1, %c0_i32, %c0_i32_0 : i32, i32, i32, i32
  }
}

module attributes {stable_mosaic.version = 11 : i64} {
  func.func @_aggregation_kernel(%arg0: i32, %arg1: memref<2x4x128xbf16, #tpu.memory_space<vmem>>, %arg2: memref<128x128xbf16, #tpu.memory_space<vmem>>, %arg3: memref<1x128xf32, #tpu.memory_space<vmem>>, %arg4: memref<2x128xf32, #tpu.memory_space<vmem>>) attributes {dimension_semantics = [#tpu.dimension_semantics<parallel>], iteration_bounds = array<i64: 1>, scalar_prefetch = 0 : i64, scratch_operands = 0 : i64, tpu.core_type = #tpu.core_type<tc>, window_params = [{transform_indices = @transform_0, window_bounds = array<i64: 2, 4, 128>}, {pipeline_mode = #tpu.pipeline_mode<synchronous>, transform_indices = @transform_1, window_bounds = array<i64: 128, 128>}, {pipeline_mode = #tpu.pipeline_mode<synchronous>, transform_indices = @transform_2, window_bounds = array<i64: 1, 128>}, {transform_indices = @transform_3, window_bounds = array<i64: 2, 128>}]} {
    %c0 = arith.constant 0 : index
    %c0_0 = arith.constant 0 : index
    %c0_1 = arith.constant 0 : index
    %0 = vector.load %arg1[%c0, %c0_0, %c0_1] : memref<2x4x128xbf16, #tpu.memory_space<vmem>>, vector<2x4x128xbf16>
    %1 = arith.extf %0 : vector<2x4x128xbf16> to vector<2x4x128xf32>
    %2 = arith.mulf %1, %1 : vector<2x4x128xf32>
    %cst = arith.constant dense<0.000000e+00> : vector<2x4xf32>
    %3 = vector.multi_reduction <add>, %2, %cst [2] : vector<2x4x128xf32> to vector<2x4xf32>
    %4 = vector.shape_cast %3 : vector<2x4xf32> to vector<2x4x1xf32>
    %cst_2 = arith.constant 1.000000e-24 : f32
    %5 = vector.broadcast %cst_2 : f32 to vector<2x4x1xf32>
    %6 = arith.maximumf %4, %5 : vector<2x4x1xf32>
    %7 = math.rsqrt %6 : vector<2x4x1xf32>
    %8 = vector.broadcast %7 : vector<2x4x1xf32> to vector<2x4x128xf32>
    %9 = arith.mulf %1, %8 : vector<2x4x128xf32>
    %cst_3 = arith.constant 9.99999997E-7 : f32
    %10 = vector.broadcast %cst_3 : f32 to vector<2x4x128xf32>
    %11 = arith.maximumf %9, %10 : vector<2x4x128xf32>
    %12 = arith.mulf %11, %11 : vector<2x4x128xf32>
    %13 = arith.mulf %12, %11 : vector<2x4x128xf32>
    %cst_4 = arith.constant dense<0.000000e+00> : vector<2x128xf32>
    %14 = vector.multi_reduction <add>, %13, %cst_4 [1] : vector<2x4x128xf32> to vector<2x128xf32>
    %cst_5 = arith.constant 4.000000e+00 : f32
    %15 = vector.broadcast %cst_5 : f32 to vector<2x128xf32>
    %16 = arith.divf %14, %15 : vector<2x128xf32>
    %17 = math.log %16 : vector<2x128xf32>
    %cst_6 = arith.constant 0.333333343 : f32
    %18 = vector.broadcast %cst_6 : f32 to vector<2x128xf32>
    %19 = arith.mulf %17, %18 : vector<2x128xf32>
    %20 = math.exp %19 : vector<2x128xf32>
    %21 = arith.truncf %20 : vector<2x128xf32> to vector<2x128xbf16>
    %c0_7 = arith.constant 0 : index
    %c0_8 = arith.constant 0 : index
    %22 = vector.load %arg2[%c0_7, %c0_8] : memref<128x128xbf16, #tpu.memory_space<vmem>>, vector<128x128xbf16>
    %cst_9 = arith.constant dense<0.000000e+00> : vector<2x128xf32>
    %23 = tpu.matmul %21, %22, %cst_9 {dimension_numbers = #tpu.dot_dimension_numbers<[1], [0], [0], [1], [0, 0, 1, 1], [], []>} : vector<2x128xbf16>, vector<128x128xbf16>, vector<2x128xf32> -> vector<2x128xf32>
    %c0_10 = arith.constant 0 : index
    %c0_11 = arith.constant 0 : index
    %24 = vector.load %arg3[%c0_10, %c0_11] : memref<1x128xf32, #tpu.memory_space<vmem>>, vector<1x128xf32>
    %25 = vector.broadcast %24 : vector<1x128xf32> to vector<2x128xf32>
    %26 = arith.addf %23, %25 : vector<2x128xf32>
    %27 = arith.mulf %26, %26 : vector<2x128xf32>
    %cst_12 = arith.constant dense<0.000000e+00> : vector<2xf32>
    %28 = vector.multi_reduction <add>, %27, %cst_12 [1] : vector<2x128xf32> to vector<2xf32>
    %29 = vector.shape_cast %28 : vector<2xf32> to vector<2x1xf32>
    %cst_13 = arith.constant 1.000000e-24 : f32
    %30 = vector.broadcast %cst_13 : f32 to vector<2x1xf32>
    %31 = arith.maximumf %29, %30 : vector<2x1xf32>
    %32 = math.rsqrt %31 : vector<2x1xf32>
    %33 = vector.broadcast %32 : vector<2x1xf32> to vector<2x128xf32>
    %34 = arith.mulf %26, %33 : vector<2x128xf32>
    %c0_14 = arith.constant 0 : index
    %c0_15 = arith.constant 0 : index
    %35 = vector.load %arg4[%c0_14, %c0_15] : memref<2x128xf32, #tpu.memory_space<vmem>>, vector<2x128xf32>
    tpu.vector_store %arg4[%c0_14, %c0_15], %34 {strides = array<i32>} : memref<2x128xf32, #tpu.memory_space<vmem>>, vector<2x128xf32>,
    return
  }
  func.func @transform_0(%arg0: i32) -> (i32, i32, i32) {
    %c0_i32 = arith.constant 0 : i32
    %c0_i32_0 = arith.constant 0 : i32
    %c0_i32_1 = arith.constant 0 : i32
    return %arg0, %c0_i32, %c0_i32_0 : i32, i32, i32
  }
  func.func @transform_1(%arg0: i32) -> (i32, i32) {
    %c0_i32 = arith.constant 0 : i32
    %c0_i32_0 = arith.constant 0 : i32
    %c0_i32_1 = arith.constant 0 : i32
    return %c0_i32, %c0_i32_0 : i32, i32
  }
  func.func @transform_2(%arg0: i32) -> (i32, i32) {
    %c0_i32 = arith.constant 0 : i32
    %c0_i32_0 = arith.constant 0 : i32
    %c0_i32_1 = arith.constant 0 : i32
    return %c0_i32, %c0_i32_0 : i32, i32
  }
  func.func @transform_3(%arg0: i32) -> (i32, i32) {
    %c0_i32 = arith.constant 0 : i32
    %c0_i32_0 = arith.constant 0 : i32
    return %arg0, %c0_i32 : i32, i32
  }
}

module attributes {stable_mosaic.version = 11 : i64} {
  func.func @_conv3x3_phase_kernel(%arg0: i32, %arg1: i32, %arg2: memref<1x1x6x48x128xbf16, #tpu.memory_space<vmem>>, %arg3: memref<9x128x128xbf16, #tpu.memory_space<vmem>>, %arg4: memref<1x128xf32, #tpu.memory_space<vmem>>, %arg5: memref<1x1x32x128xbf16, #tpu.memory_space<vmem>>) attributes {dimension_semantics = [#tpu.dimension_semantics<parallel>, #tpu.dimension_semantics<parallel>], iteration_bounds = array<i64: 2, 1>, scalar_prefetch = 0 : i64, scratch_operands = 0 : i64, tpu.core_type = #tpu.core_type<tc>, window_params = [{transform_indices = @transform_0, window_bounds = array<i64: 1, 1, 6, 48, 128>}, {pipeline_mode = #tpu.pipeline_mode<synchronous>, transform_indices = @transform_1, window_bounds = array<i64: 9, 128, 128>}, {pipeline_mode = #tpu.pipeline_mode<synchronous>, transform_indices = @transform_2, window_bounds = array<i64: 1, 128>}, {transform_indices = @transform_3, window_bounds = array<i64: 1, 1, 32, 128>}]} {
    %c0 = arith.constant 0 : index
    %c0_0 = arith.constant 0 : index
    %c0_1 = arith.constant 0 : index
    %c0_2 = arith.constant 0 : index
    %c0_3 = arith.constant 0 : index
    %0 = vector.load %arg2[%c0, %c0_0, %c0_1, %c0_2, %c0_3] : memref<1x1x6x48x128xbf16, #tpu.memory_space<vmem>>, vector<1x1x1x32x128xbf16>
    %1 = vector.shape_cast %0 : vector<1x1x1x32x128xbf16> to vector<32x128xbf16>
    %c0_4 = arith.constant 0 : index
    %c0_5 = arith.constant 0 : index
    %c0_6 = arith.constant 0 : index
    %2 = vector.load %arg3[%c0_4, %c0_5, %c0_6] : memref<9x128x128xbf16, #tpu.memory_space<vmem>>, vector<1x128x128xbf16>
    %3 = vector.shape_cast %2 : vector<1x128x128xbf16> to vector<128x128xbf16>
    %cst = arith.constant dense<0.000000e+00> : vector<32x128xf32>
    %4 = tpu.matmul %1, %3, %cst {dimension_numbers = #tpu.dot_dimension_numbers<[1], [0], [0], [1], [0, 0, 1, 1], [], []>} : vector<32x128xbf16>, vector<128x128xbf16>, vector<32x128xf32> -> vector<32x128xf32>
    %c0_7 = arith.constant 0 : index
    %c0_8 = arith.constant 0 : index
    %c1 = arith.constant 1 : index
    %c0_9 = arith.constant 0 : index
    %c0_10 = arith.constant 0 : index
    %5 = vector.load %arg2[%c0_7, %c0_8, %c1, %c0_9, %c0_10] : memref<1x1x6x48x128xbf16, #tpu.memory_space<vmem>>, vector<1x1x1x32x128xbf16>
    %6 = vector.shape_cast %5 : vector<1x1x1x32x128xbf16> to vector<32x128xbf16>
    %c1_11 = arith.constant 1 : index
    %c0_12 = arith.constant 0 : index
    %c0_13 = arith.constant 0 : index
    %7 = vector.load %arg3[%c1_11, %c0_12, %c0_13] : memref<9x128x128xbf16, #tpu.memory_space<vmem>>, vector<1x128x128xbf16>
    %8 = vector.shape_cast %7 : vector<1x128x128xbf16> to vector<128x128xbf16>
    %cst_14 = arith.constant dense<0.000000e+00> : vector<32x128xf32>
    %9 = tpu.matmul %6, %8, %cst_14 {dimension_numbers = #tpu.dot_dimension_numbers<[1], [0], [0], [1], [0, 0, 1, 1], [], []>} : vector<32x128xbf16>, vector<128x128xbf16>, vector<32x128xf32> -> vector<32x128xf32>
    %10 = arith.addf %4, %9 : vector<32x128xf32>
    %c0_15 = arith.constant 0 : index
    %c0_16 = arith.constant 0 : index
    %c2 = arith.constant 2 : index
    %c0_17 = arith.constant 0 : index
    %c0_18 = arith.constant 0 : index
    %11 = vector.load %arg2[%c0_15, %c0_16, %c2, %c0_17, %c0_18] : memref<1x1x6x48x128xbf16, #tpu.memory_space<vmem>>, vector<1x1x1x32x128xbf16>
    %12 = vector.shape_cast %11 : vector<1x1x1x32x128xbf16> to vector<32x128xbf16>
    %c2_19 = arith.constant 2 : index
    %c0_20 = arith.constant 0 : index
    %c0_21 = arith.constant 0 : index
    %13 = vector.load %arg3[%c2_19, %c0_20, %c0_21] : memref<9x128x128xbf16, #tpu.memory_space<vmem>>, vector<1x128x128xbf16>
    %14 = vector.shape_cast %13 : vector<1x128x128xbf16> to vector<128x128xbf16>
    %cst_22 = arith.constant dense<0.000000e+00> : vector<32x128xf32>
    %15 = tpu.matmul %12, %14, %cst_22 {dimension_numbers = #tpu.dot_dimension_numbers<[1], [0], [0], [1], [0, 0, 1, 1], [], []>} : vector<32x128xbf16>, vector<128x128xbf16>, vector<32x128xf32> -> vector<32x128xf32>
    %16 = arith.addf %10, %15 : vector<32x128xf32>
    %c0_23 = arith.constant 0 : index
    %c0_24 = arith.constant 0 : index
    %c3 = arith.constant 3 : index
    %c0_25 = arith.constant 0 : index
    %c0_26 = arith.constant 0 : index
    %17 = vector.load %arg2[%c0_23, %c0_24, %c3, %c0_25, %c0_26] : memref<1x1x6x48x128xbf16, #tpu.memory_space<vmem>>, vector<1x1x1x32x128xbf16>
    %18 = vector.shape_cast %17 : vector<1x1x1x32x128xbf16> to vector<32x128xbf16>
    %c3_27 = arith.constant 3 : index
    %c0_28 = arith.constant 0 : index
    %c0_29 = arith.constant 0 : index
    %19 = vector.load %arg3[%c3_27, %c0_28, %c0_29] : memref<9x128x128xbf16, #tpu.memory_space<vmem>>, vector<1x128x128xbf16>
    %20 = vector.shape_cast %19 : vector<1x128x128xbf16> to vector<128x128xbf16>
    %cst_30 = arith.constant dense<0.000000e+00> : vector<32x128xf32>
    %21 = tpu.matmul %18, %20, %cst_30 {dimension_numbers = #tpu.dot_dimension_numbers<[1], [0], [0], [1], [0, 0, 1, 1], [], []>} : vector<32x128xbf16>, vector<128x128xbf16>, vector<32x128xf32> -> vector<32x128xf32>
    %22 = arith.addf %16, %21 : vector<32x128xf32>
    %c0_31 = arith.constant 0 : index
    %c0_32 = arith.constant 0 : index
    %c4 = arith.constant 4 : index
    %c0_33 = arith.constant 0 : index
    %c0_34 = arith.constant 0 : index
    %23 = vector.load %arg2[%c0_31, %c0_32, %c4, %c0_33, %c0_34] : memref<1x1x6x48x128xbf16, #tpu.memory_space<vmem>>, vector<1x1x1x32x128xbf16>
    %24 = vector.shape_cast %23 : vector<1x1x1x32x128xbf16> to vector<32x128xbf16>
    %c4_35 = arith.constant 4 : index
    %c0_36 = arith.constant 0 : index
    %c0_37 = arith.constant 0 : index
    %25 = vector.load %arg3[%c4_35, %c0_36, %c0_37] : memref<9x128x128xbf16, #tpu.memory_space<vmem>>, vector<1x128x128xbf16>
    %26 = vector.shape_cast %25 : vector<1x128x128xbf16> to vector<128x128xbf16>
    %cst_38 = arith.constant dense<0.000000e+00> : vector<32x128xf32>
    %27 = tpu.matmul %24, %26, %cst_38 {dimension_numbers = #tpu.dot_dimension_numbers<[1], [0], [0], [1], [0, 0, 1, 1], [], []>} : vector<32x128xbf16>, vector<128x128xbf16>, vector<32x128xf32> -> vector<32x128xf32>
    %28 = arith.addf %22, %27 : vector<32x128xf32>
    %c0_39 = arith.constant 0 : index
    %c0_40 = arith.constant 0 : index
    %c5 = arith.constant 5 : index
    %c0_41 = arith.constant 0 : index
    %c0_42 = arith.constant 0 : index
    %29 = vector.load %arg2[%c0_39, %c0_40, %c5, %c0_41, %c0_42] : memref<1x1x6x48x128xbf16, #tpu.memory_space<vmem>>, vector<1x1x1x32x128xbf16>
    %30 = vector.shape_cast %29 : vector<1x1x1x32x128xbf16> to vector<32x128xbf16>
    %c5_43 = arith.constant 5 : index
    %c0_44 = arith.constant 0 : index
    %c0_45 = arith.constant 0 : index
    %31 = vector.load %arg3[%c5_43, %c0_44, %c0_45] : memref<9x128x128xbf16, #tpu.memory_space<vmem>>, vector<1x128x128xbf16>
    %32 = vector.shape_cast %31 : vector<1x128x128xbf16> to vector<128x128xbf16>
    %cst_46 = arith.constant dense<0.000000e+00> : vector<32x128xf32>
    %33 = tpu.matmul %30, %32, %cst_46 {dimension_numbers = #tpu.dot_dimension_numbers<[1], [0], [0], [1], [0, 0, 1, 1], [], []>} : vector<32x128xbf16>, vector<128x128xbf16>, vector<32x128xf32> -> vector<32x128xf32>
    %34 = arith.addf %28, %33 : vector<32x128xf32>
    %c0_47 = arith.constant 0 : index
    %c0_48 = arith.constant 0 : index
    %c0_49 = arith.constant 0 : index
    %c16 = arith.constant 16 : index
    %c0_50 = arith.constant 0 : index
    %35 = vector.load %arg2[%c0_47, %c0_48, %c0_49, %c16, %c0_50] : memref<1x1x6x48x128xbf16, #tpu.memory_space<vmem>>, vector<1x1x1x32x128xbf16>
    %36 = vector.shape_cast %35 : vector<1x1x1x32x128xbf16> to vector<32x128xbf16>
    %c6 = arith.constant 6 : index
    %c0_51 = arith.constant 0 : index
    %c0_52 = arith.constant 0 : index
    %37 = vector.load %arg3[%c6, %c0_51, %c0_52] : memref<9x128x128xbf16, #tpu.memory_space<vmem>>, vector<1x128x128xbf16>
    %38 = vector.shape_cast %37 : vector<1x128x128xbf16> to vector<128x128xbf16>
    %cst_53 = arith.constant dense<0.000000e+00> : vector<32x128xf32>
    %39 = tpu.matmul %36, %38, %cst_53 {dimension_numbers = #tpu.dot_dimension_numbers<[1], [0], [0], [1], [0, 0, 1, 1], [], []>} : vector<32x128xbf16>, vector<128x128xbf16>, vector<32x128xf32> -> vector<32x128xf32>
    %40 = arith.addf %34, %39 : vector<32x128xf32>
    %c0_54 = arith.constant 0 : index
    %c0_55 = arith.constant 0 : index
    %c1_56 = arith.constant 1 : index
    %c16_57 = arith.constant 16 : index
    %c0_58 = arith.constant 0 : index
    %41 = vector.load %arg2[%c0_54, %c0_55, %c1_56, %c16_57, %c0_58] : memref<1x1x6x48x128xbf16, #tpu.memory_space<vmem>>, vector<1x1x1x32x128xbf16>
    %42 = vector.shape_cast %41 : vector<1x1x1x32x128xbf16> to vector<32x128xbf16>
    %c7 = arith.constant 7 : index
    %c0_59 = arith.constant 0 : index
    %c0_60 = arith.constant 0 : index
    %43 = vector.load %arg3[%c7, %c0_59, %c0_60] : memref<9x128x128xbf16, #tpu.memory_space<vmem>>, vector<1x128x128xbf16>
    %44 = vector.shape_cast %43 : vector<1x128x128xbf16> to vector<128x128xbf16>
    %cst_61 = arith.constant dense<0.000000e+00> : vector<32x128xf32>
    %45 = tpu.matmul %42, %44, %cst_61 {dimension_numbers = #tpu.dot_dimension_numbers<[1], [0], [0], [1], [0, 0, 1, 1], [], []>} : vector<32x128xbf16>, vector<128x128xbf16>, vector<32x128xf32> -> vector<32x128xf32>
    %46 = arith.addf %40, %45 : vector<32x128xf32>
    %c0_62 = arith.constant 0 : index
    %c0_63 = arith.constant 0 : index
    %c2_64 = arith.constant 2 : index
    %c16_65 = arith.constant 16 : index
    %c0_66 = arith.constant 0 : index
    %47 = vector.load %arg2[%c0_62, %c0_63, %c2_64, %c16_65, %c0_66] : memref<1x1x6x48x128xbf16, #tpu.memory_space<vmem>>, vector<1x1x1x32x128xbf16>
    %48 = vector.shape_cast %47 : vector<1x1x1x32x128xbf16> to vector<32x128xbf16>
    %c8 = arith.constant 8 : index
    %c0_67 = arith.constant 0 : index
    %c0_68 = arith.constant 0 : index
    %49 = vector.load %arg3[%c8, %c0_67, %c0_68] : memref<9x128x128xbf16, #tpu.memory_space<vmem>>, vector<1x128x128xbf16>
    %50 = vector.shape_cast %49 : vector<1x128x128xbf16> to vector<128x128xbf16>
    %cst_69 = arith.constant dense<0.000000e+00> : vector<32x128xf32>
    %51 = tpu.matmul %48, %50, %cst_69 {dimension_numbers = #tpu.dot_dimension_numbers<[1], [0], [0], [1], [0, 0, 1, 1], [], []>} : vector<32x128xbf16>, vector<128x128xbf16>, vector<32x128xf32> -> vector<32x128xf32>
    %52 = arith.addf %46, %51 : vector<32x128xf32>
    %c0_70 = arith.constant 0 : index
    %c0_71 = arith.constant 0 : index
    %53 = vector.load %arg4[%c0_70, %c0_71] : memref<1x128xf32, #tpu.memory_space<vmem>>, vector<1x128xf32>
    %54 = vector.broadcast %53 : vector<1x128xf32> to vector<32x128xf32>
    %55 = arith.addf %52, %54 : vector<32x128xf32>
    %cst_72 = arith.constant 0.000000e+00 : f32
    %56 = vector.broadcast %cst_72 : f32 to vector<32x128xf32>
    %57 = arith.maximumf %55, %56 : vector<32x128xf32>
    %58 = arith.truncf %57 : vector<32x128xf32> to vector<32x128xbf16>
    %c0_73 = arith.constant 0 : index
    %c0_74 = arith.constant 0 : index
    %c0_75 = arith.constant 0 : index
    %c0_76 = arith.constant 0 : index
    %59 = vector.load %arg5[%c0_73, %c0_74, %c0_75, %c0_76] : memref<1x1x32x128xbf16, #tpu.memory_space<vmem>>, vector<1x1x32x128xbf16>
    %60 = vector.shape_cast %59 : vector<1x1x32x128xbf16> to vector<32x128xbf16>
    %61 = vector.shape_cast %58 : vector<32x128xbf16> to vector<1x1x32x128xbf16>
    tpu.vector_store %arg5[%c0_73, %c0_74, %c0_75, %c0_76], %61 {strides = array<i32>} : memref<1x1x32x128xbf16, #tpu.memory_space<vmem>>, vector<1x1x32x128xbf16>,
    return
  }
  func.func @transform_0(%arg0: i32, %arg1: i32) -> (i32, i32, i32, i32, i32) {
    %c0_i32 = arith.constant 0 : i32
    %c0_i32_0 = arith.constant 0 : i32
    %c0_i32_1 = arith.constant 0 : i32
    %c0_i32_2 = arith.constant 0 : i32
    return %arg0, %arg1, %c0_i32, %c0_i32_0, %c0_i32_1 : i32, i32, i32, i32, i32
  }
  func.func @transform_1(%arg0: i32, %arg1: i32) -> (i32, i32, i32) {
    %c0_i32 = arith.constant 0 : i32
    %c0_i32_0 = arith.constant 0 : i32
    %c0_i32_1 = arith.constant 0 : i32
    %c0_i32_2 = arith.constant 0 : i32
    return %c0_i32, %c0_i32_0, %c0_i32_1 : i32, i32, i32
  }
  func.func @transform_2(%arg0: i32, %arg1: i32) -> (i32, i32) {
    %c0_i32 = arith.constant 0 : i32
    %c0_i32_0 = arith.constant 0 : i32
    %c0_i32_1 = arith.constant 0 : i32
    return %c0_i32, %c0_i32_0 : i32, i32
  }
  func.func @transform_3(%arg0: i32, %arg1: i32) -> (i32, i32, i32, i32) {
    %c0_i32 = arith.constant 0 : i32
    %c0_i32_0 = arith.constant 0 : i32
    %c0_i32_1 = arith.constant 0 : i32
    return %arg0, %arg1, %c0_i32, %c0_i32_0 : i32, i32, i32, i32
  }
}

</mosaic_0001>

<llo_original>
// kernel: geo_localization_forward.4
$region0: #{geo_localization_forward.4}
  #allocation0 [shape = 'u32[]', space=smem, size = 0x4, offset = 0x4, fixed_abs, tag = 'smem constant byte address 0x4 - core index']
  #allocation1 [shape = 'u32[144,128]{1,0:T(1,128)}', space=vmem, size = 0x12000, scoped, tag = 'internal scratch']
  %s0 = inlined_call_operand.vmem [shape: bf16[2,64,32], index: 0, kind: input, shape index: {}]
  %s1 = inlined_call_operand.vmem [shape: bf16[32,128], index: 1, kind: input, shape index: {}]
  %s2 = inlined_call_operand.vmem [shape: f32[1,128], index: 2, kind: input, shape index: {}]
  %s3 = inlined_call_operand.vmem [shape: bf16[2,64,128], index: 3, kind: output, shape index: {}]
  %s4 = sld [smem:[#allocation0]]
  $region45: #{geo_localization_forward.4} parent=0
    _
  %s6 = ssub.s32 1, %s4
  %s7 = scalar_select 0, %s6, %s4
  loop: start=0, step=1, limit=4
  $region2: #{geo_localization_forward.4} parent=0 // loop_pre_header
    _
  $region3: #{geo_localization_forward.4} parent=0 // loop_header
    %s9 = sphi 0, %s13
    %p10 = scmp.ge.s32.totalorder %s9, 4
    %s16 = sphi 0, %s28
    %s17 = sphi 0, %s24
    %s18 = sphi 0, %s16
    %s19 = sphi 0, %s17
    %s20 = sphi 0, %s18
    %s21 = sphi 0, %s19
    %s33 = sphi 0, %s35
    %s36 = sphi 0, %s33
    %s37 = sphi 0, %s36
    %s53 = sphi 0, %s37
    %s57 = sphi 0, %s57
    %s59 = sphi 0, %s57
    %s60 = sphi 0, %s59
    %s74 = sphi 0, %s60
    %s78 = sphi 0, %s78
    %s80 = sphi 0, %s78
    %s81 = sphi 0, %s80
    %s95 = sphi 0, %s81
    %s103 = sphi 0, %s105
    %s106 = sphi 0, %s103
    %s107 = sphi 0, %s106
    %s123 = sphi 0, %s107
  $region4: #{geo_localization_forward.4} parent=0 // loop_header_branch
    %12 = sbr.rel (%p10) target = $region8
  $region5: #{geo_localization_forward.4} parent=0 // loop_body
    %s14 = ssub.s32 %s9, 1
    %s15 = ssub.s32 %s9, 2
    %s22 = sadd.s32 1, %s17
    %p23 = scmp.ge.s32.totalorder %s22, 1
    %s24 = scalar_select %p23, 0, %s22
    %s25 = sadd.s32 1, %s16
    %s26 = scalar_select %p23, %s25, %s16
    %p27 = scmp.ge.s32.totalorder %s26, 2
    %s28 = scalar_select %p27, 0, %s26
    %s29 = ssub.s32 %s16, %s28
    %s30 = ssub.s32 %s17, %s24
    %s31 = sor.u32 %s29, %s30
    %p32 = scmp.eq.s32.totalorder %s31, 0
    %s34 = sadd.s32 %s33, 1
    %s35 = scalar_select %p32, %s33, %s34
    %p38 = pneg %p32
    %p39 = scmp.eq.s32.totalorder %s9, 1
    %p40 = por %p38, %p39
    %p41 = scmp.ne.s32.totalorder %s33, %s36
    %p42 = scmp.eq.s32.totalorder %s9, 0
    %p43 = por %p41, %p42
    %p44 = scmp.ne.s32.totalorder %s33, %s36
    %p45 = scmp.eq.s32.totalorder %s14, 1
    %p46 = por %p44, %p45
    %p47 = scmp.ne.s32.totalorder %s36, %s37
    %p48 = scmp.eq.s32.totalorder %s14, 0
    %p49 = por %p47, %p48
    %p50 = scmp.ne.s32.totalorder %s36, %s37
    %p51 = scmp.eq.s32.totalorder %s15, 1
    %p52 = por %p50, %p51
    %p54 = scmp.ne.s32.totalorder %s37, %s53
    %p55 = scmp.eq.s32.totalorder %s15, 0
    %p56 = por %p54, %p55
    %s58 = sadd.s32 %s57, 1
    %p61 = scmp.eq.s32.totalorder %s9, 1
    %p62 = scmp.ne.s32.totalorder %s57, %s59
    %p63 = scmp.eq.s32.totalorder %s9, 0
    %p64 = por %p62, %p63
    %p65 = scmp.ne.s32.totalorder %s57, %s59
    %p66 = scmp.eq.s32.totalorder %s14, 1
    %p67 = por %p65, %p66
    %p68 = scmp.ne.s32.totalorder %s59, %s60
    %p69 = scmp.eq.s32.totalorder %s14, 0
    %p70 = por %p68, %p69
    %p71 = scmp.ne.s32.totalorder %s59, %s60
    %p72 = scmp.eq.s32.totalorder %s15, 1
    %p73 = por %p71, %p72
    %p75 = scmp.ne.s32.totalorder %s60, %s74
    %p76 = scmp.eq.s32.totalorder %s15, 0
    %p77 = por %p75, %p76
    %s79 = sadd.s32 %s78, 1
    %p82 = scmp.eq.s32.totalorder %s9, 1
    %p83 = scmp.ne.s32.totalorder %s78, %s80
    %p84 = scmp.eq.s32.totalorder %s9, 0
    %p85 = por %p83, %p84
    %p86 = scmp.ne.s32.totalorder %s78, %s80
    %p87 = scmp.eq.s32.totalorder %s14, 1
    %p88 = por %p86, %p87
    %p89 = scmp.ne.s32.totalorder %s80, %s81
    %p90 = scmp.eq.s32.totalorder %s14, 0
    %p91 = por %p89, %p90
    %p92 = scmp.ne.s32.totalorder %s80, %s81
    %p93 = scmp.eq.s32.totalorder %s15, 1
    %p94 = por %p92, %p93
    %p96 = scmp.ne.s32.totalorder %s81, %s95
    %p97 = scmp.eq.s32.totalorder %s15, 0
    %p98 = por %p96, %p97
    %s99 = ssub.s32 %s16, %s28
    %s100 = ssub.s32 %s17, %s24
    %s101 = sor.u32 %s99, %s100
    %p102 = scmp.eq.s32.totalorder %s101, 0
    %s104 = sadd.s32 %s103, 1
    %s105 = scalar_select %p102, %s103, %s104
    %p108 = pneg %p102
    %p109 = scmp.eq.s32.totalorder %s9, 1
    %p110 = por %p108, %p109
    %p111 = scmp.ne.s32.totalorder %s103, %s106
    %p112 = scmp.eq.s32.totalorder %s9, 0
    %p113 = por %p111, %p112
    %p114 = scmp.ne.s32.totalorder %s103, %s106
    %p115 = scmp.eq.s32.totalorder %s14, 1
    %p116 = por %p114, %p115
    %p117 = scmp.ne.s32.totalorder %s106, %s107
    %p118 = scmp.eq.s32.totalorder %s14, 0
    %p119 = por %p117, %p118
    %p120 = scmp.ne.s32.totalorder %s106, %s107
    %p121 = scmp.eq.s32.totalorder %s15, 1
    %p122 = por %p120, %p121
    %p124 = scmp.ne.s32.totalorder %s107, %s123
    %p125 = scmp.eq.s32.totalorder %s15, 0
    %p126 = por %p124, %p125
    %p127 = scmp.le.s32.totalorder 1, %s9
    %p128 = scmp.lt.s32.totalorder %s9, 3
    %p129 = pnand %p127, %p128
    %p130 = pneg %p129
    // Predicated region
    $region9: #{geo_localization_forward.4} parent=5 // pred_check
      _
    $region10: #{geo_localization_forward.4} parent=5 // pred_check_branch
      %132 = sbr.rel (%p129) target = $region12
    $region11: #{geo_localization_forward.4} parent=5 // pred_region
      %s133 = ssub.s32 %s9, 1
      // Predicated region
      $region13: #{geo_localization_forward.4} parent=11 // pred_check
        %p134 = pneg %p70
      $region14: #{geo_localization_forward.4} parent=11 // pred_check_branch
        %136 = sbr.rel (%p134) target = $region16
      $region15: #{geo_localization_forward.4} parent=11 // pred_region
        _
      $region16: #{geo_localization_forward.4} parent=11 // pred_fallthru
        _
      // Predicated region
      $region17: #{geo_localization_forward.4} parent=11 // pred_check
        %p137 = pneg %p91
      $region18: #{geo_localization_forward.4} parent=11 // pred_check_branch
        %139 = sbr.rel (%p137) target = $region20
      $region19: #{geo_localization_forward.4} parent=11 // pred_region
        _
      $region20: #{geo_localization_forward.4} parent=11 // pred_fallthru
        _
    $region12: #{geo_localization_forward.4} parent=5 // pred_fallthru
      _
    %p140 = scmp.lt.s32.totalorder %s9, 2
    // Predicated region
    $region21: #{geo_localization_forward.4} parent=5 // pred_check
      %p141 = pneg %p140
    $region22: #{geo_localization_forward.4} parent=5 // pred_check_branch
      %143 = sbr.rel (%p141) target = $region24
    $region23: #{geo_localization_forward.4} parent=5 // pred_region
      // Predicated region
      $region25: #{geo_localization_forward.4} parent=23 // pred_check
        %p144 = pneg %p43
      $region26: #{geo_localization_forward.4} parent=23 // pred_check_branch
        %146 = sbr.rel (%p144) target = $region28
      $region27: #{geo_localization_forward.4} parent=23 // pred_region
        %s147 = smul.u32 8, %s17
        %p148 = scmp.lt.s32.totalorder %s16, 1
        %s149 = scalar_select %p148, %s16, 1
        %p150 = scmp.lt.s32.totalorder %s147, 7
        %s151 = scalar_select %p150, %s147, 7
        %s152 = smul.addr %s149, 8
        %s153 = sadd.s32 %s151, %s152
        %s154 = smul.addr %s153, 4
        %s155 = scalar_lea.vmem %s0, %s154
        %s156 = smul.u32 8, %s17
      $region28: #{geo_localization_forward.4} parent=23 // pred_fallthru
        _
    $region24: #{geo_localization_forward.4} parent=5 // pred_fallthru
      _
    %p157 = scmp.le.s32.totalorder 1, %s9
    %p158 = scmp.lt.s32.totalorder %s9, 3
    %p159 = pnand %p157, %p158
    %p160 = pneg %p159
    // Predicated region
    $region29: #{geo_localization_forward.4} parent=5 // pred_check
      _
    $region30: #{geo_localization_forward.4} parent=5 // pred_check_branch
      %162 = sbr.rel (%p159) target = $region32
    $region31: #{geo_localization_forward.4} parent=5 // pred_region
      %s163 = ssub.s32 %s9, 1
      %s164 = smul.u32 8, %s19
      %p165 = scmp.lt.s32.totalorder %s18, 1
      %s166 = scalar_select %p165, %s18, 1
      %p167 = scmp.lt.s32.totalorder %s164, 7
      %s168 = scalar_select %p167, %s164, 7
      %s169 = smul.addr %s166, 8
      %s170 = sadd.s32 %s168, %s169
      %s171 = smul.addr %s170, 4
      %s172 = scalar_lea.vmem %s0, %s171
      %p173 = pneg %p49
      %p174 = pneg %p46
      %p175 = pneg %p70
      %p176 = pneg %p67
      %p177 = pneg %p91
      %p178 = pneg %p88
      %p179 = pneg %p119
      %p180 = pneg %p116
      %s181 = smul.u32 8, %s19
      %p182 = scmp.lt.s32.totalorder %s18, 1
      %s183 = scalar_select %p182, %s18, 1
      %p184 = scmp.lt.s32.totalorder %s181, 7
      %s185 = scalar_select %p184, %s181, 7
      %s186 = smul.addr %s183, 8
      %s187 = sadd.s32 %s185, %s186
      %s188 = smul.addr %s187, 4
      %s189 = scalar_lea.vmem %s3, %s188
      %s190 = smul.u32 8, %s19
      %p191 = scmp.lt.s32.totalorder %s18, 1
      %s192 = scalar_select %p191, %s18, 1
      %p193 = scmp.lt.s32.totalorder %s190, 7
      %s194 = scalar_select %p193, %s190, 7
      %s195 = smul.addr %s192, 8
      %s196 = sadd.s32 %s194, %s195
      %s197 = smul.addr %s196, 4
      %s198 = scalar_lea.vmem %s0, %s197
      %s199 = smul.u32 8, %s19
      %s200 = smul.u32 8, %s19
      %p201 = scmp.lt.s32.totalorder %s18, 1
      %s202 = scalar_select %p201, %s18, 1
      %p203 = scmp.lt.s32.totalorder %s200, 7
      %s204 = scalar_select %p203, %s200, 7
      %s205 = smul.addr %s202, 8
      %s206 = sadd.s32 %s204, %s205
      %s207 = smul.addr %s206, 4
      %s208 = scalar_lea.vmem %s3, %s207
      %s209 = smul.u32 8, %s19
      %v211 = vld [vmem:[%s198] sm:$0xf]
      %v212 = vld [vmem:[%s198 + $0x4] sm:$0xf]
      %v213 = vld [vmem:[%s198 + $0x8] sm:$0xf]
      %v214 = vld [vmem:[%s198 + $0xc] sm:$0xf]
      %v215 = vld [vmem:[%s198 + $0x10] sm:$0xf]
      %v216 = vld [vmem:[%s198 + $0x14] sm:$0xf]
      %v217 = vld [vmem:[%s198 + $0x18] sm:$0xf]
      %v218 = vld [vmem:[%s198 + $0x1c] sm:$0xf]
      %v219 = vld [vmem:[%s1] sm:$0xf]
      %v220 = vld [vmem:[%s1 + $0x4] sm:$0xf]
      %v221 = vld [vmem:[%s1 + $0x8] sm:$0xf]
      %v222 = vld [vmem:[%s1 + $0xc] sm:$0xf]
      %v223 = vld [vmem:[%s2] sm:$0x1]
      %v225 = vlaneseq
      %v226 = vshrl.u32 %v225, 7
      %v227 = vsub.s32 0, %v226
      %v228 = vrot.slane %v223, %v227
      %v238 = vunpack.c.l.b16 %v211
      %v239 = vunpack.c.l.b16 %v212
      %v240 = vunpack.c.l.b16 %v213
      %v241 = vunpack.c.l.b16 %v214
      %v242 = vunpack.c.l.b16 %v215
      %v243 = vunpack.c.l.b16 %v216
      %v244 = vunpack.c.l.b16 %v217
      %v245 = vunpack.c.l.b16 %v218
      %v246 = vpack.c.b16 %v239, %v238
      %v247 = vpack.c.b16 %v241, %v240
      %v248 = vpack.c.b16 %v243, %v242
      %v249 = vpack.c.b16 %v245, %v244
      %v254 = vunpack.c.l.b16 %v219
      %v255 = vunpack.c.l.b16 %v220
      %v256 = vunpack.c.l.b16 %v221
      %v257 = vunpack.c.l.b16 %v222
      %v258 = vpack.c.b16 %v255, %v254
      %v259 = vpack.c.b16 %v257, %v256
      %vm262 = vcmask 261120
      %v264 = vsel %vm262, %v246, 0
      %v267 = vsel %vm262, %v247, 0
      %v270 = vsel %vm262, %v248, 0
      %v273 = vsel %vm262, %v249, 0
      %275 = vmatprep.subr.bf16.mxu0 0
      %276 = vmatpush1.bf16.msra.mxu0 0
      %277 = vmatprep.subr.bf16.mxu0 0
      %278 = vmatpush1.bf16.msra.mxu0 0
      %279 = vmatprep.subr.bf16.mxu0 0
      %280 = vmatpush1.bf16.msra.mxu0 0
      %281 = vmatprep.subr.bf16.mxu0 0
      %282 = vmatpush1.bf16.msra.mxu0 0
      %283 = vmatprep.subr.bf16.mxu0 0
      %284 = vmatpush1.bf16.msra.mxu0 0
      %285 = vmatprep.subr.bf16.mxu0 0
      %286 = vmatpush1.bf16.msra.mxu0 0
      %287 = vmatprep.subr.bf16.mxu0 0
      %288 = vmatpush1.bf16.msra.mxu0 %v259
      %289 = vmatprep.subr.bf16.mxu0 0
      %290 = vmatpush1.bf16.msra.mxu0 %v258
      %291 = vmatprep.subr.bf16.mxu0 0
      %292 = vmatpush2.bf16.msra.mxu0 0
      %293 = vmatprep.subr.bf16.mxu0 0
      %294 = vmatpush2.bf16.msra.mxu0 0
      %295 = vmatprep.subr.bf16.mxu0 0
      %296 = vmatpush2.bf16.msra.mxu0 0
      %297 = vmatprep.subr.bf16.mxu0 0
      %298 = vmatpush2.bf16.msra.mxu0 0
      %299 = vmatprep.subr.bf16.mxu0 0
      %300 = vmatpush2.bf16.msra.mxu0 0
      %301 = vmatprep.subr.bf16.mxu0 0
      %302 = vmatpush2.bf16.msra.mxu0 0
      %303 = vmatprep.subr.bf16.mxu0 0
      %304 = vmatpush2.bf16.msra.mxu0 0
      %305 = vmatprep.subr.bf16.mxu0 0
      %306 = vmatpush2.bf16.msra.mxu0 0
      %307 = vmatprep.mubr.bf16.mxu0 0
      %308 = vmatmul.mubr.bf16.gmra.mxu0 %v264
      %v309 = vpop.f32.mrf.mxu0
      %v310 = vadd.f32 %v228, %v309
      %v311 = vpop.f32.mrf.mxu0
      %v312 = vpop.f32.mrf.mxu0
      %v313 = vadd.f32 %v228, %v312
      %v314 = vpop.f32.mrf.mxu0
      %315 = vmatprep.mubr.bf16.mxu0 0
      %316 = vmatmul.mubr.bf16.gmra.mxu0 %v267
      %v317 = vpop.f32.mrf.mxu0
      %v318 = vadd.f32 %v228, %v317
      %v319 = vpop.f32.mrf.mxu0
      %v320 = vpop.f32.mrf.mxu0
      %v321 = vadd.f32 %v228, %v320
      %v322 = vpop.f32.mrf.mxu0
      %323 = vmatprep.mubr.bf16.mxu0 0
      %324 = vmatmul.mubr.bf16.gmra.mxu0 %v270
      %v325 = vpop.f32.mrf.mxu0
      %v326 = vadd.f32 %v228, %v325
      %v327 = vpop.f32.mrf.mxu0
      %v328 = vpop.f32.mrf.mxu0
      %v329 = vadd.f32 %v228, %v328
      %v330 = vpop.f32.mrf.mxu0
      %331 = vmatprep.mubr.bf16.mxu0 0
      %332 = vmatmul.mubr.bf16.gmra.mxu0 %v273
      %v333 = vpop.f32.mrf.mxu0
      %v334 = vadd.f32 %v228, %v333
      %v335 = vpop.f32.mrf.mxu0
      %v336 = vpop.f32.mrf.mxu0
      %v337 = vadd.f32 %v228, %v336
      %v338 = vpop.f32.mrf.mxu0
      %339 = vdwg.mxu0
      %v340 = vmax.f32 %v310, 0.0
      %v341 = vmax.f32 %v313, 0.0
      %v342 = vmax.f32 %v318, 0.0
      %v343 = vmax.f32 %v321, 0.0
      %v344 = vmax.f32 %v326, 0.0
      %v345 = vmax.f32 %v329, 0.0
      %v346 = vmax.f32 %v334, 0.0
      %v347 = vmax.f32 %v337, 0.0
      %v348 = vpack.c.bf16 %v341, %v340
      %v349 = vpack.c.bf16 %v343, %v342
      %v350 = vpack.c.bf16 %v345, %v344
      %v351 = vpack.c.bf16 %v347, %v346
      %v356 = vunpack.c.l.b16 %v348
      %v357 = vunpack.c.h.b16 %v348
      %v358 = vunpack.c.l.b16 %v349
      %v359 = vunpack.c.h.b16 %v349
      %v360 = vunpack.c.l.b16 %v350
      %v361 = vunpack.c.h.b16 %v350
      %v362 = vunpack.c.l.b16 %v351
      %v363 = vunpack.c.h.b16 %v351
      %v364 = vpack.c.b16 %v356, %v356
      %v365 = vpack.c.b16 %v357, %v357
      %v366 = vpack.c.b16 %v358, %v358
      %v367 = vpack.c.b16 %v359, %v359
      %v368 = vpack.c.b16 %v360, %v360
      %v369 = vpack.c.b16 %v361, %v361
      %v370 = vpack.c.b16 %v362, %v362
      %v371 = vpack.c.b16 %v363, %v363
      %380 = vst [vmem:[%s208] sm:$0xf] %v364
      %381 = vst [vmem:[%s208 + $0x4] sm:$0xf] %v365
      %382 = vst [vmem:[%s208 + $0x8] sm:$0xf] %v366
      %383 = vst [vmem:[%s208 + $0xc] sm:$0xf] %v367
      %384 = vst [vmem:[%s208 + $0x10] sm:$0xf] %v368
      %385 = vst [vmem:[%s208 + $0x14] sm:$0xf] %v369
      %386 = vst [vmem:[%s208 + $0x18] sm:$0xf] %v370
      %387 = vst [vmem:[%s208 + $0x1c] sm:$0xf] %v371
      %s388 = smul.u32 8, %s19
      %p389 = scmp.lt.s32.totalorder %s18, 1
      %s390 = scalar_select %p389, %s18, 1
      %p391 = scmp.lt.s32.totalorder %s388, 7
      %s392 = scalar_select %p391, %s388, 7
      %s393 = smul.addr %s390, 8
      %s394 = sadd.s32 %s392, %s393
      %s395 = smul.addr %s394, 4
      %s396 = scalar_lea.vmem %s3, %s395
      // Predicated region
      $region33: #{geo_localization_forward.4} parent=31 // pred_check
        %p397 = pneg %p116
      $region34: #{geo_localization_forward.4} parent=31 // pred_check_branch
        %399 = sbr.rel (%p397) target = $region36
      $region35: #{geo_localization_forward.4} parent=31 // pred_region
        %s400 = smul.u32 8, %s19
      $region36: #{geo_localization_forward.4} parent=31 // pred_fallthru
        _
    $region32: #{geo_localization_forward.4} parent=5 // pred_fallthru
      _
    %p401 = scmp.le.s32.totalorder 2, %s9
    // Predicated region
    $region37: #{geo_localization_forward.4} parent=5 // pred_check
      %p402 = pneg %p401
    $region38: #{geo_localization_forward.4} parent=5 // pred_check_branch
      %404 = sbr.rel (%p402) target = $region40
    $region39: #{geo_localization_forward.4} parent=5 // pred_region
      %s405 = ssub.s32 %s9, 2
      // Predicated region
      $region41: #{geo_localization_forward.4} parent=39 // pred_check
        %p406 = pneg %p122
      $region42: #{geo_localization_forward.4} parent=39 // pred_check_branch
        %408 = sbr.rel (%p406) target = $region44
      $region43: #{geo_localization_forward.4} parent=39 // pred_region
        %s409 = smul.u32 8, %s21
        %p410 = scmp.lt.s32.totalorder %s20, 1
        %s411 = scalar_select %p410, %s20, 1
        %p412 = scmp.lt.s32.totalorder %s409, 7
        %s413 = scalar_select %p412, %s409, 7
        %s414 = smul.addr %s411, 8
        %s415 = sadd.s32 %s413, %s414
        %s416 = smul.addr %s415, 4
        %s417 = scalar_lea.vmem %s3, %s416
      $region44: #{geo_localization_forward.4} parent=39 // pred_fallthru
        _
    $region40: #{geo_localization_forward.4} parent=5 // pred_fallthru
      _
  $region6: #{geo_localization_forward.4} parent=0 // loop_footer
    %s13 = sadd.s32 1, %s9
  $region7: #{geo_localization_forward.4} parent=0 // loop_footer_branch
    %8 = sbr.rel target = $region3
  $region8: #{geo_localization_forward.4} parent=0 // loop_exit
    _

// kernel: geo_localization_forward.7
$region0: #{geo_localization_forward.7}
  #allocation0 [shape = 'u32[]', space=smem, size = 0x4, offset = 0x4, fixed_abs, tag = 'smem constant byte address 0x4 - core index']
  #allocation1 [shape = 'u32[144,128]{1,0:T(1,128)}', space=vmem, size = 0x12000, scoped, tag = 'internal scratch']
  %s0 = inlined_call_operand.vmem [shape: bf16[2,4,128], index: 0, kind: input, shape index: {}]
  %s1 = inlined_call_operand.vmem [shape: bf16[128,128], index: 1, kind: input, shape index: {}]
  %s2 = inlined_call_operand.vmem [shape: f32[1,128], index: 2, kind: input, shape index: {}]
  %s3 = inlined_call_operand.hbm [shape: f32[2,128], index: 3, kind: output, shape index: {}]
  %s4 = sld [smem:[#allocation0]]
  $region22: #{geo_localization_forward.7} parent=0
    _
  %s6 = ssub.s32 1, %s4
  %s7 = scalar_select 0, %s6, %s4
  $region1: #{geo_localization_forward.7} parent=0
    #allocation2 [shape = 'u8[1024]{0}', space=vmem, size = 0x400, scoped, tag = 'output window, operand 0, single buffered']
    #allocation3 [shape = 's32[1]{0}', space=sflag, size = 0x4, scoped, tag = 'scoped memory for geo_localization_forward.7']
    %8 = vsyncpa [#allocation3], 0
    // Predicated region
    $region2: #{geo_localization_forward.7} parent=1 // pred_check
      _
    $region3: #{geo_localization_forward.7} parent=1 // pred_check_branch
      %10 = sbr.rel (0) target = $region5
    $region4: #{geo_localization_forward.7} parent=1 // pred_region
      _
    $region5: #{geo_localization_forward.7} parent=1 // pred_fallthru
      _
    // Predicated region
    $region6: #{geo_localization_forward.7} parent=1 // pred_check
      _
    $region7: #{geo_localization_forward.7} parent=1 // pred_check_branch
      %12 = sbr.rel (0) target = $region9
    $region8: #{geo_localization_forward.7} parent=1 // pred_region
      _
    $region9: #{geo_localization_forward.7} parent=1 // pred_fallthru
      _
    // Predicated region
    $region10: #{geo_localization_forward.7} parent=1 // pred_check
      _
    $region11: #{geo_localization_forward.7} parent=1 // pred_check_branch
      %14 = sbr.rel (0) target = $region13
    $region12: #{geo_localization_forward.7} parent=1 // pred_region
      _
    $region13: #{geo_localization_forward.7} parent=1 // pred_fallthru
      _
    %v16 = vld [vmem:[%s0] sm:$0x3]
    %v17 = vld [vmem:[%s0 + $0x2] sm:$0x3]
    %v18 = vunpack.c.l.bf16 %v16
    %v19 = vunpack.c.l.bf16 %v17
    %v20 = vmul.f32 %v18, %v18
    %v21 = vmul.f32 %v19, %v19
    %vm22 = vcmask 1043456
    %v23 = vsel %vm22, %v20, 0.0
    %24 = vadd.xlane.f32.xlu0 %v23
    %v25 = vpop.xlane.xlu0 %24
    %v26 = vsel %vm22, %v21, 0.0
    %27 = vadd.xlane.f32.xlu0 %v26
    %v28 = vpop.xlane.xlu0 %27
    %v29 = vmax.f32 %v25, 1e-24
    %v30 = vmax.f32 %v28, 1e-24
    %v31 = vrsqrt.pop %v29
    %v32 = vrsqrt.pop %v30
    %v33 = vmul.f32 %v18, %v31
    %v34 = vmul.f32 %v19, %v32
    %v35 = vmax.f32 %v33, 1e-06
    %v36 = vmax.f32 %v34, 1e-06
    %v37 = vmul.f32 %v35, %v35
    %v38 = vmul.f32 %v36, %v36
    %v39 = vmul.f32 %v37, %v35
    %v40 = vmul.f32 %v38, %v36
    %v41 = vsel %vm22, %v39, 0.0
    %v42 = vrot.slane %v41, 4
    %v43 = vadd.f32 %v41, %v42
    %v44 = vrot.slane %v43, 2
    %v45 = vadd.f32 %v43, %v44
    %v46 = vrot.slane %v45, 1
    %v47 = vadd.f32 %v45, %v46
    %v48 = vsel %vm22, %v40, 0.0
    %v49 = vrot.slane %v48, 4
    %v50 = vadd.f32 %v48, %v49
    %v51 = vrot.slane %v50, 2
    %v52 = vadd.f32 %v50, %v51
    %v53 = vrot.slane %v52, 1
    %v54 = vadd.f32 %v52, %v53
    %v55 = vrcp.pop 4.0
    %v56 = vmul.f32 %v47, %v55
    %v57 = vmul.f32 %v54, %v55
    %v58 = vlog2.pop %v56
    %v59 = vmul.f32 %v58, 0.6931472
    %v60 = vlog2.pop %v57
    %v61 = vmul.f32 %v60, 0.6931472
    %v62 = vmul.f32 %v59, 0.33333334
    %v63 = vmul.f32 %v61, 0.33333334
    %v64 = vmul.f32 %v62, 1.442695
    %v65 = vpow.pop %v64
    %v66 = vmul.f32 %v63, 1.442695
    %v67 = vpow.pop %v66
    %v68 = vpack.c.bf16 %v65, %v65
    %v69 = vpack.c.bf16 %v67, %v67
    %v70 = vld [vmem:[%s1] sm:$0xf]
    %v71 = vld [vmem:[%s1 + $0x4] sm:$0xf]
    %v72 = vld [vmem:[%s1 + $0x8] sm:$0xf]
    %v73 = vld [vmem:[%s1 + $0xc] sm:$0xf]
    %v74 = vld [vmem:[%s1 + $0x10] sm:$0xf]
    %v75 = vld [vmem:[%s1 + $0x14] sm:$0xf]
    %v76 = vld [vmem:[%s1 + $0x18] sm:$0xf]
    %v77 = vld [vmem:[%s1 + $0x1c] sm:$0xf]
    %v78 = vld [vmem:[%s1 + $0x20] sm:$0xf]
    %v79 = vld [vmem:[%s1 + $0x24] sm:$0xf]
    %v80 = vld [vmem:[%s1 + $0x28] sm:$0xf]
    %v81 = vld [vmem:[%s1 + $0x2c] sm:$0xf]
    %v82 = vld [vmem:[%s1 + $0x30] sm:$0xf]
    %v83 = vld [vmem:[%s1 + $0x34] sm:$0xf]
    %v84 = vld [vmem:[%s1 + $0x38] sm:$0xf]
    %v85 = vld [vmem:[%s1 + $0x3c] sm:$0xf]
    %v86 = vld [vmem:[%s2] sm:$0x1]
    %v88 = vlaneseq
    %v89 = vshrl.u32 %v88, 7
    %v90 = vsub.s32 0, %v89
    %v91 = vrot.slane %v86, %v90
    %v95 = vunpack.c.l.b16 %v68
    %v96 = vunpack.c.l.b16 %v69
    %vm97 = vcmask 1041409
    %v98 = vsel %vm97, %v96, %v95
    %v99 = vpack.c.b16 %v98, %v98
    %v117 = vunpack.c.l.b16 %v70
    %v118 = vunpack.c.l.b16 %v71
    %v119 = vunpack.c.l.b16 %v72
    %v120 = vunpack.c.l.b16 %v73
    %v121 = vunpack.c.l.b16 %v74
    %v122 = vunpack.c.l.b16 %v75
    %v123 = vunpack.c.l.b16 %v76
    %v124 = vunpack.c.l.b16 %v77
    %v125 = vunpack.c.l.b16 %v78
    %v126 = vunpack.c.l.b16 %v79
    %v127 = vunpack.c.l.b16 %v80
    %v128 = vunpack.c.l.b16 %v81
    %v129 = vunpack.c.l.b16 %v82
    %v130 = vunpack.c.l.b16 %v83
    %v131 = vunpack.c.l.b16 %v84
    %v132 = vunpack.c.l.b16 %v85
    %v133 = vpack.c.b16 %v118, %v117
    %v134 = vpack.c.b16 %v120, %v119
    %v135 = vpack.c.b16 %v122, %v121
    %v136 = vpack.c.b16 %v124, %v123
    %v137 = vpack.c.b16 %v126, %v125
    %v138 = vpack.c.b16 %v128, %v127
    %v139 = vpack.c.b16 %v130, %v129
    %v140 = vpack.c.b16 %v132, %v131
    %149 = vmatprep.subr.bf16.mxu0 0
    %150 = vmatpush1.bf16.msra.mxu0 %v140
    %151 = vmatprep.subr.bf16.mxu0 0
    %152 = vmatpush1.bf16.msra.mxu0 %v139
    %153 = vmatprep.subr.bf16.mxu0 0
    %154 = vmatpush1.bf16.msra.mxu0 %v138
    %155 = vmatprep.subr.bf16.mxu0 0
    %156 = vmatpush1.bf16.msra.mxu0 %v137
    %157 = vmatprep.subr.bf16.mxu0 0
    %158 = vmatpush1.bf16.msra.mxu0 %v136
    %159 = vmatprep.subr.bf16.mxu0 0
    %160 = vmatpush1.bf16.msra.mxu0 %v135
    %161 = vmatprep.subr.bf16.mxu0 0
    %162 = vmatpush1.bf16.msra.mxu0 %v134
    %163 = vmatprep.subr.bf16.mxu0 0
    %164 = vmatpush1.bf16.msra.mxu0 %v133
    %165 = vmatprep.subr.bf16.mxu0 0
    %166 = vmatpush2.bf16.msra.mxu0 0
    %167 = vmatprep.subr.bf16.mxu0 0
    %168 = vmatpush2.bf16.msra.mxu0 0
    %169 = vmatprep.subr.bf16.mxu0 0
    %170 = vmatpush2.bf16.msra.mxu0 0
    %171 = vmatprep.subr.bf16.mxu0 0
    %172 = vmatpush2.bf16.msra.mxu0 0
    %173 = vmatprep.subr.bf16.mxu0 0
    %174 = vmatpush2.bf16.msra.mxu0 0
    %175 = vmatprep.subr.bf16.mxu0 0
    %176 = vmatpush2.bf16.msra.mxu0 0
    %177 = vmatprep.subr.bf16.mxu0 0
    %178 = vmatpush2.bf16.msra.mxu0 0
    %179 = vmatprep.subr.bf16.mxu0 0
    %180 = vmatpush2.bf16.msra.mxu0 0
    %181 = vmatprep.mubr.bf16.mxu0 0
    %182 = vmatmul.mubr.bf16.gmra.mxu0 %v99
    %v183 = vpop.f32.mrf.mxu0
    %v184 = vadd.f32 %v91, %v183
    %v185 = vpop.f32.mrf.mxu0
    %v186 = vpop.f32.mrf.mxu0
    %v187 = vpop.f32.mrf.mxu0
    %188 = vdwg.mxu0
    %v189 = vmul.f32 %v184, %v184
    %vm190 = vcmask 1041408
    %v191 = vsel %vm190, %v189, 0.0
    %192 = vadd.xlane.f32.xlu0 %v191
    %v193 = vpop.xlane.xlu0 %192
    %v194 = vmax.f32 %v193, 1e-24
    %v195 = vrsqrt.pop %v194
    %v196 = vmul.f32 %v184, %v195
    %197 = vst [vmem:[#allocation2] sm:$0x3] %v196
    // Predicated region
    $region14: #{geo_localization_forward.7} parent=1 // pred_check
      _
    $region15: #{geo_localization_forward.7} parent=1 // pred_check_branch
      %199 = sbr.rel (0) target = $region17
    $region16: #{geo_localization_forward.7} parent=1 // pred_region
      %s201 = ssub.s32 32, 32
      %202 = vsyncadd [#allocation3], %s201
      %s204 = sshll.u32 [#allocation2], 4
      %s205 = int_to_ptr.vmem [resolvable:$true] %s204
      %207 = dma.vmem_to_hbm [thread:$0]  %s205, 32, %s3, [#allocation3]
    $region17: #{geo_localization_forward.7} parent=1 // pred_fallthru
      _
    // Predicated region
    $region18: #{geo_localization_forward.7} parent=1 // pred_check
      _
    $region19: #{geo_localization_forward.7} parent=1 // pred_check_branch
      %209 = sbr.rel (0) target = $region21
    $region20: #{geo_localization_forward.7} parent=1 // pred_region
      %210 = dma.done [#allocation3], 32
    $region21: #{geo_localization_forward.7} parent=1 // pred_fallthru
      _
    %211 = vsyncpa [#allocation3], 1

// kernel: geo_localization_forward.5
$region0: #{geo_localization_forward.5}
  #allocation0 [shape = 'u32[]', space=smem, size = 0x4, offset = 0x4, fixed_abs, tag = 'smem constant byte address 0x4 - core index']
  #allocation1 [shape = 'u32[144,128]{1,0:T(1,128)}', space=vmem, size = 0x12000, scoped, tag = 'internal scratch']
  %s0 = inlined_call_operand.vmem [shape: bf16[2,1,6,80,128], index: 0, kind: input, shape index: {}]
  %s1 = inlined_call_operand.vmem [shape: bf16[9,128,128], index: 1, kind: input, shape index: {}]
  %s2 = inlined_call_operand.vmem [shape: f32[1,128], index: 2, kind: input, shape index: {}]
  %s3 = inlined_call_operand.vmem [shape: bf16[2,1,64,128], index: 3, kind: output, shape index: {}]
  %s4 = sld [smem:[#allocation0]]
  $region45: #{geo_localization_forward.5} parent=0
    _
  %s6 = ssub.s32 1, %s4
  %s7 = scalar_select 0, %s6, %s4
  loop: start=0, step=1, limit=4
  $region2: #{geo_localization_forward.5} parent=0 // loop_pre_header
    _
  $region3: #{geo_localization_forward.5} parent=0 // loop_header
    %s9 = sphi 0, %s13
    %p10 = scmp.ge.s32.totalorder %s9, 4
    %s16 = sphi 0, %s28
    %s17 = sphi 0, %s24
    %s18 = sphi 0, %s16
    %s19 = sphi 0, %s17
    %s20 = sphi 0, %s18
    %s21 = sphi 0, %s19
    %s33 = sphi 0, %s35
    %s36 = sphi 0, %s33
    %s37 = sphi 0, %s36
    %s53 = sphi 0, %s37
    %s57 = sphi 0, %s57
    %s59 = sphi 0, %s57
    %s60 = sphi 0, %s59
    %s74 = sphi 0, %s60
    %s78 = sphi 0, %s78
    %s80 = sphi 0, %s78
    %s81 = sphi 0, %s80
    %s95 = sphi 0, %s81
    %s103 = sphi 0, %s105
    %s106 = sphi 0, %s103
    %s107 = sphi 0, %s106
    %s123 = sphi 0, %s107
  $region4: #{geo_localization_forward.5} parent=0 // loop_header_branch
    %12 = sbr.rel (%p10) target = $region8
  $region5: #{geo_localization_forward.5} parent=0 // loop_body
    %s14 = ssub.s32 %s9, 1
    %s15 = ssub.s32 %s9, 2
    %s22 = sadd.s32 1, %s17
    %p23 = scmp.ge.s32.totalorder %s22, 1
    %s24 = scalar_select %p23, 0, %s22
    %s25 = sadd.s32 1, %s16
    %s26 = scalar_select %p23, %s25, %s16
    %p27 = scmp.ge.s32.totalorder %s26, 2
    %s28 = scalar_select %p27, 0, %s26
    %s29 = ssub.s32 %s16, %s28
    %s30 = ssub.s32 %s17, %s24
    %s31 = sor.u32 %s29, %s30
    %p32 = scmp.eq.s32.totalorder %s31, 0
    %s34 = sadd.s32 %s33, 1
    %s35 = scalar_select %p32, %s33, %s34
    %p38 = pneg %p32
    %p39 = scmp.eq.s32.totalorder %s9, 1
    %p40 = por %p38, %p39
    %p41 = scmp.ne.s32.totalorder %s33, %s36
    %p42 = scmp.eq.s32.totalorder %s9, 0
    %p43 = por %p41, %p42
    %p44 = scmp.ne.s32.totalorder %s33, %s36
    %p45 = scmp.eq.s32.totalorder %s14, 1
    %p46 = por %p44, %p45
    %p47 = scmp.ne.s32.totalorder %s36, %s37
    %p48 = scmp.eq.s32.totalorder %s14, 0
    %p49 = por %p47, %p48
    %p50 = scmp.ne.s32.totalorder %s36, %s37
    %p51 = scmp.eq.s32.totalorder %s15, 1
    %p52 = por %p50, %p51
    %p54 = scmp.ne.s32.totalorder %s37, %s53
    %p55 = scmp.eq.s32.totalorder %s15, 0
    %p56 = por %p54, %p55
    %s58 = sadd.s32 %s57, 1
    %p61 = scmp.eq.s32.totalorder %s9, 1
    %p62 = scmp.ne.s32.totalorder %s57, %s59
    %p63 = scmp.eq.s32.totalorder %s9, 0
    %p64 = por %p62, %p63
    %p65 = scmp.ne.s32.totalorder %s57, %s59
    %p66 = scmp.eq.s32.totalorder %s14, 1
    %p67 = por %p65, %p66
    %p68 = scmp.ne.s32.totalorder %s59, %s60
    %p69 = scmp.eq.s32.totalorder %s14, 0
    %p70 = por %p68, %p69
    %p71 = scmp.ne.s32.totalorder %s59, %s60
    %p72 = scmp.eq.s32.totalorder %s15, 1
    %p73 = por %p71, %p72
    %p75 = scmp.ne.s32.totalorder %s60, %s74
    %p76 = scmp.eq.s32.totalorder %s15, 0
    %p77 = por %p75, %p76
    %s79 = sadd.s32 %s78, 1
    %p82 = scmp.eq.s32.totalorder %s9, 1
    %p83 = scmp.ne.s32.totalorder %s78, %s80
    %p84 = scmp.eq.s32.totalorder %s9, 0
    %p85 = por %p83, %p84
    %p86 = scmp.ne.s32.totalorder %s78, %s80
    %p87 = scmp.eq.s32.totalorder %s14, 1
    %p88 = por %p86, %p87
    %p89 = scmp.ne.s32.totalorder %s80, %s81
    %p90 = scmp.eq.s32.totalorder %s14, 0
    %p91 = por %p89, %p90
    %p92 = scmp.ne.s32.totalorder %s80, %s81
    %p93 = scmp.eq.s32.totalorder %s15, 1
    %p94 = por %p92, %p93
    %p96 = scmp.ne.s32.totalorder %s81, %s95
    %p97 = scmp.eq.s32.totalorder %s15, 0
    %p98 = por %p96, %p97
    %s99 = ssub.s32 %s16, %s28
    %s100 = ssub.s32 %s17, %s24
    %s101 = sor.u32 %s99, %s100
    %p102 = scmp.eq.s32.totalorder %s101, 0
    %s104 = sadd.s32 %s103, 1
    %s105 = scalar_select %p102, %s103, %s104
    %p108 = pneg %p102
    %p109 = scmp.eq.s32.totalorder %s9, 1
    %p110 = por %p108, %p109
    %p111 = scmp.ne.s32.totalorder %s103, %s106
    %p112 = scmp.eq.s32.totalorder %s9, 0
    %p113 = por %p111, %p112
    %p114 = scmp.ne.s32.totalorder %s103, %s106
    %p115 = scmp.eq.s32.totalorder %s14, 1
    %p116 = por %p114, %p115
    %p117 = scmp.ne.s32.totalorder %s106, %s107
    %p118 = scmp.eq.s32.totalorder %s14, 0
    %p119 = por %p117, %p118
    %p120 = scmp.ne.s32.totalorder %s106, %s107
    %p121 = scmp.eq.s32.totalorder %s15, 1
    %p122 = por %p120, %p121
    %p124 = scmp.ne.s32.totalorder %s107, %s123
    %p125 = scmp.eq.s32.totalorder %s15, 0
    %p126 = por %p124, %p125
    %p127 = scmp.le.s32.totalorder 1, %s9
    %p128 = scmp.lt.s32.totalorder %s9, 3
    %p129 = pnand %p127, %p128
    %p130 = pneg %p129
    // Predicated region
    $region9: #{geo_localization_forward.5} parent=5 // pred_check
      _
    $region10: #{geo_localization_forward.5} parent=5 // pred_check_branch
      %132 = sbr.rel (%p129) target = $region12
    $region11: #{geo_localization_forward.5} parent=5 // pred_region
      %s133 = ssub.s32 %s9, 1
      // Predicated region
      $region13: #{geo_localization_forward.5} parent=11 // pred_check
        %p134 = pneg %p70
      $region14: #{geo_localization_forward.5} parent=11 // pred_check_branch
        %136 = sbr.rel (%p134) target = $region16
      $region15: #{geo_localization_forward.5} parent=11 // pred_region
        _
      $region16: #{geo_localization_forward.5} parent=11 // pred_fallthru
        _
      // Predicated region
      $region17: #{geo_localization_forward.5} parent=11 // pred_check
        %p137 = pneg %p91
      $region18: #{geo_localization_forward.5} parent=11 // pred_check_branch
        %139 = sbr.rel (%p137) target = $region20
      $region19: #{geo_localization_forward.5} parent=11 // pred_region
        _
      $region20: #{geo_localization_forward.5} parent=11 // pred_fallthru
        _
    $region12: #{geo_localization_forward.5} parent=5 // pred_fallthru
      _
    %p140 = scmp.lt.s32.totalorder %s9, 2
    // Predicated region
    $region21: #{geo_localization_forward.5} parent=5 // pred_check
      %p141 = pneg %p140
    $region22: #{geo_localization_forward.5} parent=5 // pred_check_branch
      %143 = sbr.rel (%p141) target = $region24
    $region23: #{geo_localization_forward.5} parent=5 // pred_region
      // Predicated region
      $region25: #{geo_localization_forward.5} parent=23 // pred_check
        %p144 = pneg %p43
      $region26: #{geo_localization_forward.5} parent=23 // pred_check_branch
        %146 = sbr.rel (%p144) target = $region28
      $region27: #{geo_localization_forward.5} parent=23 // pred_region
        %p147 = scmp.lt.s32.totalorder %s16, 1
        %s148 = scalar_select %p147, %s16, 1
        %p149 = scmp.lt.s32.totalorder %s17, 0
        %s150 = scalar_select %p149, %s17, 0
        %s151 = smul.addr %s150, 60
        %s152 = smul.addr %s148, 60
        %s153 = sadd.s32 %s151, %s152
        %s154 = smul.addr %s153, 4
        %s155 = scalar_lea.vmem %s0, %s154
      $region28: #{geo_localization_forward.5} parent=23 // pred_fallthru
        _
    $region24: #{geo_localization_forward.5} parent=5 // pred_fallthru
      _
    %p156 = scmp.le.s32.totalorder 1, %s9
    %p157 = scmp.lt.s32.totalorder %s9, 3
    %p158 = pnand %p156, %p157
    %p159 = pneg %p158
    // Predicated region
    $region29: #{geo_localization_forward.5} parent=5 // pred_check
      _
    $region30: #{geo_localization_forward.5} parent=5 // pred_check_branch
      %161 = sbr.rel (%p158) target = $region32
    $region31: #{geo_localization_forward.5} parent=5 // pred_region
      %s162 = ssub.s32 %s9, 1
      %p163 = scmp.lt.s32.totalorder %s18, 1
      %s164 = scalar_select %p163, %s18, 1
      %p165 = scmp.lt.s32.totalorder %s19, 0
      %s166 = scalar_select %p165, %s19, 0
      %s167 = smul.addr %s166, 60
      %s168 = smul.addr %s164, 60
      %s169 = sadd.s32 %s167, %s168
      %s170 = smul.addr %s169, 4
      %s171 = scalar_lea.vmem %s0, %s170
      %p172 = pneg %p49
      %p173 = pneg %p46
      %p174 = pneg %p70
      %p175 = pneg %p67
      %p176 = pneg %p91
      %p177 = pneg %p88
      %p178 = pneg %p119
      %p179 = pneg %p116
      %p180 = scmp.lt.s32.totalorder %s18, 1
      %s181 = scalar_select %p180, %s18, 1
      %p182 = scmp.lt.s32.totalorder %s19, 0
      %s183 = scalar_select %p182, %s19, 0
      %s184 = smul.addr %s183, 8
      %s185 = smul.addr %s181, 8
      %s186 = sadd.s32 %s184, %s185
      %s187 = smul.addr %s186, 4
      %s188 = scalar_lea.vmem %s3, %s187
      %p189 = scmp.lt.s32.totalorder %s18, 1
      %s190 = scalar_select %p189, %s18, 1
      %p191 = scmp.lt.s32.totalorder %s19, 0
      %s192 = scalar_select %p191, %s19, 0
      %s193 = smul.addr %s192, 60
      %s194 = smul.addr %s190, 60
      %s195 = sadd.s32 %s193, %s194
      %s196 = smul.addr %s195, 4
      %s197 = scalar_lea.vmem %s0, %s196
      %p198 = scmp.lt.s32.totalorder %s18, 1
      %s199 = scalar_select %p198, %s18, 1
      %p200 = scmp.lt.s32.totalorder %s19, 0
      %s201 = scalar_select %p200, %s19, 0
      %s202 = smul.addr %s201, 8
      %s203 = smul.addr %s199, 8
      %s204 = sadd.s32 %s202, %s203
      %s205 = smul.addr %s204, 4
      %s206 = scalar_lea.vmem %s3, %s205
      %v208 = vld [vmem:[%s197] sm:$0xf]
      %v209 = vld [vmem:[%s197 + $0x4] sm:$0xf]
      %v210 = vld [vmem:[%s197 + $0x8] sm:$0xf]
      %v211 = vld [vmem:[%s197 + $0xc] sm:$0xf]
      %v212 = vld [vmem:[%s197 + $0x10] sm:$0xf]
      %v213 = vld [vmem:[%s197 + $0x14] sm:$0xf]
      %v214 = vld [vmem:[%s197 + $0x18] sm:$0xf]
      %v215 = vld [vmem:[%s197 + $0x1c] sm:$0xf]
      %v216 = vld [vmem:[%s1] sm:$0xf]
      %v217 = vld [vmem:[%s1 + $0x4] sm:$0xf]
      %v218 = vld [vmem:[%s1 + $0x8] sm:$0xf]
      %v219 = vld [vmem:[%s1 + $0xc] sm:$0xf]
      %v220 = vld [vmem:[%s1 + $0x10] sm:$0xf]
      %v221 = vld [vmem:[%s1 + $0x14] sm:$0xf]
      %v222 = vld [vmem:[%s1 + $0x18] sm:$0xf]
      %v223 = vld [vmem:[%s1 + $0x1c] sm:$0xf]
      %v224 = vld [vmem:[%s1 + $0x20] sm:$0xf]
      %v225 = vld [vmem:[%s1 + $0x24] sm:$0xf]
      %v226 = vld [vmem:[%s1 + $0x28] sm:$0xf]
      %v227 = vld [vmem:[%s1 + $0x2c] sm:$0xf]
      %v228 = vld [vmem:[%s1 + $0x30] sm:$0xf]
      %v229 = vld [vmem:[%s1 + $0x34] sm:$0xf]
      %v230 = vld [vmem:[%s1 + $0x38] sm:$0xf]
      %v231 = vld [vmem:[%s1 + $0x3c] sm:$0xf]
      %s232 = scalar_lea.vmem %s197, 40
      %v233 = vld [vmem:[%s232] sm:$0xf]
      %v234 = vld [vmem:[%s232 + $0x4] sm:$0xf]
      %v235 = vld [vmem:[%s232 + $0x8] sm:$0xf]
      %v236 = vld [vmem:[%s232 + $0xc] sm:$0xf]
      %v237 = vld [vmem:[%s232 + $0x10] sm:$0xf]
      %v238 = vld [vmem:[%s232 + $0x14] sm:$0xf]
      %v239 = vld [vmem:[%s232 + $0x18] sm:$0xf]
      %v240 = vld [vmem:[%s232 + $0x1c] sm:$0xf]
      %s241 = scalar_lea.vmem %s1, 64
      %v242 = vld [vmem:[%s241] sm:$0xf]
      %v243 = vld [vmem:[%s241 + $0x4] sm:$0xf]
      %v244 = vld [vmem:[%s241 + $0x8] sm:$0xf]
      %v245 = vld [vmem:[%s241 + $0xc] sm:$0xf]
      %v246 = vld [vmem:[%s241 + $0x10] sm:$0xf]
      %v247 = vld [vmem:[%s241 + $0x14] sm:$0xf]
      %v248 = vld [vmem:[%s241 + $0x18] sm:$0xf]
      %v249 = vld [vmem:[%s241 + $0x1c] sm:$0xf]
      %v250 = vld [vmem:[%s241 + $0x20] sm:$0xf]
      %v251 = vld [vmem:[%s241 + $0x24] sm:$0xf]
      %v252 = vld [vmem:[%s241 + $0x28] sm:$0xf]
      %v253 = vld [vmem:[%s241 + $0x2c] sm:$0xf]
      %v254 = vld [vmem:[%s241 + $0x30] sm:$0xf]
      %v255 = vld [vmem:[%s241 + $0x34] sm:$0xf]
      %v256 = vld [vmem:[%s241 + $0x38] sm:$0xf]
      %v257 = vld [vmem:[%s241 + $0x3c] sm:$0xf]
      %v266 = vunpack.c.l.b16 %v233
      %v267 = vunpack.c.l.b16 %v234
      %v268 = vunpack.c.l.b16 %v235
      %v269 = vunpack.c.l.b16 %v236
      %v270 = vunpack.c.l.b16 %v237
      %v271 = vunpack.c.l.b16 %v238
      %v272 = vunpack.c.l.b16 %v239
      %v273 = vunpack.c.l.b16 %v240
      %v274 = vpack.c.b16 %v267, %v266
      %v275 = vpack.c.b16 %v269, %v268
      %v276 = vpack.c.b16 %v271, %v270
      %v277 = vpack.c.b16 %v273, %v272
      %v298 = vunpack.c.l.b16 %v242
      %v299 = vunpack.c.l.b16 %v243
      %v300 = vunpack.c.l.b16 %v244
      %v301 = vunpack.c.l.b16 %v245
      %v302 = vunpack.c.l.b16 %v246
      %v303 = vunpack.c.l.b16 %v247
      %v304 = vunpack.c.l.b16 %v248
      %v305 = vunpack.c.l.b16 %v249
      %v306 = vunpack.c.l.b16 %v250
      %v307 = vunpack.c.l.b16 %v251
      %v308 = vunpack.c.l.b16 %v252
      %v309 = vunpack.c.l.b16 %v253
      %v310 = vunpack.c.l.b16 %v254
      %v311 = vunpack.c.l.b16 %v255
      %v312 = vunpack.c.l.b16 %v256
      %v313 = vunpack.c.l.b16 %v257
      %v314 = vpack.c.b16 %v299, %v298
      %v315 = vpack.c.b16 %v301, %v300
      %v316 = vpack.c.b16 %v303, %v302
      %v317 = vpack.c.b16 %v305, %v304
      %v318 = vpack.c.b16 %v307, %v306
      %v319 = vpack.c.b16 %v309, %v308
      %v320 = vpack.c.b16 %v311, %v310
      %v321 = vpack.c.b16 %v313, %v312
      %330 = vmatprep.subr.bf16.mxu0 0
      %331 = vmatpush1.bf16.msra.mxu0 %v321
      %332 = vmatprep.subr.bf16.mxu0 0
      %333 = vmatpush1.bf16.msra.mxu0 %v320
      %334 = vmatprep.subr.bf16.mxu0 0
      %335 = vmatpush1.bf16.msra.mxu0 %v319
      %336 = vmatprep.subr.bf16.mxu0 0
      %337 = vmatpush1.bf16.msra.mxu0 %v318
      %338 = vmatprep.subr.bf16.mxu0 0
      %339 = vmatpush1.bf16.msra.mxu0 %v317
      %340 = vmatprep.subr.bf16.mxu0 0
      %341 = vmatpush1.bf16.msra.mxu0 %v316
      %342 = vmatprep.subr.bf16.mxu0 0
      %343 = vmatpush1.bf16.msra.mxu0 %v315
      %344 = vmatprep.subr.bf16.mxu0 0
      %345 = vmatpush1.bf16.msra.mxu0 %v314
      %346 = vmatprep.subr.bf16.mxu0 0
      %347 = vmatpush2.bf16.msra.mxu0 0
      %348 = vmatprep.subr.bf16.mxu0 0
      %349 = vmatpush2.bf16.msra.mxu0 0
      %350 = vmatprep.subr.bf16.mxu0 0
      %351 = vmatpush2.bf16.msra.mxu0 0
      %352 = vmatprep.subr.bf16.mxu0 0
      %353 = vmatpush2.bf16.msra.mxu0 0
      %354 = vmatprep.subr.bf16.mxu0 0
      %355 = vmatpush2.bf16.msra.mxu0 0
      %356 = vmatprep.subr.bf16.mxu0 0
      %357 = vmatpush2.bf16.msra.mxu0 0
      %358 = vmatprep.subr.bf16.mxu0 0
      %359 = vmatpush2.bf16.msra.mxu0 0
      %360 = vmatprep.subr.bf16.mxu0 0
      %361 = vmatpush2.bf16.msra.mxu0 0
      %362 = vmatprep.mubr.bf16.mxu0 0
      %363 = vmatmul.mubr.bf16.gmra.mxu0 %v274
      %v364 = vpop.f32.mrf.mxu0
      %v365 = vadd.f32 0.0, %v364
      %v366 = vpop.f32.mrf.mxu0
      %v367 = vpop.f32.mrf.mxu0
      %v368 = vadd.f32 0.0, %v367
      %v369 = vpop.f32.mrf.mxu0
      %370 = vmatprep.mubr.bf16.mxu0 0
      %371 = vmatmul.mubr.bf16.gmra.mxu0 %v275
      %v372 = vpop.f32.mrf.mxu0
      %v373 = vadd.f32 0.0, %v372
      %v374 = vpop.f32.mrf.mxu0
      %v375 = vpop.f32.mrf.mxu0
      %v376 = vadd.f32 0.0, %v375
      %v377 = vpop.f32.mrf.mxu0
      %378 = vmatprep.mubr.bf16.mxu0 0
      %379 = vmatmul.mubr.bf16.gmra.mxu0 %v276
      %v380 = vpop.f32.mrf.mxu0
      %v381 = vadd.f32 0.0, %v380
      %v382 = vpop.f32.mrf.mxu0
      %v383 = vpop.f32.mrf.mxu0
      %v384 = vadd.f32 0.0, %v383
      %v385 = vpop.f32.mrf.mxu0
      %386 = vmatprep.mubr.bf16.mxu0 0
      %387 = vmatmul.mubr.bf16.gmra.mxu0 %v277
      %v388 = vpop.f32.mrf.mxu0
      %v389 = vadd.f32 0.0, %v388
      %v390 = vpop.f32.mrf.mxu0
      %v391 = vpop.f32.mrf.mxu0
      %v392 = vadd.f32 0.0, %v391
      %v393 = vpop.f32.mrf.mxu0
      %394 = vdwg.mxu0
      %v403 = vunpack.c.l.b16 %v208
      %v404 = vunpack.c.l.b16 %v209
      %v405 = vunpack.c.l.b16 %v210
      %v406 = vunpack.c.l.b16 %v211
      %v407 = vunpack.c.l.b16 %v212
      %v408 = vunpack.c.l.b16 %v213
      %v409 = vunpack.c.l.b16 %v214
      %v410 = vunpack.c.l.b16 %v215
      %v411 = vpack.c.b16 %v404, %v403
      %v412 = vpack.c.b16 %v406, %v405
      %v413 = vpack.c.b16 %v408, %v407
      %v414 = vpack.c.b16 %v410, %v409
      %v435 = vunpack.c.l.b16 %v216
      %v436 = vunpack.c.l.b16 %v217
      %v437 = vunpack.c.l.b16 %v218
      %v438 = vunpack.c.l.b16 %v219
      %v439 = vunpack.c.l.b16 %v220
      %v440 = vunpack.c.l.b16 %v221
      %v441 = vunpack.c.l.b16 %v222
      %v442 = vunpack.c.l.b16 %v223
      %v443 = vunpack.c.l.b16 %v224
      %v444 = vunpack.c.l.b16 %v225
      %v445 = vunpack.c.l.b16 %v226
      %v446 = vunpack.c.l.b16 %v227
      %v447 = vunpack.c.l.b16 %v228
      %v448 = vunpack.c.l.b16 %v229
      %v449 = vunpack.c.l.b16 %v230
      %v450 = vunpack.c.l.b16 %v231
      %v451 = vpack.c.b16 %v436, %v435
      %v452 = vpack.c.b16 %v438, %v437
      %v453 = vpack.c.b16 %v440, %v439
      %v454 = vpack.c.b16 %v442, %v441
      %v455 = vpack.c.b16 %v444, %v443
      %v456 = vpack.c.b16 %v446, %v445
      %v457 = vpack.c.b16 %v448, %v447
      %v458 = vpack.c.b16 %v450, %v449
      %467 = vmatprep.subr.bf16.mxu0 0
      %468 = vmatpush1.bf16.msra.mxu0 %v458
      %469 = vmatprep.subr.bf16.mxu0 0
      %470 = vmatpush1.bf16.msra.mxu0 %v457
      %471 = vmatprep.subr.bf16.mxu0 0
      %472 = vmatpush1.bf16.msra.mxu0 %v456
      %473 = vmatprep.subr.bf16.mxu0 0
      %474 = vmatpush1.bf16.msra.mxu0 %v455
      %475 = vmatprep.subr.bf16.mxu0 0
      %476 = vmatpush1.bf16.msra.mxu0 %v454
      %477 = vmatprep.subr.bf16.mxu0 0
      %478 = vmatpush1.bf16.msra.mxu0 %v453
      %479 = vmatprep.subr.bf16.mxu0 0
      %480 = vmatpush1.bf16.msra.mxu0 %v452
      %481 = vmatprep.subr.bf16.mxu0 0
      %482 = vmatpush1.bf16.msra.mxu0 %v451
      %483 = vmatprep.subr.bf16.mxu0 0
      %484 = vmatpush2.bf16.msra.mxu0 0
      %485 = vmatprep.subr.bf16.mxu0 0
      %486 = vmatpush2.bf16.msra.mxu0 0
      %487 = vmatprep.subr.bf16.mxu0 0
      %488 = vmatpush2.bf16.msra.mxu0 0
      %489 = vmatprep.subr.bf16.mxu0 0
      %490 = vmatpush2.bf16.msra.mxu0 0
      %491 = vmatprep.subr.bf16.mxu0 0
      %492 = vmatpush2.bf16.msra.mxu0 0
      %493 = vmatprep.subr.bf16.mxu0 0
      %494 = vmatpush2.bf16.msra.mxu0 0
      %495 = vmatprep.subr.bf16.mxu0 0
      %496 = vmatpush2.bf16.msra.mxu0 0
      %497 = vmatprep.subr.bf16.mxu0 0
      %498 = vmatpush2.bf16.msra.mxu0 0
      %499 = vmatprep.mubr.bf16.mxu0 0
      %500 = vmatmul.mubr.bf16.gmra.mxu0 %v411
      %v501 = vpop.f32.mrf.mxu0
      %v502 = vadd.f32 %v365, %v501
      %v503 = vpop.f32.mrf.mxu0
      %v504 = vpop.f32.mrf.mxu0
      %v505 = vadd.f32 %v368, %v504
      %v506 = vpop.f32.mrf.mxu0
      %507 = vmatprep.mubr.bf16.mxu0 0
      %508 = vmatmul.mubr.bf16.gmra.mxu0 %v412
      %v509 = vpop.f32.mrf.mxu0
      %v510 = vadd.f32 %v373, %v509
      %v511 = vpop.f32.mrf.mxu0
      %v512 = vpop.f32.mrf.mxu0
      %v513 = vadd.f32 %v376, %v512
      %v514 = vpop.f32.mrf.mxu0
      %515 = vmatprep.mubr.bf16.mxu0 0
      %516 = vmatmul.mubr.bf16.gmra.mxu0 %v413
      %v517 = vpop.f32.mrf.mxu0
      %v518 = vadd.f32 %v381, %v517
      %v519 = vpop.f32.mrf.mxu0
      %v520 = vpop.f32.mrf.mxu0
      %v521 = vadd.f32 %v384, %v520
      %v522 = vpop.f32.mrf.mxu0
      %523 = vmatprep.mubr.bf16.mxu0 0
      %524 = vmatmul.mubr.bf16.gmra.mxu0 %v414
      %v525 = vpop.f32.mrf.mxu0
      %v526 = vadd.f32 %v389, %v525
      %v527 = vpop.f32.mrf.mxu0
      %v528 = vpop.f32.mrf.mxu0
      %v529 = vadd.f32 %v392, %v528
      %v530 = vpop.f32.mrf.mxu0
      %531 = vdwg.mxu0
      %s532 = scalar_lea.vmem %s197, 80
      %v533 = vld [vmem:[%s532] sm:$0xf]
      %v534 = vld [vmem:[%s532 + $0x4] sm:$0xf]
      %v535 = vld [vmem:[%s532 + $0x8] sm:$0xf]
      %v536 = vld [vmem:[%s532 + $0xc] sm:$0xf]
      %v537 = vld [vmem:[%s532 + $0x10] sm:$0xf]
      %v538 = vld [vmem:[%s532 + $0x14] sm:$0xf]
      %v539 = vld [vmem:[%s532 + $0x18] sm:$0xf]
      %v540 = vld [vmem:[%s532 + $0x1c] sm:$0xf]
      %s541 = scalar_lea.vmem %s1, 128
      %v542 = vld [vmem:[%s541] sm:$0xf]
      %v543 = vld [vmem:[%s541 + $0x4] sm:$0xf]
      %v544 = vld [vmem:[%s541 + $0x8] sm:$0xf]
      %v545 = vld [vmem:[%s541 + $0xc] sm:$0xf]
      %v546 = vld [vmem:[%s541 + $0x10] sm:$0xf]
      %v547 = vld [vmem:[%s541 + $0x14] sm:$0xf]
      %v548 = vld [vmem:[%s541 + $0x18] sm:$0xf]
      %v549 = vld [vmem:[%s541 + $0x1c] sm:$0xf]
      %v550 = vld [vmem:[%s541 + $0x20] sm:$0xf]
      %v551 = vld [vmem:[%s541 + $0x24] sm:$0xf]
      %v552 = vld [vmem:[%s541 + $0x28] sm:$0xf]
      %v553 = vld [vmem:[%s541 + $0x2c] sm:$0xf]
      %v554 = vld [vmem:[%s541 + $0x30] sm:$0xf]
      %v555 = vld [vmem:[%s541 + $0x34] sm:$0xf]
      %v556 = vld [vmem:[%s541 + $0x38] sm:$0xf]
      %v557 = vld [vmem:[%s541 + $0x3c] sm:$0xf]
      %v566 = vunpack.c.l.b16 %v533
      %v567 = vunpack.c.l.b16 %v534
      %v568 = vunpack.c.l.b16 %v535
      %v569 = vunpack.c.l.b16 %v536
      %v570 = vunpack.c.l.b16 %v537
      %v571 = vunpack.c.l.b16 %v538
      %v572 = vunpack.c.l.b16 %v539
      %v573 = vunpack.c.l.b16 %v540
      %v574 = vpack.c.b16 %v567, %v566
      %v575 = vpack.c.b16 %v569, %v568
      %v576 = vpack.c.b16 %v571, %v570
      %v577 = vpack.c.b16 %v573, %v572
      %v598 = vunpack.c.l.b16 %v542
      %v599 = vunpack.c.l.b16 %v543
      %v600 = vunpack.c.l.b16 %v544
      %v601 = vunpack.c.l.b16 %v545
      %v602 = vunpack.c.l.b16 %v546
      %v603 = vunpack.c.l.b16 %v547
      %v604 = vunpack.c.l.b16 %v548
      %v605 = vunpack.c.l.b16 %v549
      %v606 = vunpack.c.l.b16 %v550
      %v607 = vunpack.c.l.b16 %v551
      %v608 = vunpack.c.l.b16 %v552
      %v609 = vunpack.c.l.b16 %v553
      %v610 = vunpack.c.l.b16 %v554
      %v611 = vunpack.c.l.b16 %v555
      %v612 = vunpack.c.l.b16 %v556
      %v613 = vunpack.c.l.b16 %v557
      %v614 = vpack.c.b16 %v599, %v598
      %v615 = vpack.c.b16 %v601, %v600
      %v616 = vpack.c.b16 %v603, %v602
      %v617 = vpack.c.b16 %v605, %v604
      %v618 = vpack.c.b16 %v607, %v606
      %v619 = vpack.c.b16 %v609, %v608
      %v620 = vpack.c.b16 %v611, %v610
      %v621 = vpack.c.b16 %v613, %v612
      %630 = vmatprep.subr.bf16.mxu0 0
      %631 = vmatpush1.bf16.msra.mxu0 %v621
      %632 = vmatprep.subr.bf16.mxu0 0
      %633 = vmatpush1.bf16.msra.mxu0 %v620
      %634 = vmatprep.subr.bf16.mxu0 0
      %635 = vmatpush1.bf16.msra.mxu0 %v619
      %636 = vmatprep.subr.bf16.mxu0 0
      %637 = vmatpush1.bf16.msra.mxu0 %v618
      %638 = vmatprep.subr.bf16.mxu0 0
      %639 = vmatpush1.bf16.msra.mxu0 %v617
      %640 = vmatprep.subr.bf16.mxu0 0
      %641 = vmatpush1.bf16.msra.mxu0 %v616
      %642 = vmatprep.subr.bf16.mxu0 0
      %643 = vmatpush1.bf16.msra.mxu0 %v615
      %644 = vmatprep.subr.bf16.mxu0 0
      %645 = vmatpush1.bf16.msra.mxu0 %v614
      %646 = vmatprep.subr.bf16.mxu0 0
      %647 = vmatpush2.bf16.msra.mxu0 0
      %648 = vmatprep.subr.bf16.mxu0 0
      %649 = vmatpush2.bf16.msra.mxu0 0
      %650 = vmatprep.subr.bf16.mxu0 0
      %651 = vmatpush2.bf16.msra.mxu0 0
      %652 = vmatprep.subr.bf16.mxu0 0
      %653 = vmatpush2.bf16.msra.mxu0 0
      %654 = vmatprep.subr.bf16.mxu0 0
      %655 = vmatpush2.bf16.msra.mxu0 0
      %656 = vmatprep.subr.bf16.mxu0 0
      %657 = vmatpush2.bf16.msra.mxu0 0
      %658 = vmatprep.subr.bf16.mxu0 0
      %659 = vmatpush2.bf16.msra.mxu0 0
      %660 = vmatprep.subr.bf16.mxu0 0
      %661 = vmatpush2.bf16.msra.mxu0 0
      %662 = vmatprep.mubr.bf16.mxu0 0
      %663 = vmatmul.mubr.bf16.gmra.mxu0 %v574
      %v664 = vpop.f32.mrf.mxu0
      %v665 = vadd.f32 0.0, %v664
      %v666 = vpop.f32.mrf.mxu0
      %v667 = vpop.f32.mrf.mxu0
      %v668 = vadd.f32 0.0, %v667
      %v669 = vpop.f32.mrf.mxu0
      %670 = vmatprep.mubr.bf16.mxu0 0
      %671 = vmatmul.mubr.bf16.gmra.mxu0 %v575
      %v672 = vpop.f32.mrf.mxu0
      %v673 = vadd.f32 0.0, %v672
      %v674 = vpop.f32.mrf.mxu0
      %v675 = vpop.f32.mrf.mxu0
      %v676 = vadd.f32 0.0, %v675
      %v677 = vpop.f32.mrf.mxu0
      %678 = vmatprep.mubr.bf16.mxu0 0
      %679 = vmatmul.mubr.bf16.gmra.mxu0 %v576
      %v680 = vpop.f32.mrf.mxu0
      %v681 = vadd.f32 0.0, %v680
      %v682 = vpop.f32.mrf.mxu0
      %v683 = vpop.f32.mrf.mxu0
      %v684 = vadd.f32 0.0, %v683
      %v685 = vpop.f32.mrf.mxu0
      %686 = vmatprep.mubr.bf16.mxu0 0
      %687 = vmatmul.mubr.bf16.gmra.mxu0 %v577
      %v688 = vpop.f32.mrf.mxu0
      %v689 = vadd.f32 0.0, %v688
      %v690 = vpop.f32.mrf.mxu0
      %v691 = vpop.f32.mrf.mxu0
      %v692 = vadd.f32 0.0, %v691
      %v693 = vpop.f32.mrf.mxu0
      %694 = vdwg.mxu0
      %v695 = vadd.f32 %v502, %v665
      %v696 = vadd.f32 %v505, %v668
      %v697 = vadd.f32 %v510, %v673
      %v698 = vadd.f32 %v513, %v676
      %v699 = vadd.f32 %v518, %v681
      %v700 = vadd.f32 %v521, %v684
      %v701 = vadd.f32 %v526, %v689
      %v702 = vadd.f32 %v529, %v692
      %s703 = scalar_lea.vmem %s197, 120
      %v704 = vld [vmem:[%s703] sm:$0xf]
      %v705 = vld [vmem:[%s703 + $0x4] sm:$0xf]
      %v706 = vld [vmem:[%s703 + $0x8] sm:$0xf]
      %v707 = vld [vmem:[%s703 + $0xc] sm:$0xf]
      %v708 = vld [vmem:[%s703 + $0x10] sm:$0xf]
      %v709 = vld [vmem:[%s703 + $0x14] sm:$0xf]
      %v710 = vld [vmem:[%s703 + $0x18] sm:$0xf]
      %v711 = vld [vmem:[%s703 + $0x1c] sm:$0xf]
      %s712 = scalar_lea.vmem %s1, 192
      %v713 = vld [vmem:[%s712] sm:$0xf]
      %v714 = vld [vmem:[%s712 + $0x4] sm:$0xf]
      %v715 = vld [vmem:[%s712 + $0x8] sm:$0xf]
      %v716 = vld [vmem:[%s712 + $0xc] sm:$0xf]
      %v717 = vld [vmem:[%s712 + $0x10] sm:$0xf]
      %v718 = vld [vmem:[%s712 + $0x14] sm:$0xf]
      %v719 = vld [vmem:[%s712 + $0x18] sm:$0xf]
      %v720 = vld [vmem:[%s712 + $0x1c] sm:$0xf]
      %v721 = vld [vmem:[%s712 + $0x20] sm:$0xf]
      %v722 = vld [vmem:[%s712 + $0x24] sm:$0xf]
      %v723 = vld [vmem:[%s712 + $0x28] sm:$0xf]
      %v724 = vld [vmem:[%s712 + $0x2c] sm:$0xf]
      %v725 = vld [vmem:[%s712 + $0x30] sm:$0xf]
      %v726 = vld [vmem:[%s712 + $0x34] sm:$0xf]
      %v727 = vld [vmem:[%s712 + $0x38] sm:$0xf]
      %v728 = vld [vmem:[%s712 + $0x3c] sm:$0xf]
      %v737 = vunpack.c.l.b16 %v704
      %v738 = vunpack.c.l.b16 %v705
      %v739 = vunpack.c.l.b16 %v706
      %v740 = vunpack.c.l.b16 %v707
      %v741 = vunpack.c.l.b16 %v708
      %v742 = vunpack.c.l.b16 %v709
      %v743 = vunpack.c.l.b16 %v710
      %v744 = vunpack.c.l.b16 %v711
      %v745 = vpack.c.b16 %v738, %v737
      %v746 = vpack.c.b16 %v740, %v739
      %v747 = vpack.c.b16 %v742, %v741
      %v748 = vpack.c.b16 %v744, %v743
      %v769 = vunpack.c.l.b16 %v713
      %v770 = vunpack.c.l.b16 %v714
      %v771 = vunpack.c.l.b16 %v715
      %v772 = vunpack.c.l.b16 %v716
      %v773 = vunpack.c.l.b16 %v717
      %v774 = vunpack.c.l.b16 %v718
      %v775 = vunpack.c.l.b16 %v719
      %v776 = vunpack.c.l.b16 %v720
      %v777 = vunpack.c.l.b16 %v721
      %v778 = vunpack.c.l.b16 %v722
      %v779 = vunpack.c.l.b16 %v723
      %v780 = vunpack.c.l.b16 %v724
      %v781 = vunpack.c.l.b16 %v725
      %v782 = vunpack.c.l.b16 %v726
      %v783 = vunpack.c.l.b16 %v727
      %v784 = vunpack.c.l.b16 %v728
      %v785 = vpack.c.b16 %v770, %v769
      %v786 = vpack.c.b16 %v772, %v771
      %v787 = vpack.c.b16 %v774, %v773
      %v788 = vpack.c.b16 %v776, %v775
      %v789 = vpack.c.b16 %v778, %v777
      %v790 = vpack.c.b16 %v780, %v779
      %v791 = vpack.c.b16 %v782, %v781
      %v792 = vpack.c.b16 %v784, %v783
      %801 = vmatprep.subr.bf16.mxu0 0
      %802 = vmatpush1.bf16.msra.mxu0 %v792
      %803 = vmatprep.subr.bf16.mxu0 0
      %804 = vmatpush1.bf16.msra.mxu0 %v791
      %805 = vmatprep.subr.bf16.mxu0 0
      %806 = vmatpush1.bf16.msra.mxu0 %v790
      %807 = vmatprep.subr.bf16.mxu0 0
      %808 = vmatpush1.bf16.msra.mxu0 %v789
      %809 = vmatprep.subr.bf16.mxu0 0
      %810 = vmatpush1.bf16.msra.mxu0 %v788
      %811 = vmatprep.subr.bf16.mxu0 0
      %812 = vmatpush1.bf16.msra.mxu0 %v787
      %813 = vmatprep.subr.bf16.mxu0 0
      %814 = vmatpush1.bf16.msra.mxu0 %v786
      %815 = vmatprep.subr.bf16.mxu0 0
      %816 = vmatpush1.bf16.msra.mxu0 %v785
      %817 = vmatprep.subr.bf16.mxu0 0
      %818 = vmatpush2.bf16.msra.mxu0 0
      %819 = vmatprep.subr.bf16.mxu0 0
      %820 = vmatpush2.bf16.msra.mxu0 0
      %821 = vmatprep.subr.bf16.mxu0 0
      %822 = vmatpush2.bf16.msra.mxu0 0
      %823 = vmatprep.subr.bf16.mxu0 0
      %824 = vmatpush2.bf16.msra.mxu0 0
      %825 = vmatprep.subr.bf16.mxu0 0
      %826 = vmatpush2.bf16.msra.mxu0 0
      %827 = vmatprep.subr.bf16.mxu0 0
      %828 = vmatpush2.bf16.msra.mxu0 0
      %829 = vmatprep.subr.bf16.mxu0 0
      %830 = vmatpush2.bf16.msra.mxu0 0
      %831 = vmatprep.subr.bf16.mxu0 0
      %832 = vmatpush2.bf16.msra.mxu0 0
      %833 = vmatprep.mubr.bf16.mxu0 0
      %834 = vmatmul.mubr.bf16.gmra.mxu0 %v745
      %v835 = vpop.f32.mrf.mxu0
      %v836 = vadd.f32 0.0, %v835
      %v837 = vpop.f32.mrf.mxu0
      %v838 = vpop.f32.mrf.mxu0
      %v839 = vadd.f32 0.0, %v838
      %v840 = vpop.f32.mrf.mxu0
      %841 = vmatprep.mubr.bf16.mxu0 0
      %842 = vmatmul.mubr.bf16.gmra.mxu0 %v746
      %v843 = vpop.f32.mrf.mxu0
      %v844 = vadd.f32 0.0, %v843
      %v845 = vpop.f32.mrf.mxu0
      %v846 = vpop.f32.mrf.mxu0
      %v847 = vadd.f32 0.0, %v846
      %v848 = vpop.f32.mrf.mxu0
      %849 = vmatprep.mubr.bf16.mxu0 0
      %850 = vmatmul.mubr.bf16.gmra.mxu0 %v747
      %v851 = vpop.f32.mrf.mxu0
      %v852 = vadd.f32 0.0, %v851
      %v853 = vpop.f32.mrf.mxu0
      %v854 = vpop.f32.mrf.mxu0
      %v855 = vadd.f32 0.0, %v854
      %v856 = vpop.f32.mrf.mxu0
      %857 = vmatprep.mubr.bf16.mxu0 0
      %858 = vmatmul.mubr.bf16.gmra.mxu0 %v748
      %v859 = vpop.f32.mrf.mxu0
      %v860 = vadd.f32 0.0, %v859
      %v861 = vpop.f32.mrf.mxu0
      %v862 = vpop.f32.mrf.mxu0
      %v863 = vadd.f32 0.0, %v862
      %v864 = vpop.f32.mrf.mxu0
      %865 = vdwg.mxu0
      %v866 = vadd.f32 %v695, %v836
      %v867 = vadd.f32 %v696, %v839
      %v868 = vadd.f32 %v697, %v844
      %v869 = vadd.f32 %v698, %v847
      %v870 = vadd.f32 %v699, %v852
      %v871 = vadd.f32 %v700, %v855
      %v872 = vadd.f32 %v701, %v860
      %v873 = vadd.f32 %v702, %v863
      %s874 = scalar_lea.vmem %s197, 160
      %v875 = vld [vmem:[%s874] sm:$0xf]
      %v876 = vld [vmem:[%s874 + $0x4] sm:$0xf]
      %v877 = vld [vmem:[%s874 + $0x8] sm:$0xf]
      %v878 = vld [vmem:[%s874 + $0xc] sm:$0xf]
      %v879 = vld [vmem:[%s874 + $0x10] sm:$0xf]
      %v880 = vld [vmem:[%s874 + $0x14] sm:$0xf]
      %v881 = vld [vmem:[%s874 + $0x18] sm:$0xf]
      %v882 = vld [vmem:[%s874 + $0x1c] sm:$0xf]
      %s883 = scalar_lea.vmem %s1, 256
      %v884 = vld [vmem:[%s883] sm:$0xf]
      %v885 = vld [vmem:[%s883 + $0x4] sm:$0xf]
      %v886 = vld [vmem:[%s883 + $0x8] sm:$0xf]
      %v887 = vld [vmem:[%s883 + $0xc] sm:$0xf]
      %v888 = vld [vmem:[%s883 + $0x10] sm:$0xf]
      %v889 = vld [vmem:[%s883 + $0x14] sm:$0xf]
      %v890 = vld [vmem:[%s883 + $0x18] sm:$0xf]
      %v891 = vld [vmem:[%s883 + $0x1c] sm:$0xf]
      %v892 = vld [vmem:[%s883 + $0x20] sm:$0xf]
      %v893 = vld [vmem:[%s883 + $0x24] sm:$0xf]
      %v894 = vld [vmem:[%s883 + $0x28] sm:$0xf]
      %v895 = vld [vmem:[%s883 + $0x2c] sm:$0xf]
      %v896 = vld [vmem:[%s883 + $0x30] sm:$0xf]
      %v897 = vld [vmem:[%s883 + $0x34] sm:$0xf]
      %v898 = vld [vmem:[%s883 + $0x38] sm:$0xf]
      %v899 = vld [vmem:[%s883 + $0x3c] sm:$0xf]
      %v908 = vunpack.c.l.b16 %v875
      %v909 = vunpack.c.l.b16 %v876
      %v910 = vunpack.c.l.b16 %v877
      %v911 = vunpack.c.l.b16 %v878
      %v912 = vunpack.c.l.b16 %v879
      %v913 = vunpack.c.l.b16 %v880
      %v914 = vunpack.c.l.b16 %v881
      %v915 = vunpack.c.l.b16 %v882
      %v916 = vpack.c.b16 %v909, %v908
      %v917 = vpack.c.b16 %v911, %v910
      %v918 = vpack.c.b16 %v913, %v912
      %v919 = vpack.c.b16 %v915, %v914
      %v940 = vunpack.c.l.b16 %v884
      %v941 = vunpack.c.l.b16 %v885
      %v942 = vunpack.c.l.b16 %v886
      %v943 = vunpack.c.l.b16 %v887
      %v944 = vunpack.c.l.b16 %v888
      %v945 = vunpack.c.l.b16 %v889
      %v946 = vunpack.c.l.b16 %v890
      %v947 = vunpack.c.l.b16 %v891
      %v948 = vunpack.c.l.b16 %v892
      %v949 = vunpack.c.l.b16 %v893
      %v950 = vunpack.c.l.b16 %v894
      %v951 = vunpack.c.l.b16 %v895
      %v952 = vunpack.c.l.b16 %v896
      %v953 = vunpack.c.l.b16 %v897
      %v954 = vunpack.c.l.b16 %v898
      %v955 = vunpack.c.l.b16 %v899
      %v956 = vpack.c.b16 %v941, %v940
      %v957 = vpack.c.b16 %v943, %v942
      %v958 = vpack.c.b16 %v945, %v944
      %v959 = vpack.c.b16 %v947, %v946
      %v960 = vpack.c.b16 %v949, %v948
      %v961 = vpack.c.b16 %v951, %v950
      %v962 = vpack.c.b16 %v953, %v952
      %v963 = vpack.c.b16 %v955, %v954
      %972 = vmatprep.subr.bf16.mxu0 0
      %973 = vmatpush1.bf16.msra.mxu0 %v963
      %974 = vmatprep.subr.bf16.mxu0 0
      %975 = vmatpush1.bf16.msra.mxu0 %v962
      %976 = vmatprep.subr.bf16.mxu0 0
      %977 = vmatpush1.bf16.msra.mxu0 %v961
      %978 = vmatprep.subr.bf16.mxu0 0
      %979 = vmatpush1.bf16.msra.mxu0 %v960
      %980 = vmatprep.subr.bf16.mxu0 0
      %981 = vmatpush1.bf16.msra.mxu0 %v959
      %982 = vmatprep.subr.bf16.mxu0 0
      %983 = vmatpush1.bf16.msra.mxu0 %v958
      %984 = vmatprep.subr.bf16.mxu0 0
      %985 = vmatpush1.bf16.msra.mxu0 %v957
      %986 = vmatprep.subr.bf16.mxu0 0
      %987 = vmatpush1.bf16.msra.mxu0 %v956
      %988 = vmatprep.subr.bf16.mxu0 0
      %989 = vmatpush2.bf16.msra.mxu0 0
      %990 = vmatprep.subr.bf16.mxu0 0
      %991 = vmatpush2.bf16.msra.mxu0 0
      %992 = vmatprep.subr.bf16.mxu0 0
      %993 = vmatpush2.bf16.msra.mxu0 0
      %994 = vmatprep.subr.bf16.mxu0 0
      %995 = vmatpush2.bf16.msra.mxu0 0
      %996 = vmatprep.subr.bf16.mxu0 0
      %997 = vmatpush2.bf16.msra.mxu0 0
      %998 = vmatprep.subr.bf16.mxu0 0
      %999 = vmatpush2.bf16.msra.mxu0 0
      %1000 = vmatprep.subr.bf16.mxu0 0
      %1001 = vmatpush2.bf16.msra.mxu0 0
      %1002 = vmatprep.subr.bf16.mxu0 0
      %1003 = vmatpush2.bf16.msra.mxu0 0
      %1004 = vmatprep.mubr.bf16.mxu0 0
      %1005 = vmatmul.mubr.bf16.gmra.mxu0 %v916
      %v1006 = vpop.f32.mrf.mxu0
      %v1007 = vadd.f32 0.0, %v1006
      %v1008 = vpop.f32.mrf.mxu0
      %v1009 = vpop.f32.mrf.mxu0
      %v1010 = vadd.f32 0.0, %v1009
      %v1011 = vpop.f32.mrf.mxu0
      %1012 = vmatprep.mubr.bf16.mxu0 0
      %1013 = vmatmul.mubr.bf16.gmra.mxu0 %v917
      %v1014 = vpop.f32.mrf.mxu0
      %v1015 = vadd.f32 0.0, %v1014
      %v1016 = vpop.f32.mrf.mxu0
      %v1017 = vpop.f32.mrf.mxu0
      %v1018 = vadd.f32 0.0, %v1017
      %v1019 = vpop.f32.mrf.mxu0
      %1020 = vmatprep.mubr.bf16.mxu0 0
      %1021 = vmatmul.mubr.bf16.gmra.mxu0 %v918
      %v1022 = vpop.f32.mrf.mxu0
      %v1023 = vadd.f32 0.0, %v1022
      %v1024 = vpop.f32.mrf.mxu0
      %v1025 = vpop.f32.mrf.mxu0
      %v1026 = vadd.f32 0.0, %v1025
      %v1027 = vpop.f32.mrf.mxu0
      %1028 = vmatprep.mubr.bf16.mxu0 0
      %1029 = vmatmul.mubr.bf16.gmra.mxu0 %v919
      %v1030 = vpop.f32.mrf.mxu0
      %v1031 = vadd.f32 0.0, %v1030
      %v1032 = vpop.f32.mrf.mxu0
      %v1033 = vpop.f32.mrf.mxu0
      %v1034 = vadd.f32 0.0, %v1033
      %v1035 = vpop.f32.mrf.mxu0
      %1036 = vdwg.mxu0
      %v1037 = vadd.f32 %v866, %v1007
      %v1038 = vadd.f32 %v867, %v1010
      %v1039 = vadd.f32 %v868, %v1015
      %v1040 = vadd.f32 %v869, %v1018
      %v1041 = vadd.f32 %v870, %v1023
      %v1042 = vadd.f32 %v871, %v1026
      %v1043 = vadd.f32 %v872, %v1031
      %v1044 = vadd.f32 %v873, %v1034
      %s1045 = scalar_lea.vmem %s197, 200
      %v1046 = vld [vmem:[%s1045] sm:$0xf]
      %v1047 = vld [vmem:[%s1045 + $0x4] sm:$0xf]
      %v1048 = vld [vmem:[%s1045 + $0x8] sm:$0xf]
      %v1049 = vld [vmem:[%s1045 + $0xc] sm:$0xf]
      %v1050 = vld [vmem:[%s1045 + $0x10] sm:$0xf]
      %v1051 = vld [vmem:[%s1045 + $0x14] sm:$0xf]
      %v1052 = vld [vmem:[%s1045 + $0x18] sm:$0xf]
      %v1053 = vld [vmem:[%s1045 + $0x1c] sm:$0xf]
      %s1054 = scalar_lea.vmem %s1, 320
      %v1055 = vld [vmem:[%s1054] sm:$0xf]
      %v1056 = vld [vmem:[%s1054 + $0x4] sm:$0xf]
      %v1057 = vld [vmem:[%s1054 + $0x8] sm:$0xf]
      %v1058 = vld [vmem:[%s1054 + $0xc] sm:$0xf]
      %v1059 = vld [vmem:[%s1054 + $0x10] sm:$0xf]
      %v1060 = vld [vmem:[%s1054 + $0x14] sm:$0xf]
      %v1061 = vld [vmem:[%s1054 + $0x18] sm:$0xf]
      %v1062 = vld [vmem:[%s1054 + $0x1c] sm:$0xf]
      %v1063 = vld [vmem:[%s1054 + $0x20] sm:$0xf]
      %v1064 = vld [vmem:[%s1054 + $0x24] sm:$0xf]
      %v1065 = vld [vmem:[%s1054 + $0x28] sm:$0xf]
      %v1066 = vld [vmem:[%s1054 + $0x2c] sm:$0xf]
      %v1067 = vld [vmem:[%s1054 + $0x30] sm:$0xf]
      %v1068 = vld [vmem:[%s1054 + $0x34] sm:$0xf]
      %v1069 = vld [vmem:[%s1054 + $0x38] sm:$0xf]
      %v1070 = vld [vmem:[%s1054 + $0x3c] sm:$0xf]
      %v1079 = vunpack.c.l.b16 %v1046
      %v1080 = vunpack.c.l.b16 %v1047
      %v1081 = vunpack.c.l.b16 %v1048
      %v1082 = vunpack.c.l.b16 %v1049
      %v1083 = vunpack.c.l.b16 %v1050
      %v1084 = vunpack.c.l.b16 %v1051
      %v1085 = vunpack.c.l.b16 %v1052
      %v1086 = vunpack.c.l.b16 %v1053
      %v1087 = vpack.c.b16 %v1080, %v1079
      %v1088 = vpack.c.b16 %v1082, %v1081
      %v1089 = vpack.c.b16 %v1084, %v1083
      %v1090 = vpack.c.b16 %v1086, %v1085
      %v1111 = vunpack.c.l.b16 %v1055
      %v1112 = vunpack.c.l.b16 %v1056
      %v1113 = vunpack.c.l.b16 %v1057
      %v1114 = vunpack.c.l.b16 %v1058
      %v1115 = vunpack.c.l.b16 %v1059
      %v1116 = vunpack.c.l.b16 %v1060
      %v1117 = vunpack.c.l.b16 %v1061
      %v1118 = vunpack.c.l.b16 %v1062
      %v1119 = vunpack.c.l.b16 %v1063
      %v1120 = vunpack.c.l.b16 %v1064
      %v1121 = vunpack.c.l.b16 %v1065
      %v1122 = vunpack.c.l.b16 %v1066
      %v1123 = vunpack.c.l.b16 %v1067
      %v1124 = vunpack.c.l.b16 %v1068
      %v1125 = vunpack.c.l.b16 %v1069
      %v1126 = vunpack.c.l.b16 %v1070
      %v1127 = vpack.c.b16 %v1112, %v1111
      %v1128 = vpack.c.b16 %v1114, %v1113
      %v1129 = vpack.c.b16 %v1116, %v1115
      %v1130 = vpack.c.b16 %v1118, %v1117
      %v1131 = vpack.c.b16 %v1120, %v1119
      %v1132 = vpack.c.b16 %v1122, %v1121
      %v1133 = vpack.c.b16 %v1124, %v1123
      %v1134 = vpack.c.b16 %v1126, %v1125
      %1143 = vmatprep.subr.bf16.mxu0 0
      %1144 = vmatpush1.bf16.msra.mxu0 %v1134
      %1145 = vmatprep.subr.bf16.mxu0 0
      %1146 = vmatpush1.bf16.msra.mxu0 %v1133
      %1147 = vmatprep.subr.bf16.mxu0 0
      %1148 = vmatpush1.bf16.msra.mxu0 %v1132
      %1149 = vmatprep.subr.bf16.mxu0 0
      %1150 = vmatpush1.bf16.msra.mxu0 %v1131
      %1151 = vmatprep.subr.bf16.mxu0 0
      %1152 = vmatpush1.bf16.msra.mxu0 %v1130
      %1153 = vmatprep.subr.bf16.mxu0 0
      %1154 = vmatpush1.bf16.msra.mxu0 %v1129
      %1155 = vmatprep.subr.bf16.mxu0 0
      %1156 = vmatpush1.bf16.msra.mxu0 %v1128
      %1157 = vmatprep.subr.bf16.mxu0 0
      %1158 = vmatpush1.bf16.msra.mxu0 %v1127
      %1159 = vmatprep.subr.bf16.mxu0 0
      %1160 = vmatpush2.bf16.msra.mxu0 0
      %1161 = vmatprep.subr.bf16.mxu0 0
      %1162 = vmatpush2.bf16.msra.mxu0 0
      %1163 = vmatprep.subr.bf16.mxu0 0
      %1164 = vmatpush2.bf16.msra.mxu0 0
      %1165 = vmatprep.subr.bf16.mxu0 0
      %1166 = vmatpush2.bf16.msra.mxu0 0
      %1167 = vmatprep.subr.bf16.mxu0 0
      %1168 = vmatpush2.bf16.msra.mxu0 0
      %1169 = vmatprep.subr.bf16.mxu0 0
      %1170 = vmatpush2.bf16.msra.mxu0 0
      %1171 = vmatprep.subr.bf16.mxu0 0
      %1172 = vmatpush2.bf16.msra.mxu0 0
      %1173 = vmatprep.subr.bf16.mxu0 0
      %1174 = vmatpush2.bf16.msra.mxu0 0
      %1175 = vmatprep.mubr.bf16.mxu0 0
      %1176 = vmatmul.mubr.bf16.gmra.mxu0 %v1087
      %v1177 = vpop.f32.mrf.mxu0
      %v1178 = vadd.f32 0.0, %v1177
      %v1179 = vpop.f32.mrf.mxu0
      %v1180 = vpop.f32.mrf.mxu0
      %v1181 = vadd.f32 0.0, %v1180
      %v1182 = vpop.f32.mrf.mxu0
      %1183 = vmatprep.mubr.bf16.mxu0 0
      %1184 = vmatmul.mubr.bf16.gmra.mxu0 %v1088
      %v1185 = vpop.f32.mrf.mxu0
      %v1186 = vadd.f32 0.0, %v1185
      %v1187 = vpop.f32.mrf.mxu0
      %v1188 = vpop.f32.mrf.mxu0
      %v1189 = vadd.f32 0.0, %v1188
      %v1190 = vpop.f32.mrf.mxu0
      %1191 = vmatprep.mubr.bf16.mxu0 0
      %1192 = vmatmul.mubr.bf16.gmra.mxu0 %v1089
      %v1193 = vpop.f32.mrf.mxu0
      %v1194 = vadd.f32 0.0, %v1193
      %v1195 = vpop.f32.mrf.mxu0
      %v1196 = vpop.f32.mrf.mxu0
      %v1197 = vadd.f32 0.0, %v1196
      %v1198 = vpop.f32.mrf.mxu0
      %1199 = vmatprep.mubr.bf16.mxu0 0
      %1200 = vmatmul.mubr.bf16.gmra.mxu0 %v1090
      %v1201 = vpop.f32.mrf.mxu0
      %v1202 = vadd.f32 0.0, %v1201
      %v1203 = vpop.f32.mrf.mxu0
      %v1204 = vpop.f32.mrf.mxu0
      %v1205 = vadd.f32 0.0, %v1204
      %v1206 = vpop.f32.mrf.mxu0
      %1207 = vdwg.mxu0
      %v1208 = vadd.f32 %v1037, %v1178
      %v1209 = vadd.f32 %v1038, %v1181
      %v1210 = vadd.f32 %v1039, %v1186
      %v1211 = vadd.f32 %v1040, %v1189
      %v1212 = vadd.f32 %v1041, %v1194
      %v1213 = vadd.f32 %v1042, %v1197
      %v1214 = vadd.f32 %v1043, %v1202
      %v1215 = vadd.f32 %v1044, %v1205
      %v1216 = vld [vmem:[%s197 + $0x8] sm:$0xf]
      %v1217 = vld [vmem:[%s197 + $0xc] sm:$0xf]
      %v1218 = vld [vmem:[%s197 + $0x10] sm:$0xf]
      %v1219 = vld [vmem:[%s197 + $0x14] sm:$0xf]
      %v1220 = vld [vmem:[%s197 + $0x18] sm:$0xf]
      %v1221 = vld [vmem:[%s197 + $0x1c] sm:$0xf]
      %v1222 = vld [vmem:[%s197 + $0x20] sm:$0xf]
      %v1223 = vld [vmem:[%s197 + $0x24] sm:$0xf]
      %s1224 = scalar_lea.vmem %s1, 384
      %v1225 = vld [vmem:[%s1224] sm:$0xf]
      %v1226 = vld [vmem:[%s1224 + $0x4] sm:$0xf]
      %v1227 = vld [vmem:[%s1224 + $0x8] sm:$0xf]
      %v1228 = vld [vmem:[%s1224 + $0xc] sm:$0xf]
      %v1229 = vld [vmem:[%s1224 + $0x10] sm:$0xf]
      %v1230 = vld [vmem:[%s1224 + $0x14] sm:$0xf]
      %v1231 = vld [vmem:[%s1224 + $0x18] sm:$0xf]
      %v1232 = vld [vmem:[%s1224 + $0x1c] sm:$0xf]
      %v1233 = vld [vmem:[%s1224 + $0x20] sm:$0xf]
      %v1234 = vld [vmem:[%s1224 + $0x24] sm:$0xf]
      %v1235 = vld [vmem:[%s1224 + $0x28] sm:$0xf]
      %v1236 = vld [vmem:[%s1224 + $0x2c] sm:$0xf]
      %v1237 = vld [vmem:[%s1224 + $0x30] sm:$0xf]
      %v1238 = vld [vmem:[%s1224 + $0x34] sm:$0xf]
      %v1239 = vld [vmem:[%s1224 + $0x38] sm:$0xf]
      %v1240 = vld [vmem:[%s1224 + $0x3c] sm:$0xf]
      %v1249 = vunpack.c.l.b16 %v1216
      %v1250 = vunpack.c.l.b16 %v1217
      %v1251 = vunpack.c.l.b16 %v1218
      %v1252 = vunpack.c.l.b16 %v1219
      %v1253 = vunpack.c.l.b16 %v1220
      %v1254 = vunpack.c.l.b16 %v1221
      %v1255 = vunpack.c.l.b16 %v1222
      %v1256 = vunpack.c.l.b16 %v1223
      %v1257 = vpack.c.b16 %v1250, %v1249
      %v1258 = vpack.c.b16 %v1252, %v1251
      %v1259 = vpack.c.b16 %v1254, %v1253
      %v1260 = vpack.c.b16 %v1256, %v1255
      %v1281 = vunpack.c.l.b16 %v1225
      %v1282 = vunpack.c.l.b16 %v1226
      %v1283 = vunpack.c.l.b16 %v1227
      %v1284 = vunpack.c.l.b16 %v1228
      %v1285 = vunpack.c.l.b16 %v1229
      %v1286 = vunpack.c.l.b16 %v1230
      %v1287 = vunpack.c.l.b16 %v1231
      %v1288 = vunpack.c.l.b16 %v1232
      %v1289 = vunpack.c.l.b16 %v1233
      %v1290 = vunpack.c.l.b16 %v1234
      %v1291 = vunpack.c.l.b16 %v1235
      %v1292 = vunpack.c.l.b16 %v1236
      %v1293 = vunpack.c.l.b16 %v1237
      %v1294 = vunpack.c.l.b16 %v1238
      %v1295 = vunpack.c.l.b16 %v1239
      %v1296 = vunpack.c.l.b16 %v1240
      %v1297 = vpack.c.b16 %v1282, %v1281
      %v1298 = vpack.c.b16 %v1284, %v1283
      %v1299 = vpack.c.b16 %v1286, %v1285
      %v1300 = vpack.c.b16 %v1288, %v1287
      %v1301 = vpack.c.b16 %v1290, %v1289
      %v1302 = vpack.c.b16 %v1292, %v1291
      %v1303 = vpack.c.b16 %v1294, %v1293
      %v1304 = vpack.c.b16 %v1296, %v1295
      %1313 = vmatprep.subr.bf16.mxu0 0
      %1314 = vmatpush1.bf16.msra.mxu0 %v1304
      %1315 = vmatprep.subr.bf16.mxu0 0
      %1316 = vmatpush1.bf16.msra.mxu0 %v1303
      %1317 = vmatprep.subr.bf16.mxu0 0
      %1318 = vmatpush1.bf16.msra.mxu0 %v1302
      %1319 = vmatprep.subr.bf16.mxu0 0
      %1320 = vmatpush1.bf16.msra.mxu0 %v1301
      %1321 = vmatprep.subr.bf16.mxu0 0
      %1322 = vmatpush1.bf16.msra.mxu0 %v1300
      %1323 = vmatprep.subr.bf16.mxu0 0
      %1324 = vmatpush1.bf16.msra.mxu0 %v1299
      %1325 = vmatprep.subr.bf16.mxu0 0
      %1326 = vmatpush1.bf16.msra.mxu0 %v1298
      %1327 = vmatprep.subr.bf16.mxu0 0
      %1328 = vmatpush1.bf16.msra.mxu0 %v1297
      %1329 = vmatprep.subr.bf16.mxu0 0
      %1330 = vmatpush2.bf16.msra.mxu0 0
      %1331 = vmatprep.subr.bf16.mxu0 0
      %1332 = vmatpush2.bf16.msra.mxu0 0
      %1333 = vmatprep.subr.bf16.mxu0 0
      %1334 = vmatpush2.bf16.msra.mxu0 0
      %1335 = vmatprep.subr.bf16.mxu0 0
      %1336 = vmatpush2.bf16.msra.mxu0 0
      %1337 = vmatprep.subr.bf16.mxu0 0
      %1338 = vmatpush2.bf16.msra.mxu0 0
      %1339 = vmatprep.subr.bf16.mxu0 0
      %1340 = vmatpush2.bf16.msra.mxu0 0
      %1341 = vmatprep.subr.bf16.mxu0 0
      %1342 = vmatpush2.bf16.msra.mxu0 0
      %1343 = vmatprep.subr.bf16.mxu0 0
      %1344 = vmatpush2.bf16.msra.mxu0 0
      %1345 = vmatprep.mubr.bf16.mxu0 0
      %1346 = vmatmul.mubr.bf16.gmra.mxu0 %v1257
      %v1347 = vpop.f32.mrf.mxu0
      %v1348 = vadd.f32 0.0, %v1347
      %v1349 = vpop.f32.mrf.mxu0
      %v1350 = vpop.f32.mrf.mxu0
      %v1351 = vadd.f32 0.0, %v1350
      %v1352 = vpop.f32.mrf.mxu0
      %1353 = vmatprep.mubr.bf16.mxu0 0
      %1354 = vmatmul.mubr.bf16.gmra.mxu0 %v1258
      %v1355 = vpop.f32.mrf.mxu0
      %v1356 = vadd.f32 0.0, %v1355
      %v1357 = vpop.f32.mrf.mxu0
      %v1358 = vpop.f32.mrf.mxu0
      %v1359 = vadd.f32 0.0, %v1358
      %v1360 = vpop.f32.mrf.mxu0
      %1361 = vmatprep.mubr.bf16.mxu0 0
      %1362 = vmatmul.mubr.bf16.gmra.mxu0 %v1259
      %v1363 = vpop.f32.mrf.mxu0
      %v1364 = vadd.f32 0.0, %v1363
      %v1365 = vpop.f32.mrf.mxu0
      %v1366 = vpop.f32.mrf.mxu0
      %v1367 = vadd.f32 0.0, %v1366
      %v1368 = vpop.f32.mrf.mxu0
      %1369 = vmatprep.mubr.bf16.mxu0 0
      %1370 = vmatmul.mubr.bf16.gmra.mxu0 %v1260
      %v1371 = vpop.f32.mrf.mxu0
      %v1372 = vadd.f32 0.0, %v1371
      %v1373 = vpop.f32.mrf.mxu0
      %v1374 = vpop.f32.mrf.mxu0
      %v1375 = vadd.f32 0.0, %v1374
      %v1376 = vpop.f32.mrf.mxu0
      %1377 = vdwg.mxu0
      %v1378 = vadd.f32 %v1208, %v1348
      %v1379 = vadd.f32 %v1209, %v1351
      %v1380 = vadd.f32 %v1210, %v1356
      %v1381 = vadd.f32 %v1211, %v1359
      %v1382 = vadd.f32 %v1212, %v1364
      %v1383 = vadd.f32 %v1213, %v1367
      %v1384 = vadd.f32 %v1214, %v1372
      %v1385 = vadd.f32 %v1215, %v1375
      %v1386 = vld [vmem:[%s232 + $0x8] sm:$0xf]
      %v1387 = vld [vmem:[%s232 + $0xc] sm:$0xf]
      %v1388 = vld [vmem:[%s232 + $0x10] sm:$0xf]
      %v1389 = vld [vmem:[%s232 + $0x14] sm:$0xf]
      %v1390 = vld [vmem:[%s232 + $0x18] sm:$0xf]
      %v1391 = vld [vmem:[%s232 + $0x1c] sm:$0xf]
      %v1392 = vld [vmem:[%s232 + $0x20] sm:$0xf]
      %v1393 = vld [vmem:[%s232 + $0x24] sm:$0xf]
      %s1394 = scalar_lea.vmem %s1, 448
      %v1395 = vld [vmem:[%s1394] sm:$0xf]
      %v1396 = vld [vmem:[%s1394 + $0x4] sm:$0xf]
      %v1397 = vld [vmem:[%s1394 + $0x8] sm:$0xf]
      %v1398 = vld [vmem:[%s1394 + $0xc] sm:$0xf]
      %v1399 = vld [vmem:[%s1394 + $0x10] sm:$0xf]
      %v1400 = vld [vmem:[%s1394 + $0x14] sm:$0xf]
      %v1401 = vld [vmem:[%s1394 + $0x18] sm:$0xf]
      %v1402 = vld [vmem:[%s1394 + $0x1c] sm:$0xf]
      %v1403 = vld [vmem:[%s1394 + $0x20] sm:$0xf]
      %v1404 = vld [vmem:[%s1394 + $0x24] sm:$0xf]
      %v1405 = vld [vmem:[%s1394 + $0x28] sm:$0xf]
      %v1406 = vld [vmem:[%s1394 + $0x2c] sm:$0xf]
      %v1407 = vld [vmem:[%s1394 + $0x30] sm:$0xf]
      %v1408 = vld [vmem:[%s1394 + $0x34] sm:$0xf]
      %v1409 = vld [vmem:[%s1394 + $0x38] sm:$0xf]
      %v1410 = vld [vmem:[%s1394 + $0x3c] sm:$0xf]
      %v1419 = vunpack.c.l.b16 %v1386
      %v1420 = vunpack.c.l.b16 %v1387
      %v1421 = vunpack.c.l.b16 %v1388
      %v1422 = vunpack.c.l.b16 %v1389
      %v1423 = vunpack.c.l.b16 %v1390
      %v1424 = vunpack.c.l.b16 %v1391
      %v1425 = vunpack.c.l.b16 %v1392
      %v1426 = vunpack.c.l.b16 %v1393
      %v1427 = vpack.c.b16 %v1420, %v1419
      %v1428 = vpack.c.b16 %v1422, %v1421
      %v1429 = vpack.c.b16 %v1424, %v1423
      %v1430 = vpack.c.b16 %v1426, %v1425
      %v1451 = vunpack.c.l.b16 %v1395
      %v1452 = vunpack.c.l.b16 %v1396
      %v1453 = vunpack.c.l.b16 %v1397
      %v1454 = vunpack.c.l.b16 %v1398
      %v1455 = vunpack.c.l.b16 %v1399
      %v1456 = vunpack.c.l.b16 %v1400
      %v1457 = vunpack.c.l.b16 %v1401
      %v1458 = vunpack.c.l.b16 %v1402
      %v1459 = vunpack.c.l.b16 %v1403
      %v1460 = vunpack.c.l.b16 %v1404
      %v1461 = vunpack.c.l.b16 %v1405
      %v1462 = vunpack.c.l.b16 %v1406
      %v1463 = vunpack.c.l.b16 %v1407
      %v1464 = vunpack.c.l.b16 %v1408
      %v1465 = vunpack.c.l.b16 %v1409
      %v1466 = vunpack.c.l.b16 %v1410
      %v1467 = vpack.c.b16 %v1452, %v1451
      %v1468 = vpack.c.b16 %v1454, %v1453
      %v1469 = vpack.c.b16 %v1456, %v1455
      %v1470 = vpack.c.b16 %v1458, %v1457
      %v1471 = vpack.c.b16 %v1460, %v1459
      %v1472 = vpack.c.b16 %v1462, %v1461
      %v1473 = vpack.c.b16 %v1464, %v1463
      %v1474 = vpack.c.b16 %v1466, %v1465
      %1483 = vmatprep.subr.bf16.mxu0 0
      %1484 = vmatpush1.bf16.msra.mxu0 %v1474
      %1485 = vmatprep.subr.bf16.mxu0 0
      %1486 = vmatpush1.bf16.msra.mxu0 %v1473
      %1487 = vmatprep.subr.bf16.mxu0 0
      %1488 = vmatpush1.bf16.msra.mxu0 %v1472
      %1489 = vmatprep.subr.bf16.mxu0 0
      %1490 = vmatpush1.bf16.msra.mxu0 %v1471
      %1491 = vmatprep.subr.bf16.mxu0 0
      %1492 = vmatpush1.bf16.msra.mxu0 %v1470
      %1493 = vmatprep.subr.bf16.mxu0 0
      %1494 = vmatpush1.bf16.msra.mxu0 %v1469
      %1495 = vmatprep.subr.bf16.mxu0 0
      %1496 = vmatpush1.bf16.msra.mxu0 %v1468
      %1497 = vmatprep.subr.bf16.mxu0 0
      %1498 = vmatpush1.bf16.msra.mxu0 %v1467
      %1499 = vmatprep.subr.bf16.mxu0 0
      %1500 = vmatpush2.bf16.msra.mxu0 0
      %1501 = vmatprep.subr.bf16.mxu0 0
      %1502 = vmatpush2.bf16.msra.mxu0 0
      %1503 = vmatprep.subr.bf16.mxu0 0
      %1504 = vmatpush2.bf16.msra.mxu0 0
      %1505 = vmatprep.subr.bf16.mxu0 0
      %1506 = vmatpush2.bf16.msra.mxu0 0
      %1507 = vmatprep.subr.bf16.mxu0 0
      %1508 = vmatpush2.bf16.msra.mxu0 0
      %1509 = vmatprep.subr.bf16.mxu0 0
      %1510 = vmatpush2.bf16.msra.mxu0 0
      %1511 = vmatprep.subr.bf16.mxu0 0
      %1512 = vmatpush2.bf16.msra.mxu0 0
      %1513 = vmatprep.subr.bf16.mxu0 0
      %1514 = vmatpush2.bf16.msra.mxu0 0
      %1515 = vmatprep.mubr.bf16.mxu0 0
      %1516 = vmatmul.mubr.bf16.gmra.mxu0 %v1427
      %v1517 = vpop.f32.mrf.mxu0
      %v1518 = vadd.f32 0.0, %v1517
      %v1519 = vpop.f32.mrf.mxu0
      %v1520 = vpop.f32.mrf.mxu0
      %v1521 = vadd.f32 0.0, %v1520
      %v1522 = vpop.f32.mrf.mxu0
      %1523 = vmatprep.mubr.bf16.mxu0 0
      %1524 = vmatmul.mubr.bf16.gmra.mxu0 %v1428
      %v1525 = vpop.f32.mrf.mxu0
      %v1526 = vadd.f32 0.0, %v1525
      %v1527 = vpop.f32.mrf.mxu0
      %v1528 = vpop.f32.mrf.mxu0
      %v1529 = vadd.f32 0.0, %v1528
      %v1530 = vpop.f32.mrf.mxu0
      %1531 = vmatprep.mubr.bf16.mxu0 0
      %1532 = vmatmul.mubr.bf16.gmra.mxu0 %v1429
      %v1533 = vpop.f32.mrf.mxu0
      %v1534 = vadd.f32 0.0, %v1533
      %v1535 = vpop.f32.mrf.mxu0
      %v1536 = vpop.f32.mrf.mxu0
      %v1537 = vadd.f32 0.0, %v1536
      %v1538 = vpop.f32.mrf.mxu0
      %1539 = vmatprep.mubr.bf16.mxu0 0
      %1540 = vmatmul.mubr.bf16.gmra.mxu0 %v1430
      %v1541 = vpop.f32.mrf.mxu0
      %v1542 = vadd.f32 0.0, %v1541
      %v1543 = vpop.f32.mrf.mxu0
      %v1544 = vpop.f32.mrf.mxu0
      %v1545 = vadd.f32 0.0, %v1544
      %v1546 = vpop.f32.mrf.mxu0
      %1547 = vdwg.mxu0
      %v1548 = vadd.f32 %v1378, %v1518
      %v1549 = vadd.f32 %v1379, %v1521
      %v1550 = vadd.f32 %v1380, %v1526
      %v1551 = vadd.f32 %v1381, %v1529
      %v1552 = vadd.f32 %v1382, %v1534
      %v1553 = vadd.f32 %v1383, %v1537
      %v1554 = vadd.f32 %v1384, %v1542
      %v1555 = vadd.f32 %v1385, %v1545
      %v1556 = vld [vmem:[%s532 + $0x8] sm:$0xf]
      %v1557 = vld [vmem:[%s532 + $0xc] sm:$0xf]
      %v1558 = vld [vmem:[%s532 + $0x10] sm:$0xf]
      %v1559 = vld [vmem:[%s532 + $0x14] sm:$0xf]
      %v1560 = vld [vmem:[%s532 + $0x18] sm:$0xf]
      %v1561 = vld [vmem:[%s532 + $0x1c] sm:$0xf]
      %v1562 = vld [vmem:[%s532 + $0x20] sm:$0xf]
      %v1563 = vld [vmem:[%s532 + $0x24] sm:$0xf]
      %s1564 = scalar_lea.vmem %s1, 512
      %v1565 = vld [vmem:[%s1564] sm:$0xf]
      %v1566 = vld [vmem:[%s1564 + $0x4] sm:$0xf]
      %v1567 = vld [vmem:[%s1564 + $0x8] sm:$0xf]
      %v1568 = vld [vmem:[%s1564 + $0xc] sm:$0xf]
      %v1569 = vld [vmem:[%s1564 + $0x10] sm:$0xf]
      %v1570 = vld [vmem:[%s1564 + $0x14] sm:$0xf]
      %v1571 = vld [vmem:[%s1564 + $0x18] sm:$0xf]
      %v1572 = vld [vmem:[%s1564 + $0x1c] sm:$0xf]
      %v1573 = vld [vmem:[%s1564 + $0x20] sm:$0xf]
      %v1574 = vld [vmem:[%s1564 + $0x24] sm:$0xf]
      %v1575 = vld [vmem:[%s1564 + $0x28] sm:$0xf]
      %v1576 = vld [vmem:[%s1564 + $0x2c] sm:$0xf]
      %v1577 = vld [vmem:[%s1564 + $0x30] sm:$0xf]
      %v1578 = vld [vmem:[%s1564 + $0x34] sm:$0xf]
      %v1579 = vld [vmem:[%s1564 + $0x38] sm:$0xf]
      %v1580 = vld [vmem:[%s1564 + $0x3c] sm:$0xf]
      %v1589 = vunpack.c.l.b16 %v1556
      %v1590 = vunpack.c.l.b16 %v1557
      %v1591 = vunpack.c.l.b16 %v1558
      %v1592 = vunpack.c.l.b16 %v1559
      %v1593 = vunpack.c.l.b16 %v1560
      %v1594 = vunpack.c.l.b16 %v1561
      %v1595 = vunpack.c.l.b16 %v1562
      %v1596 = vunpack.c.l.b16 %v1563
      %v1597 = vpack.c.b16 %v1590, %v1589
      %v1598 = vpack.c.b16 %v1592, %v1591
      %v1599 = vpack.c.b16 %v1594, %v1593
      %v1600 = vpack.c.b16 %v1596, %v1595
      %v1621 = vunpack.c.l.b16 %v1565
      %v1622 = vunpack.c.l.b16 %v1566
      %v1623 = vunpack.c.l.b16 %v1567
      %v1624 = vunpack.c.l.b16 %v1568
      %v1625 = vunpack.c.l.b16 %v1569
      %v1626 = vunpack.c.l.b16 %v1570
      %v1627 = vunpack.c.l.b16 %v1571
      %v1628 = vunpack.c.l.b16 %v1572
      %v1629 = vunpack.c.l.b16 %v1573
      %v1630 = vunpack.c.l.b16 %v1574
      %v1631 = vunpack.c.l.b16 %v1575
      %v1632 = vunpack.c.l.b16 %v1576
      %v1633 = vunpack.c.l.b16 %v1577
      %v1634 = vunpack.c.l.b16 %v1578
      %v1635 = vunpack.c.l.b16 %v1579
      %v1636 = vunpack.c.l.b16 %v1580
      %v1637 = vpack.c.b16 %v1622, %v1621
      %v1638 = vpack.c.b16 %v1624, %v1623
      %v1639 = vpack.c.b16 %v1626, %v1625
      %v1640 = vpack.c.b16 %v1628, %v1627
      %v1641 = vpack.c.b16 %v1630, %v1629
      %v1642 = vpack.c.b16 %v1632, %v1631
      %v1643 = vpack.c.b16 %v1634, %v1633
      %v1644 = vpack.c.b16 %v1636, %v1635
      %1653 = vmatprep.subr.bf16.mxu0 0
      %1654 = vmatpush1.bf16.msra.mxu0 %v1644
      %1655 = vmatprep.subr.bf16.mxu0 0
      %1656 = vmatpush1.bf16.msra.mxu0 %v1643
      %1657 = vmatprep.subr.bf16.mxu0 0
      %1658 = vmatpush1.bf16.msra.mxu0 %v1642
      %1659 = vmatprep.subr.bf16.mxu0 0
      %1660 = vmatpush1.bf16.msra.mxu0 %v1641
      %1661 = vmatprep.subr.bf16.mxu0 0
      %1662 = vmatpush1.bf16.msra.mxu0 %v1640
      %1663 = vmatprep.subr.bf16.mxu0 0
      %1664 = vmatpush1.bf16.msra.mxu0 %v1639
      %1665 = vmatprep.subr.bf16.mxu0 0
      %1666 = vmatpush1.bf16.msra.mxu0 %v1638
      %1667 = vmatprep.subr.bf16.mxu0 0
      %1668 = vmatpush1.bf16.msra.mxu0 %v1637
      %1669 = vmatprep.subr.bf16.mxu0 0
      %1670 = vmatpush2.bf16.msra.mxu0 0
      %1671 = vmatprep.subr.bf16.mxu0 0
      %1672 = vmatpush2.bf16.msra.mxu0 0
      %1673 = vmatprep.subr.bf16.mxu0 0
      %1674 = vmatpush2.bf16.msra.mxu0 0
      %1675 = vmatprep.subr.bf16.mxu0 0
      %1676 = vmatpush2.bf16.msra.mxu0 0
      %1677 = vmatprep.subr.bf16.mxu0 0
      %1678 = vmatpush2.bf16.msra.mxu0 0
      %1679 = vmatprep.subr.bf16.mxu0 0
      %1680 = vmatpush2.bf16.msra.mxu0 0
      %1681 = vmatprep.subr.bf16.mxu0 0
      %1682 = vmatpush2.bf16.msra.mxu0 0
      %1683 = vmatprep.subr.bf16.mxu0 0
      %1684 = vmatpush2.bf16.msra.mxu0 0
      %1685 = vmatprep.mubr.bf16.mxu0 0
      %1686 = vmatmul.mubr.bf16.gmra.mxu0 %v1597
      %v1687 = vpop.f32.mrf.mxu0
      %v1688 = vadd.f32 0.0, %v1687
      %v1689 = vpop.f32.mrf.mxu0
      %v1690 = vpop.f32.mrf.mxu0
      %v1691 = vadd.f32 0.0, %v1690
      %v1692 = vpop.f32.mrf.mxu0
      %1693 = vmatprep.mubr.bf16.mxu0 0
      %1694 = vmatmul.mubr.bf16.gmra.mxu0 %v1598
      %v1695 = vpop.f32.mrf.mxu0
      %v1696 = vadd.f32 0.0, %v1695
      %v1697 = vpop.f32.mrf.mxu0
      %v1698 = vpop.f32.mrf.mxu0
      %v1699 = vadd.f32 0.0, %v1698
      %v1700 = vpop.f32.mrf.mxu0
      %1701 = vmatprep.mubr.bf16.mxu0 0
      %1702 = vmatmul.mubr.bf16.gmra.mxu0 %v1599
      %v1703 = vpop.f32.mrf.mxu0
      %v1704 = vadd.f32 0.0, %v1703
      %v1705 = vpop.f32.mrf.mxu0
      %v1706 = vpop.f32.mrf.mxu0
      %v1707 = vadd.f32 0.0, %v1706
      %v1708 = vpop.f32.mrf.mxu0
      %1709 = vmatprep.mubr.bf16.mxu0 0
      %1710 = vmatmul.mubr.bf16.gmra.mxu0 %v1600
      %v1711 = vpop.f32.mrf.mxu0
      %v1712 = vadd.f32 0.0, %v1711
      %v1713 = vpop.f32.mrf.mxu0
      %v1714 = vpop.f32.mrf.mxu0
      %v1715 = vadd.f32 0.0, %v1714
      %v1716 = vpop.f32.mrf.mxu0
      %1717 = vdwg.mxu0
      %v1718 = vadd.f32 %v1548, %v1688
      %v1719 = vadd.f32 %v1549, %v1691
      %v1720 = vadd.f32 %v1550, %v1696
      %v1721 = vadd.f32 %v1551, %v1699
      %v1722 = vadd.f32 %v1552, %v1704
      %v1723 = vadd.f32 %v1553, %v1707
      %v1724 = vadd.f32 %v1554, %v1712
      %v1725 = vadd.f32 %v1555, %v1715
      %v1726 = vld [vmem:[%s2] sm:$0x1]
      %v1728 = vlaneseq
      %v1729 = vshrl.u32 %v1728, 7
      %v1730 = vsub.s32 0, %v1729
      %v1731 = vrot.slane %v1726, %v1730
      %v1733 = vadd.f32 %v1718, %v1731
      %v1734 = vadd.f32 %v1719, %v1731
      %v1735 = vadd.f32 %v1720, %v1731
      %v1736 = vadd.f32 %v1721, %v1731
      %v1737 = vadd.f32 %v1722, %v1731
      %v1738 = vadd.f32 %v1723, %v1731
      %v1739 = vadd.f32 %v1724, %v1731
      %v1740 = vadd.f32 %v1725, %v1731
      %v1741 = vmax.f32 %v1733, 0.0
      %v1742 = vmax.f32 %v1734, 0.0
      %v1743 = vmax.f32 %v1735, 0.0
      %v1744 = vmax.f32 %v1736, 0.0
      %v1745 = vmax.f32 %v1737, 0.0
      %v1746 = vmax.f32 %v1738, 0.0
      %v1747 = vmax.f32 %v1739, 0.0
      %v1748 = vmax.f32 %v1740, 0.0
      %v1749 = vpack.c.bf16 %v1742, %v1741
      %v1750 = vpack.c.bf16 %v1744, %v1743
      %v1751 = vpack.c.bf16 %v1746, %v1745
      %v1752 = vpack.c.bf16 %v1748, %v1747
      %v1757 = vunpack.c.l.b16 %v1749
      %v1758 = vunpack.c.h.b16 %v1749
      %v1759 = vunpack.c.l.b16 %v1750
      %v1760 = vunpack.c.h.b16 %v1750
      %v1761 = vunpack.c.l.b16 %v1751
      %v1762 = vunpack.c.h.b16 %v1751
      %v1763 = vunpack.c.l.b16 %v1752
      %v1764 = vunpack.c.h.b16 %v1752
      %v1765 = vpack.c.b16 %v1757, %v1757
      %v1766 = vpack.c.b16 %v1758, %v1758
      %v1767 = vpack.c.b16 %v1759, %v1759
      %v1768 = vpack.c.b16 %v1760, %v1760
      %v1769 = vpack.c.b16 %v1761, %v1761
      %v1770 = vpack.c.b16 %v1762, %v1762
      %v1771 = vpack.c.b16 %v1763, %v1763
      %v1772 = vpack.c.b16 %v1764, %v1764
      %1781 = vst [vmem:[%s206] sm:$0xf] %v1765
      %1782 = vst [vmem:[%s206 + $0x4] sm:$0xf] %v1766
      %1783 = vst [vmem:[%s206 + $0x8] sm:$0xf] %v1767
      %1784 = vst [vmem:[%s206 + $0xc] sm:$0xf] %v1768
      %1785 = vst [vmem:[%s206 + $0x10] sm:$0xf] %v1769
      %1786 = vst [vmem:[%s206 + $0x14] sm:$0xf] %v1770
      %1787 = vst [vmem:[%s206 + $0x18] sm:$0xf] %v1771
      %1788 = vst [vmem:[%s206 + $0x1c] sm:$0xf] %v1772
      %p1789 = scmp.lt.s32.totalorder %s18, 1
      %s1790 = scalar_select %p1789, %s18, 1
      %p1791 = scmp.lt.s32.totalorder %s19, 0
      %s1792 = scalar_select %p1791, %s19, 0
      %s1793 = smul.addr %s1792, 8
      %s1794 = smul.addr %s1790, 8
      %s1795 = sadd.s32 %s1793, %s1794
      %s1796 = smul.addr %s1795, 4
      %s1797 = scalar_lea.vmem %s3, %s1796
      // Predicated region
      $region33: #{geo_localization_forward.5} parent=31 // pred_check
        %p1798 = pneg %p116
      $region34: #{geo_localization_forward.5} parent=31 // pred_check_branch
        %1800 = sbr.rel (%p1798) target = $region36
      $region35: #{geo_localization_forward.5} parent=31 // pred_region
        _
      $region36: #{geo_localization_forward.5} parent=31 // pred_fallthru
        _
    $region32: #{geo_localization_forward.5} parent=5 // pred_fallthru
      _
    %p1801 = scmp.le.s32.totalorder 2, %s9
    // Predicated region
    $region37: #{geo_localization_forward.5} parent=5 // pred_check
      %p1802 = pneg %p1801
    $region38: #{geo_localization_forward.5} parent=5 // pred_check_branch
      %1804 = sbr.rel (%p1802) target = $region40
    $region39: #{geo_localization_forward.5} parent=5 // pred_region
      %s1805 = ssub.s32 %s9, 2
      // Predicated region
      $region41: #{geo_localization_forward.5} parent=39 // pred_check
        %p1806 = pneg %p122
      $region42: #{geo_localization_forward.5} parent=39 // pred_check_branch
        %1808 = sbr.rel (%p1806) target = $region44
      $region43: #{geo_localization_forward.5} parent=39 // pred_region
        %p1809 = scmp.lt.s32.totalorder %s20, 1
        %s1810 = scalar_select %p1809, %s20, 1
        %p1811 = scmp.lt.s32.totalorder %s21, 0
        %s1812 = scalar_select %p1811, %s21, 0
        %s1813 = smul.addr %s1812, 8
        %s1814 = smul.addr %s1810, 8
        %s1815 = sadd.s32 %s1813, %s1814
        %s1816 = smul.addr %s1815, 4
        %s1817 = scalar_lea.vmem %s3, %s1816
      $region44: #{geo_localization_forward.5} parent=39 // pred_fallthru
        _
    $region40: #{geo_localization_forward.5} parent=5 // pred_fallthru
      _
  $region6: #{geo_localization_forward.5} parent=0 // loop_footer
    %s13 = sadd.s32 1, %s9
  $region7: #{geo_localization_forward.5} parent=0 // loop_footer_branch
    %8 = sbr.rel target = $region3
  $region8: #{geo_localization_forward.5} parent=0 // loop_exit
    _

// kernel: geo_localization_forward.6
$region0: #{geo_localization_forward.6}
  #allocation0 [shape = 'u32[]', space=smem, size = 0x4, offset = 0x4, fixed_abs, tag = 'smem constant byte address 0x4 - core index']
  #allocation1 [shape = 'u32[144,128]{1,0:T(1,128)}', space=vmem, size = 0x12000, scoped, tag = 'internal scratch']
  %s0 = inlined_call_operand.vmem [shape: bf16[2,1,6,48,128], index: 0, kind: input, shape index: {}]
  %s1 = inlined_call_operand.vmem [shape: bf16[9,128,128], index: 1, kind: input, shape index: {}]
  %s2 = inlined_call_operand.vmem [shape: f32[1,128], index: 2, kind: input, shape index: {}]
  %s3 = inlined_call_operand.vmem [shape: bf16[2,1,32,128], index: 3, kind: output, shape index: {}]
  %s4 = sld [smem:[#allocation0]]
  $region45: #{geo_localization_forward.6} parent=0
    _
  %s6 = ssub.s32 1, %s4
  %s7 = scalar_select 0, %s6, %s4
  loop: start=0, step=1, limit=4
  $region2: #{geo_localization_forward.6} parent=0 // loop_pre_header
    _
  $region3: #{geo_localization_forward.6} parent=0 // loop_header
    %s9 = sphi 0, %s13
    %p10 = scmp.ge.s32.totalorder %s9, 4
    %s16 = sphi 0, %s28
    %s17 = sphi 0, %s24
    %s18 = sphi 0, %s16
    %s19 = sphi 0, %s17
    %s20 = sphi 0, %s18
    %s21 = sphi 0, %s19
    %s33 = sphi 0, %s35
    %s36 = sphi 0, %s33
    %s37 = sphi 0, %s36
    %s53 = sphi 0, %s37
    %s57 = sphi 0, %s57
    %s59 = sphi 0, %s57
    %s60 = sphi 0, %s59
    %s74 = sphi 0, %s60
    %s78 = sphi 0, %s78
    %s80 = sphi 0, %s78
    %s81 = sphi 0, %s80
    %s95 = sphi 0, %s81
    %s103 = sphi 0, %s105
    %s106 = sphi 0, %s103
    %s107 = sphi 0, %s106
    %s123 = sphi 0, %s107
  $region4: #{geo_localization_forward.6} parent=0 // loop_header_branch
    %12 = sbr.rel (%p10) target = $region8
  $region5: #{geo_localization_forward.6} parent=0 // loop_body
    %s14 = ssub.s32 %s9, 1
    %s15 = ssub.s32 %s9, 2
    %s22 = sadd.s32 1, %s17
    %p23 = scmp.ge.s32.totalorder %s22, 1
    %s24 = scalar_select %p23, 0, %s22
    %s25 = sadd.s32 1, %s16
    %s26 = scalar_select %p23, %s25, %s16
    %p27 = scmp.ge.s32.totalorder %s26, 2
    %s28 = scalar_select %p27, 0, %s26
    %s29 = ssub.s32 %s16, %s28
    %s30 = ssub.s32 %s17, %s24
    %s31 = sor.u32 %s29, %s30
    %p32 = scmp.eq.s32.totalorder %s31, 0
    %s34 = sadd.s32 %s33, 1
    %s35 = scalar_select %p32, %s33, %s34
    %p38 = pneg %p32
    %p39 = scmp.eq.s32.totalorder %s9, 1
    %p40 = por %p38, %p39
    %p41 = scmp.ne.s32.totalorder %s33, %s36
    %p42 = scmp.eq.s32.totalorder %s9, 0
    %p43 = por %p41, %p42
    %p44 = scmp.ne.s32.totalorder %s33, %s36
    %p45 = scmp.eq.s32.totalorder %s14, 1
    %p46 = por %p44, %p45
    %p47 = scmp.ne.s32.totalorder %s36, %s37
    %p48 = scmp.eq.s32.totalorder %s14, 0
    %p49 = por %p47, %p48
    %p50 = scmp.ne.s32.totalorder %s36, %s37
    %p51 = scmp.eq.s32.totalorder %s15, 1
    %p52 = por %p50, %p51
    %p54 = scmp.ne.s32.totalorder %s37, %s53
    %p55 = scmp.eq.s32.totalorder %s15, 0
    %p56 = por %p54, %p55
    %s58 = sadd.s32 %s57, 1
    %p61 = scmp.eq.s32.totalorder %s9, 1
    %p62 = scmp.ne.s32.totalorder %s57, %s59
    %p63 = scmp.eq.s32.totalorder %s9, 0
    %p64 = por %p62, %p63
    %p65 = scmp.ne.s32.totalorder %s57, %s59
    %p66 = scmp.eq.s32.totalorder %s14, 1
    %p67 = por %p65, %p66
    %p68 = scmp.ne.s32.totalorder %s59, %s60
    %p69 = scmp.eq.s32.totalorder %s14, 0
    %p70 = por %p68, %p69
    %p71 = scmp.ne.s32.totalorder %s59, %s60
    %p72 = scmp.eq.s32.totalorder %s15, 1
    %p73 = por %p71, %p72
    %p75 = scmp.ne.s32.totalorder %s60, %s74
    %p76 = scmp.eq.s32.totalorder %s15, 0
    %p77 = por %p75, %p76
    %s79 = sadd.s32 %s78, 1
    %p82 = scmp.eq.s32.totalorder %s9, 1
    %p83 = scmp.ne.s32.totalorder %s78, %s80
    %p84 = scmp.eq.s32.totalorder %s9, 0
    %p85 = por %p83, %p84
    %p86 = scmp.ne.s32.totalorder %s78, %s80
    %p87 = scmp.eq.s32.totalorder %s14, 1
    %p88 = por %p86, %p87
    %p89 = scmp.ne.s32.totalorder %s80, %s81
    %p90 = scmp.eq.s32.totalorder %s14, 0
    %p91 = por %p89, %p90
    %p92 = scmp.ne.s32.totalorder %s80, %s81
    %p93 = scmp.eq.s32.totalorder %s15, 1
    %p94 = por %p92, %p93
    %p96 = scmp.ne.s32.totalorder %s81, %s95
    %p97 = scmp.eq.s32.totalorder %s15, 0
    %p98 = por %p96, %p97
    %s99 = ssub.s32 %s16, %s28
    %s100 = ssub.s32 %s17, %s24
    %s101 = sor.u32 %s99, %s100
    %p102 = scmp.eq.s32.totalorder %s101, 0
    %s104 = sadd.s32 %s103, 1
    %s105 = scalar_select %p102, %s103, %s104
    %p108 = pneg %p102
    %p109 = scmp.eq.s32.totalorder %s9, 1
    %p110 = por %p108, %p109
    %p111 = scmp.ne.s32.totalorder %s103, %s106
    %p112 = scmp.eq.s32.totalorder %s9, 0
    %p113 = por %p111, %p112
    %p114 = scmp.ne.s32.totalorder %s103, %s106
    %p115 = scmp.eq.s32.totalorder %s14, 1
    %p116 = por %p114, %p115
    %p117 = scmp.ne.s32.totalorder %s106, %s107
    %p118 = scmp.eq.s32.totalorder %s14, 0
    %p119 = por %p117, %p118
    %p120 = scmp.ne.s32.totalorder %s106, %s107
    %p121 = scmp.eq.s32.totalorder %s15, 1
    %p122 = por %p120, %p121
    %p124 = scmp.ne.s32.totalorder %s107, %s123
    %p125 = scmp.eq.s32.totalorder %s15, 0
    %p126 = por %p124, %p125
    %p127 = scmp.le.s32.totalorder 1, %s9
    %p128 = scmp.lt.s32.totalorder %s9, 3
    %p129 = pnand %p127, %p128
    %p130 = pneg %p129
    // Predicated region
    $region9: #{geo_localization_forward.6} parent=5 // pred_check
      _
    $region10: #{geo_localization_forward.6} parent=5 // pred_check_branch
      %132 = sbr.rel (%p129) target = $region12
    $region11: #{geo_localization_forward.6} parent=5 // pred_region
      %s133 = ssub.s32 %s9, 1
      // Predicated region
      $region13: #{geo_localization_forward.6} parent=11 // pred_check
        %p134 = pneg %p70
      $region14: #{geo_localization_forward.6} parent=11 // pred_check_branch
        %136 = sbr.rel (%p134) target = $region16
      $region15: #{geo_localization_forward.6} parent=11 // pred_region
        _
      $region16: #{geo_localization_forward.6} parent=11 // pred_fallthru
        _
      // Predicated region
      $region17: #{geo_localization_forward.6} parent=11 // pred_check
        %p137 = pneg %p91
      $region18: #{geo_localization_forward.6} parent=11 // pred_check_branch
        %139 = sbr.rel (%p137) target = $region20
      $region19: #{geo_localization_forward.6} parent=11 // pred_region
        _
      $region20: #{geo_localization_forward.6} parent=11 // pred_fallthru
        _
    $region12: #{geo_localization_forward.6} parent=5 // pred_fallthru
      _
    %p140 = scmp.lt.s32.totalorder %s9, 2
    // Predicated region
    $region21: #{geo_localization_forward.6} parent=5 // pred_check
      %p141 = pneg %p140
    $region22: #{geo_localization_forward.6} parent=5 // pred_check_branch
      %143 = sbr.rel (%p141) target = $region24
    $region23: #{geo_localization_forward.6} parent=5 // pred_region
      // Predicated region
      $region25: #{geo_localization_forward.6} parent=23 // pred_check
        %p144 = pneg %p43
      $region26: #{geo_localization_forward.6} parent=23 // pred_check_branch
        %146 = sbr.rel (%p144) target = $region28
      $region27: #{geo_localization_forward.6} parent=23 // pred_region
        %p147 = scmp.lt.s32.totalorder %s16, 1
        %s148 = scalar_select %p147, %s16, 1
        %p149 = scmp.lt.s32.totalorder %s17, 0
        %s150 = scalar_select %p149, %s17, 0
        %s151 = smul.addr %s150, 36
        %s152 = smul.addr %s148, 36
        %s153 = sadd.s32 %s151, %s152
        %s154 = smul.addr %s153, 4
        %s155 = scalar_lea.vmem %s0, %s154
      $region28: #{geo_localization_forward.6} parent=23 // pred_fallthru
        _
    $region24: #{geo_localization_forward.6} parent=5 // pred_fallthru
      _
    %p156 = scmp.le.s32.totalorder 1, %s9
    %p157 = scmp.lt.s32.totalorder %s9, 3
    %p158 = pnand %p156, %p157
    %p159 = pneg %p158
    // Predicated region
    $region29: #{geo_localization_forward.6} parent=5 // pred_check
      _
    $region30: #{geo_localization_forward.6} parent=5 // pred_check_branch
      %161 = sbr.rel (%p158) target = $region32
    $region31: #{geo_localization_forward.6} parent=5 // pred_region
      %s162 = ssub.s32 %s9, 1
      %p163 = scmp.lt.s32.totalorder %s18, 1
      %s164 = scalar_select %p163, %s18, 1
      %p165 = scmp.lt.s32.totalorder %s19, 0
      %s166 = scalar_select %p165, %s19, 0
      %s167 = smul.addr %s166, 36
      %s168 = smul.addr %s164, 36
      %s169 = sadd.s32 %s167, %s168
      %s170 = smul.addr %s169, 4
      %s171 = scalar_lea.vmem %s0, %s170
      %p172 = pneg %p49
      %p173 = pneg %p46
      %p174 = pneg %p70
      %p175 = pneg %p67
      %p176 = pneg %p91
      %p177 = pneg %p88
      %p178 = pneg %p119
      %p179 = pneg %p116
      %p180 = scmp.lt.s32.totalorder %s18, 1
      %s181 = scalar_select %p180, %s18, 1
      %p182 = scmp.lt.s32.totalorder %s19, 0
      %s183 = scalar_select %p182, %s19, 0
      %s184 = smul.addr %s183, 4
      %s185 = smul.addr %s181, 4
      %s186 = sadd.s32 %s184, %s185
      %s187 = smul.addr %s186, 4
      %s188 = scalar_lea.vmem %s3, %s187
      %p189 = scmp.lt.s32.totalorder %s18, 1
      %s190 = scalar_select %p189, %s18, 1
      %p191 = scmp.lt.s32.totalorder %s19, 0
      %s192 = scalar_select %p191, %s19, 0
      %s193 = smul.addr %s192, 36
      %s194 = smul.addr %s190, 36
      %s195 = sadd.s32 %s193, %s194
      %s196 = smul.addr %s195, 4
      %s197 = scalar_lea.vmem %s0, %s196
      %p198 = scmp.lt.s32.totalorder %s18, 1
      %s199 = scalar_select %p198, %s18, 1
      %p200 = scmp.lt.s32.totalorder %s19, 0
      %s201 = scalar_select %p200, %s19, 0
      %s202 = smul.addr %s201, 4
      %s203 = smul.addr %s199, 4
      %s204 = sadd.s32 %s202, %s203
      %s205 = smul.addr %s204, 4
      %s206 = scalar_lea.vmem %s3, %s205
      %v208 = vld [vmem:[%s197] sm:$0xf]
      %v209 = vld [vmem:[%s197 + $0x4] sm:$0xf]
      %v210 = vld [vmem:[%s197 + $0x8] sm:$0xf]
      %v211 = vld [vmem:[%s197 + $0xc] sm:$0xf]
      %v212 = vld [vmem:[%s1] sm:$0xf]
      %v213 = vld [vmem:[%s1 + $0x4] sm:$0xf]
      %v214 = vld [vmem:[%s1 + $0x8] sm:$0xf]
      %v215 = vld [vmem:[%s1 + $0xc] sm:$0xf]
      %v216 = vld [vmem:[%s1 + $0x10] sm:$0xf]
      %v217 = vld [vmem:[%s1 + $0x14] sm:$0xf]
      %v218 = vld [vmem:[%s1 + $0x18] sm:$0xf]
      %v219 = vld [vmem:[%s1 + $0x1c] sm:$0xf]
      %v220 = vld [vmem:[%s1 + $0x20] sm:$0xf]
      %v221 = vld [vmem:[%s1 + $0x24] sm:$0xf]
      %v222 = vld [vmem:[%s1 + $0x28] sm:$0xf]
      %v223 = vld [vmem:[%s1 + $0x2c] sm:$0xf]
      %v224 = vld [vmem:[%s1 + $0x30] sm:$0xf]
      %v225 = vld [vmem:[%s1 + $0x34] sm:$0xf]
      %v226 = vld [vmem:[%s1 + $0x38] sm:$0xf]
      %v227 = vld [vmem:[%s1 + $0x3c] sm:$0xf]
      %s228 = scalar_lea.vmem %s197, 24
      %v229 = vld [vmem:[%s228] sm:$0xf]
      %v230 = vld [vmem:[%s228 + $0x4] sm:$0xf]
      %v231 = vld [vmem:[%s228 + $0x8] sm:$0xf]
      %v232 = vld [vmem:[%s228 + $0xc] sm:$0xf]
      %s233 = scalar_lea.vmem %s1, 64
      %v234 = vld [vmem:[%s233] sm:$0xf]
      %v235 = vld [vmem:[%s233 + $0x4] sm:$0xf]
      %v236 = vld [vmem:[%s233 + $0x8] sm:$0xf]
      %v237 = vld [vmem:[%s233 + $0xc] sm:$0xf]
      %v238 = vld [vmem:[%s233 + $0x10] sm:$0xf]
      %v239 = vld [vmem:[%s233 + $0x14] sm:$0xf]
      %v240 = vld [vmem:[%s233 + $0x18] sm:$0xf]
      %v241 = vld [vmem:[%s233 + $0x1c] sm:$0xf]
      %v242 = vld [vmem:[%s233 + $0x20] sm:$0xf]
      %v243 = vld [vmem:[%s233 + $0x24] sm:$0xf]
      %v244 = vld [vmem:[%s233 + $0x28] sm:$0xf]
      %v245 = vld [vmem:[%s233 + $0x2c] sm:$0xf]
      %v246 = vld [vmem:[%s233 + $0x30] sm:$0xf]
      %v247 = vld [vmem:[%s233 + $0x34] sm:$0xf]
      %v248 = vld [vmem:[%s233 + $0x38] sm:$0xf]
      %v249 = vld [vmem:[%s233 + $0x3c] sm:$0xf]
      %v254 = vunpack.c.l.b16 %v229
      %v255 = vunpack.c.l.b16 %v230
      %v256 = vunpack.c.l.b16 %v231
      %v257 = vunpack.c.l.b16 %v232
      %v258 = vpack.c.b16 %v255, %v254
      %v259 = vpack.c.b16 %v257, %v256
      %v278 = vunpack.c.l.b16 %v234
      %v279 = vunpack.c.l.b16 %v235
      %v280 = vunpack.c.l.b16 %v236
      %v281 = vunpack.c.l.b16 %v237
      %v282 = vunpack.c.l.b16 %v238
      %v283 = vunpack.c.l.b16 %v239
      %v284 = vunpack.c.l.b16 %v240
      %v285 = vunpack.c.l.b16 %v241
      %v286 = vunpack.c.l.b16 %v242
      %v287 = vunpack.c.l.b16 %v243
      %v288 = vunpack.c.l.b16 %v244
      %v289 = vunpack.c.l.b16 %v245
      %v290 = vunpack.c.l.b16 %v246
      %v291 = vunpack.c.l.b16 %v247
      %v292 = vunpack.c.l.b16 %v248
      %v293 = vunpack.c.l.b16 %v249
      %v294 = vpack.c.b16 %v279, %v278
      %v295 = vpack.c.b16 %v281, %v280
      %v296 = vpack.c.b16 %v283, %v282
      %v297 = vpack.c.b16 %v285, %v284
      %v298 = vpack.c.b16 %v287, %v286
      %v299 = vpack.c.b16 %v289, %v288
      %v300 = vpack.c.b16 %v291, %v290
      %v301 = vpack.c.b16 %v293, %v292
      %310 = vmatprep.subr.bf16.mxu0 0
      %311 = vmatpush1.bf16.msra.mxu0 %v301
      %312 = vmatprep.subr.bf16.mxu0 0
      %313 = vmatpush1.bf16.msra.mxu0 %v300
      %314 = vmatprep.subr.bf16.mxu0 0
      %315 = vmatpush1.bf16.msra.mxu0 %v299
      %316 = vmatprep.subr.bf16.mxu0 0
      %317 = vmatpush1.bf16.msra.mxu0 %v298
      %318 = vmatprep.subr.bf16.mxu0 0
      %319 = vmatpush1.bf16.msra.mxu0 %v297
      %320 = vmatprep.subr.bf16.mxu0 0
      %321 = vmatpush1.bf16.msra.mxu0 %v296
      %322 = vmatprep.subr.bf16.mxu0 0
      %323 = vmatpush1.bf16.msra.mxu0 %v295
      %324 = vmatprep.subr.bf16.mxu0 0
      %325 = vmatpush1.bf16.msra.mxu0 %v294
      %326 = vmatprep.subr.bf16.mxu0 0
      %327 = vmatpush2.bf16.msra.mxu0 0
      %328 = vmatprep.subr.bf16.mxu0 0
      %329 = vmatpush2.bf16.msra.mxu0 0
      %330 = vmatprep.subr.bf16.mxu0 0
      %331 = vmatpush2.bf16.msra.mxu0 0
      %332 = vmatprep.subr.bf16.mxu0 0
      %333 = vmatpush2.bf16.msra.mxu0 0
      %334 = vmatprep.subr.bf16.mxu0 0
      %335 = vmatpush2.bf16.msra.mxu0 0
      %336 = vmatprep.subr.bf16.mxu0 0
      %337 = vmatpush2.bf16.msra.mxu0 0
      %338 = vmatprep.subr.bf16.mxu0 0
      %339 = vmatpush2.bf16.msra.mxu0 0
      %340 = vmatprep.subr.bf16.mxu0 0
      %341 = vmatpush2.bf16.msra.mxu0 0
      %342 = vmatprep.mubr.bf16.mxu0 0
      %343 = vmatmul.mubr.bf16.gmra.mxu0 %v258
      %v344 = vpop.f32.mrf.mxu0
      %v345 = vadd.f32 0.0, %v344
      %v346 = vpop.f32.mrf.mxu0
      %v347 = vpop.f32.mrf.mxu0
      %v348 = vadd.f32 0.0, %v347
      %v349 = vpop.f32.mrf.mxu0
      %350 = vmatprep.mubr.bf16.mxu0 0
      %351 = vmatmul.mubr.bf16.gmra.mxu0 %v259
      %v352 = vpop.f32.mrf.mxu0
      %v353 = vadd.f32 0.0, %v352
      %v354 = vpop.f32.mrf.mxu0
      %v355 = vpop.f32.mrf.mxu0
      %v356 = vadd.f32 0.0, %v355
      %v357 = vpop.f32.mrf.mxu0
      %358 = vdwg.mxu0
      %v363 = vunpack.c.l.b16 %v208
      %v364 = vunpack.c.l.b16 %v209
      %v365 = vunpack.c.l.b16 %v210
      %v366 = vunpack.c.l.b16 %v211
      %v367 = vpack.c.b16 %v364, %v363
      %v368 = vpack.c.b16 %v366, %v365
      %v387 = vunpack.c.l.b16 %v212
      %v388 = vunpack.c.l.b16 %v213
      %v389 = vunpack.c.l.b16 %v214
      %v390 = vunpack.c.l.b16 %v215
      %v391 = vunpack.c.l.b16 %v216
      %v392 = vunpack.c.l.b16 %v217
      %v393 = vunpack.c.l.b16 %v218
      %v394 = vunpack.c.l.b16 %v219
      %v395 = vunpack.c.l.b16 %v220
      %v396 = vunpack.c.l.b16 %v221
      %v397 = vunpack.c.l.b16 %v222
      %v398 = vunpack.c.l.b16 %v223
      %v399 = vunpack.c.l.b16 %v224
      %v400 = vunpack.c.l.b16 %v225
      %v401 = vunpack.c.l.b16 %v226
      %v402 = vunpack.c.l.b16 %v227
      %v403 = vpack.c.b16 %v388, %v387
      %v404 = vpack.c.b16 %v390, %v389
      %v405 = vpack.c.b16 %v392, %v391
      %v406 = vpack.c.b16 %v394, %v393
      %v407 = vpack.c.b16 %v396, %v395
      %v408 = vpack.c.b16 %v398, %v397
      %v409 = vpack.c.b16 %v400, %v399
      %v410 = vpack.c.b16 %v402, %v401
      %419 = vmatprep.subr.bf16.mxu0 0
      %420 = vmatpush1.bf16.msra.mxu0 %v410
      %421 = vmatprep.subr.bf16.mxu0 0
      %422 = vmatpush1.bf16.msra.mxu0 %v409
      %423 = vmatprep.subr.bf16.mxu0 0
      %424 = vmatpush1.bf16.msra.mxu0 %v408
      %425 = vmatprep.subr.bf16.mxu0 0
      %426 = vmatpush1.bf16.msra.mxu0 %v407
      %427 = vmatprep.subr.bf16.mxu0 0
      %428 = vmatpush1.bf16.msra.mxu0 %v406
      %429 = vmatprep.subr.bf16.mxu0 0
      %430 = vmatpush1.bf16.msra.mxu0 %v405
      %431 = vmatprep.subr.bf16.mxu0 0
      %432 = vmatpush1.bf16.msra.mxu0 %v404
      %433 = vmatprep.subr.bf16.mxu0 0
      %434 = vmatpush1.bf16.msra.mxu0 %v403
      %435 = vmatprep.subr.bf16.mxu0 0
      %436 = vmatpush2.bf16.msra.mxu0 0
      %437 = vmatprep.subr.bf16.mxu0 0
      %438 = vmatpush2.bf16.msra.mxu0 0
      %439 = vmatprep.subr.bf16.mxu0 0
      %440 = vmatpush2.bf16.msra.mxu0 0
      %441 = vmatprep.subr.bf16.mxu0 0
      %442 = vmatpush2.bf16.msra.mxu0 0
      %443 = vmatprep.subr.bf16.mxu0 0
      %444 = vmatpush2.bf16.msra.mxu0 0
      %445 = vmatprep.subr.bf16.mxu0 0
      %446 = vmatpush2.bf16.msra.mxu0 0
      %447 = vmatprep.subr.bf16.mxu0 0
      %448 = vmatpush2.bf16.msra.mxu0 0
      %449 = vmatprep.subr.bf16.mxu0 0
      %450 = vmatpush2.bf16.msra.mxu0 0
      %451 = vmatprep.mubr.bf16.mxu0 0
      %452 = vmatmul.mubr.bf16.gmra.mxu0 %v367
      %v453 = vpop.f32.mrf.mxu0
      %v454 = vadd.f32 %v345, %v453
      %v455 = vpop.f32.mrf.mxu0
      %v456 = vpop.f32.mrf.mxu0
      %v457 = vadd.f32 %v348, %v456
      %v458 = vpop.f32.mrf.mxu0
      %459 = vmatprep.mubr.bf16.mxu0 0
      %460 = vmatmul.mubr.bf16.gmra.mxu0 %v368
      %v461 = vpop.f32.mrf.mxu0
      %v462 = vadd.f32 %v353, %v461
      %v463 = vpop.f32.mrf.mxu0
      %v464 = vpop.f32.mrf.mxu0
      %v465 = vadd.f32 %v356, %v464
      %v466 = vpop.f32.mrf.mxu0
      %467 = vdwg.mxu0
      %s468 = scalar_lea.vmem %s197, 48
      %v469 = vld [vmem:[%s468] sm:$0xf]
      %v470 = vld [vmem:[%s468 + $0x4] sm:$0xf]
      %v471 = vld [vmem:[%s468 + $0x8] sm:$0xf]
      %v472 = vld [vmem:[%s468 + $0xc] sm:$0xf]
      %s473 = scalar_lea.vmem %s1, 128
      %v474 = vld [vmem:[%s473] sm:$0xf]
      %v475 = vld [vmem:[%s473 + $0x4] sm:$0xf]
      %v476 = vld [vmem:[%s473 + $0x8] sm:$0xf]
      %v477 = vld [vmem:[%s473 + $0xc] sm:$0xf]
      %v478 = vld [vmem:[%s473 + $0x10] sm:$0xf]
      %v479 = vld [vmem:[%s473 + $0x14] sm:$0xf]
      %v480 = vld [vmem:[%s473 + $0x18] sm:$0xf]
      %v481 = vld [vmem:[%s473 + $0x1c] sm:$0xf]
      %v482 = vld [vmem:[%s473 + $0x20] sm:$0xf]
      %v483 = vld [vmem:[%s473 + $0x24] sm:$0xf]
      %v484 = vld [vmem:[%s473 + $0x28] sm:$0xf]
      %v485 = vld [vmem:[%s473 + $0x2c] sm:$0xf]
      %v486 = vld [vmem:[%s473 + $0x30] sm:$0xf]
      %v487 = vld [vmem:[%s473 + $0x34] sm:$0xf]
      %v488 = vld [vmem:[%s473 + $0x38] sm:$0xf]
      %v489 = vld [vmem:[%s473 + $0x3c] sm:$0xf]
      %v494 = vunpack.c.l.b16 %v469
      %v495 = vunpack.c.l.b16 %v470
      %v496 = vunpack.c.l.b16 %v471
      %v497 = vunpack.c.l.b16 %v472
      %v498 = vpack.c.b16 %v495, %v494
      %v499 = vpack.c.b16 %v497, %v496
      %v518 = vunpack.c.l.b16 %v474
      %v519 = vunpack.c.l.b16 %v475
      %v520 = vunpack.c.l.b16 %v476
      %v521 = vunpack.c.l.b16 %v477
      %v522 = vunpack.c.l.b16 %v478
      %v523 = vunpack.c.l.b16 %v479
      %v524 = vunpack.c.l.b16 %v480
      %v525 = vunpack.c.l.b16 %v481
      %v526 = vunpack.c.l.b16 %v482
      %v527 = vunpack.c.l.b16 %v483
      %v528 = vunpack.c.l.b16 %v484
      %v529 = vunpack.c.l.b16 %v485
      %v530 = vunpack.c.l.b16 %v486
      %v531 = vunpack.c.l.b16 %v487
      %v532 = vunpack.c.l.b16 %v488
      %v533 = vunpack.c.l.b16 %v489
      %v534 = vpack.c.b16 %v519, %v518
      %v535 = vpack.c.b16 %v521, %v520
      %v536 = vpack.c.b16 %v523, %v522
      %v537 = vpack.c.b16 %v525, %v524
      %v538 = vpack.c.b16 %v527, %v526
      %v539 = vpack.c.b16 %v529, %v528
      %v540 = vpack.c.b16 %v531, %v530
      %v541 = vpack.c.b16 %v533, %v532
      %550 = vmatprep.subr.bf16.mxu0 0
      %551 = vmatpush1.bf16.msra.mxu0 %v541
      %552 = vmatprep.subr.bf16.mxu0 0
      %553 = vmatpush1.bf16.msra.mxu0 %v540
      %554 = vmatprep.subr.bf16.mxu0 0
      %555 = vmatpush1.bf16.msra.mxu0 %v539
      %556 = vmatprep.subr.bf16.mxu0 0
      %557 = vmatpush1.bf16.msra.mxu0 %v538
      %558 = vmatprep.subr.bf16.mxu0 0
      %559 = vmatpush1.bf16.msra.mxu0 %v537
      %560 = vmatprep.subr.bf16.mxu0 0
      %561 = vmatpush1.bf16.msra.mxu0 %v536
      %562 = vmatprep.subr.bf16.mxu0 0
      %563 = vmatpush1.bf16.msra.mxu0 %v535
      %564 = vmatprep.subr.bf16.mxu0 0
      %565 = vmatpush1.bf16.msra.mxu0 %v534
      %566 = vmatprep.subr.bf16.mxu0 0
      %567 = vmatpush2.bf16.msra.mxu0 0
      %568 = vmatprep.subr.bf16.mxu0 0
      %569 = vmatpush2.bf16.msra.mxu0 0
      %570 = vmatprep.subr.bf16.mxu0 0
      %571 = vmatpush2.bf16.msra.mxu0 0
      %572 = vmatprep.subr.bf16.mxu0 0
      %573 = vmatpush2.bf16.msra.mxu0 0
      %574 = vmatprep.subr.bf16.mxu0 0
      %575 = vmatpush2.bf16.msra.mxu0 0
      %576 = vmatprep.subr.bf16.mxu0 0
      %577 = vmatpush2.bf16.msra.mxu0 0
      %578 = vmatprep.subr.bf16.mxu0 0
      %579 = vmatpush2.bf16.msra.mxu0 0
      %580 = vmatprep.subr.bf16.mxu0 0
      %581 = vmatpush2.bf16.msra.mxu0 0
      %582 = vmatprep.mubr.bf16.mxu0 0
      %583 = vmatmul.mubr.bf16.gmra.mxu0 %v498
      %v584 = vpop.f32.mrf.mxu0
      %v585 = vadd.f32 0.0, %v584
      %v586 = vpop.f32.mrf.mxu0
      %v587 = vpop.f32.mrf.mxu0
      %v588 = vadd.f32 0.0, %v587
      %v589 = vpop.f32.mrf.mxu0
      %590 = vmatprep.mubr.bf16.mxu0 0
      %591 = vmatmul.mubr.bf16.gmra.mxu0 %v499
      %v592 = vpop.f32.mrf.mxu0
      %v593 = vadd.f32 0.0, %v592
      %v594 = vpop.f32.mrf.mxu0
      %v595 = vpop.f32.mrf.mxu0
      %v596 = vadd.f32 0.0, %v595
      %v597 = vpop.f32.mrf.mxu0
      %598 = vdwg.mxu0
      %v599 = vadd.f32 %v454, %v585
      %v600 = vadd.f32 %v457, %v588
      %v601 = vadd.f32 %v462, %v593
      %v602 = vadd.f32 %v465, %v596
      %s603 = scalar_lea.vmem %s197, 72
      %v604 = vld [vmem:[%s603] sm:$0xf]
      %v605 = vld [vmem:[%s603 + $0x4] sm:$0xf]
      %v606 = vld [vmem:[%s603 + $0x8] sm:$0xf]
      %v607 = vld [vmem:[%s603 + $0xc] sm:$0xf]
      %s608 = scalar_lea.vmem %s1, 192
      %v609 = vld [vmem:[%s608] sm:$0xf]
      %v610 = vld [vmem:[%s608 + $0x4] sm:$0xf]
      %v611 = vld [vmem:[%s608 + $0x8] sm:$0xf]
      %v612 = vld [vmem:[%s608 + $0xc] sm:$0xf]
      %v613 = vld [vmem:[%s608 + $0x10] sm:$0xf]
      %v614 = vld [vmem:[%s608 + $0x14] sm:$0xf]
      %v615 = vld [vmem:[%s608 + $0x18] sm:$0xf]
      %v616 = vld [vmem:[%s608 + $0x1c] sm:$0xf]
      %v617 = vld [vmem:[%s608 + $0x20] sm:$0xf]
      %v618 = vld [vmem:[%s608 + $0x24] sm:$0xf]
      %v619 = vld [vmem:[%s608 + $0x28] sm:$0xf]
      %v620 = vld [vmem:[%s608 + $0x2c] sm:$0xf]
      %v621 = vld [vmem:[%s608 + $0x30] sm:$0xf]
      %v622 = vld [vmem:[%s608 + $0x34] sm:$0xf]
      %v623 = vld [vmem:[%s608 + $0x38] sm:$0xf]
      %v624 = vld [vmem:[%s608 + $0x3c] sm:$0xf]
      %v629 = vunpack.c.l.b16 %v604
      %v630 = vunpack.c.l.b16 %v605
      %v631 = vunpack.c.l.b16 %v606
      %v632 = vunpack.c.l.b16 %v607
      %v633 = vpack.c.b16 %v630, %v629
      %v634 = vpack.c.b16 %v632, %v631
      %v653 = vunpack.c.l.b16 %v609
      %v654 = vunpack.c.l.b16 %v610
      %v655 = vunpack.c.l.b16 %v611
      %v656 = vunpack.c.l.b16 %v612
      %v657 = vunpack.c.l.b16 %v613
      %v658 = vunpack.c.l.b16 %v614
      %v659 = vunpack.c.l.b16 %v615
      %v660 = vunpack.c.l.b16 %v616
      %v661 = vunpack.c.l.b16 %v617
      %v662 = vunpack.c.l.b16 %v618
      %v663 = vunpack.c.l.b16 %v619
      %v664 = vunpack.c.l.b16 %v620
      %v665 = vunpack.c.l.b16 %v621
      %v666 = vunpack.c.l.b16 %v622
      %v667 = vunpack.c.l.b16 %v623
      %v668 = vunpack.c.l.b16 %v624
      %v669 = vpack.c.b16 %v654, %v653
      %v670 = vpack.c.b16 %v656, %v655
      %v671 = vpack.c.b16 %v658, %v657
      %v672 = vpack.c.b16 %v660, %v659
      %v673 = vpack.c.b16 %v662, %v661
      %v674 = vpack.c.b16 %v664, %v663
      %v675 = vpack.c.b16 %v666, %v665
      %v676 = vpack.c.b16 %v668, %v667
      %685 = vmatprep.subr.bf16.mxu0 0
      %686 = vmatpush1.bf16.msra.mxu0 %v676
      %687 = vmatprep.subr.bf16.mxu0 0
      %688 = vmatpush1.bf16.msra.mxu0 %v675
      %689 = vmatprep.subr.bf16.mxu0 0
      %690 = vmatpush1.bf16.msra.mxu0 %v674
      %691 = vmatprep.subr.bf16.mxu0 0
      %692 = vmatpush1.bf16.msra.mxu0 %v673
      %693 = vmatprep.subr.bf16.mxu0 0
      %694 = vmatpush1.bf16.msra.mxu0 %v672
      %695 = vmatprep.subr.bf16.mxu0 0
      %696 = vmatpush1.bf16.msra.mxu0 %v671
      %697 = vmatprep.subr.bf16.mxu0 0
      %698 = vmatpush1.bf16.msra.mxu0 %v670
      %699 = vmatprep.subr.bf16.mxu0 0
      %700 = vmatpush1.bf16.msra.mxu0 %v669
      %701 = vmatprep.subr.bf16.mxu0 0
      %702 = vmatpush2.bf16.msra.mxu0 0
      %703 = vmatprep.subr.bf16.mxu0 0
      %704 = vmatpush2.bf16.msra.mxu0 0
      %705 = vmatprep.subr.bf16.mxu0 0
      %706 = vmatpush2.bf16.msra.mxu0 0
      %707 = vmatprep.subr.bf16.mxu0 0
      %708 = vmatpush2.bf16.msra.mxu0 0
      %709 = vmatprep.subr.bf16.mxu0 0
      %710 = vmatpush2.bf16.msra.mxu0 0
      %711 = vmatprep.subr.bf16.mxu0 0
      %712 = vmatpush2.bf16.msra.mxu0 0
      %713 = vmatprep.subr.bf16.mxu0 0
      %714 = vmatpush2.bf16.msra.mxu0 0
      %715 = vmatprep.subr.bf16.mxu0 0
      %716 = vmatpush2.bf16.msra.mxu0 0
      %717 = vmatprep.mubr.bf16.mxu0 0
      %718 = vmatmul.mubr.bf16.gmra.mxu0 %v633
      %v719 = vpop.f32.mrf.mxu0
      %v720 = vadd.f32 0.0, %v719
      %v721 = vpop.f32.mrf.mxu0
      %v722 = vpop.f32.mrf.mxu0
      %v723 = vadd.f32 0.0, %v722
      %v724 = vpop.f32.mrf.mxu0
      %725 = vmatprep.mubr.bf16.mxu0 0
      %726 = vmatmul.mubr.bf16.gmra.mxu0 %v634
      %v727 = vpop.f32.mrf.mxu0
      %v728 = vadd.f32 0.0, %v727
      %v729 = vpop.f32.mrf.mxu0
      %v730 = vpop.f32.mrf.mxu0
      %v731 = vadd.f32 0.0, %v730
      %v732 = vpop.f32.mrf.mxu0
      %733 = vdwg.mxu0
      %v734 = vadd.f32 %v599, %v720
      %v735 = vadd.f32 %v600, %v723
      %v736 = vadd.f32 %v601, %v728
      %v737 = vadd.f32 %v602, %v731
      %s738 = scalar_lea.vmem %s197, 96
      %v739 = vld [vmem:[%s738] sm:$0xf]
      %v740 = vld [vmem:[%s738 + $0x4] sm:$0xf]
      %v741 = vld [vmem:[%s738 + $0x8] sm:$0xf]
      %v742 = vld [vmem:[%s738 + $0xc] sm:$0xf]
      %s743 = scalar_lea.vmem %s1, 256
      %v744 = vld [vmem:[%s743] sm:$0xf]
      %v745 = vld [vmem:[%s743 + $0x4] sm:$0xf]
      %v746 = vld [vmem:[%s743 + $0x8] sm:$0xf]
      %v747 = vld [vmem:[%s743 + $0xc] sm:$0xf]
      %v748 = vld [vmem:[%s743 + $0x10] sm:$0xf]
      %v749 = vld [vmem:[%s743 + $0x14] sm:$0xf]
      %v750 = vld [vmem:[%s743 + $0x18] sm:$0xf]
      %v751 = vld [vmem:[%s743 + $0x1c] sm:$0xf]
      %v752 = vld [vmem:[%s743 + $0x20] sm:$0xf]
      %v753 = vld [vmem:[%s743 + $0x24] sm:$0xf]
      %v754 = vld [vmem:[%s743 + $0x28] sm:$0xf]
      %v755 = vld [vmem:[%s743 + $0x2c] sm:$0xf]
      %v756 = vld [vmem:[%s743 + $0x30] sm:$0xf]
      %v757 = vld [vmem:[%s743 + $0x34] sm:$0xf]
      %v758 = vld [vmem:[%s743 + $0x38] sm:$0xf]
      %v759 = vld [vmem:[%s743 + $0x3c] sm:$0xf]
      %v764 = vunpack.c.l.b16 %v739
      %v765 = vunpack.c.l.b16 %v740
      %v766 = vunpack.c.l.b16 %v741
      %v767 = vunpack.c.l.b16 %v742
      %v768 = vpack.c.b16 %v765, %v764
      %v769 = vpack.c.b16 %v767, %v766
      %v788 = vunpack.c.l.b16 %v744
      %v789 = vunpack.c.l.b16 %v745
      %v790 = vunpack.c.l.b16 %v746
      %v791 = vunpack.c.l.b16 %v747
      %v792 = vunpack.c.l.b16 %v748
      %v793 = vunpack.c.l.b16 %v749
      %v794 = vunpack.c.l.b16 %v750
      %v795 = vunpack.c.l.b16 %v751
      %v796 = vunpack.c.l.b16 %v752
      %v797 = vunpack.c.l.b16 %v753
      %v798 = vunpack.c.l.b16 %v754
      %v799 = vunpack.c.l.b16 %v755
      %v800 = vunpack.c.l.b16 %v756
      %v801 = vunpack.c.l.b16 %v757
      %v802 = vunpack.c.l.b16 %v758
      %v803 = vunpack.c.l.b16 %v759
      %v804 = vpack.c.b16 %v789, %v788
      %v805 = vpack.c.b16 %v791, %v790
      %v806 = vpack.c.b16 %v793, %v792
      %v807 = vpack.c.b16 %v795, %v794
      %v808 = vpack.c.b16 %v797, %v796
      %v809 = vpack.c.b16 %v799, %v798
      %v810 = vpack.c.b16 %v801, %v800
      %v811 = vpack.c.b16 %v803, %v802
      %820 = vmatprep.subr.bf16.mxu0 0
      %821 = vmatpush1.bf16.msra.mxu0 %v811
      %822 = vmatprep.subr.bf16.mxu0 0
      %823 = vmatpush1.bf16.msra.mxu0 %v810
      %824 = vmatprep.subr.bf16.mxu0 0
      %825 = vmatpush1.bf16.msra.mxu0 %v809
      %826 = vmatprep.subr.bf16.mxu0 0
      %827 = vmatpush1.bf16.msra.mxu0 %v808
      %828 = vmatprep.subr.bf16.mxu0 0
      %829 = vmatpush1.bf16.msra.mxu0 %v807
      %830 = vmatprep.subr.bf16.mxu0 0
      %831 = vmatpush1.bf16.msra.mxu0 %v806
      %832 = vmatprep.subr.bf16.mxu0 0
      %833 = vmatpush1.bf16.msra.mxu0 %v805
      %834 = vmatprep.subr.bf16.mxu0 0
      %835 = vmatpush1.bf16.msra.mxu0 %v804
      %836 = vmatprep.subr.bf16.mxu0 0
      %837 = vmatpush2.bf16.msra.mxu0 0
      %838 = vmatprep.subr.bf16.mxu0 0
      %839 = vmatpush2.bf16.msra.mxu0 0
      %840 = vmatprep.subr.bf16.mxu0 0
      %841 = vmatpush2.bf16.msra.mxu0 0
      %842 = vmatprep.subr.bf16.mxu0 0
      %843 = vmatpush2.bf16.msra.mxu0 0
      %844 = vmatprep.subr.bf16.mxu0 0
      %845 = vmatpush2.bf16.msra.mxu0 0
      %846 = vmatprep.subr.bf16.mxu0 0
      %847 = vmatpush2.bf16.msra.mxu0 0
      %848 = vmatprep.subr.bf16.mxu0 0
      %849 = vmatpush2.bf16.msra.mxu0 0
      %850 = vmatprep.subr.bf16.mxu0 0
      %851 = vmatpush2.bf16.msra.mxu0 0
      %852 = vmatprep.mubr.bf16.mxu0 0
      %853 = vmatmul.mubr.bf16.gmra.mxu0 %v768
      %v854 = vpop.f32.mrf.mxu0
      %v855 = vadd.f32 0.0, %v854
      %v856 = vpop.f32.mrf.mxu0
      %v857 = vpop.f32.mrf.mxu0
      %v858 = vadd.f32 0.0, %v857
      %v859 = vpop.f32.mrf.mxu0
      %860 = vmatprep.mubr.bf16.mxu0 0
      %861 = vmatmul.mubr.bf16.gmra.mxu0 %v769
      %v862 = vpop.f32.mrf.mxu0
      %v863 = vadd.f32 0.0, %v862
      %v864 = vpop.f32.mrf.mxu0
      %v865 = vpop.f32.mrf.mxu0
      %v866 = vadd.f32 0.0, %v865
      %v867 = vpop.f32.mrf.mxu0
      %868 = vdwg.mxu0
      %v869 = vadd.f32 %v734, %v855
      %v870 = vadd.f32 %v735, %v858
      %v871 = vadd.f32 %v736, %v863
      %v872 = vadd.f32 %v737, %v866
      %s873 = scalar_lea.vmem %s197, 120
      %v874 = vld [vmem:[%s873] sm:$0xf]
      %v875 = vld [vmem:[%s873 + $0x4] sm:$0xf]
      %v876 = vld [vmem:[%s873 + $0x8] sm:$0xf]
      %v877 = vld [vmem:[%s873 + $0xc] sm:$0xf]
      %s878 = scalar_lea.vmem %s1, 320
      %v879 = vld [vmem:[%s878] sm:$0xf]
      %v880 = vld [vmem:[%s878 + $0x4] sm:$0xf]
      %v881 = vld [vmem:[%s878 + $0x8] sm:$0xf]
      %v882 = vld [vmem:[%s878 + $0xc] sm:$0xf]
      %v883 = vld [vmem:[%s878 + $0x10] sm:$0xf]
      %v884 = vld [vmem:[%s878 + $0x14] sm:$0xf]
      %v885 = vld [vmem:[%s878 + $0x18] sm:$0xf]
      %v886 = vld [vmem:[%s878 + $0x1c] sm:$0xf]
      %v887 = vld [vmem:[%s878 + $0x20] sm:$0xf]
      %v888 = vld [vmem:[%s878 + $0x24] sm:$0xf]
      %v889 = vld [vmem:[%s878 + $0x28] sm:$0xf]
      %v890 = vld [vmem:[%s878 + $0x2c] sm:$0xf]
      %v891 = vld [vmem:[%s878 + $0x30] sm:$0xf]
      %v892 = vld [vmem:[%s878 + $0x34] sm:$0xf]
      %v893 = vld [vmem:[%s878 + $0x38] sm:$0xf]
      %v894 = vld [vmem:[%s878 + $0x3c] sm:$0xf]
      %v899 = vunpack.c.l.b16 %v874
      %v900 = vunpack.c.l.b16 %v875
      %v901 = vunpack.c.l.b16 %v876
      %v902 = vunpack.c.l.b16 %v877
      %v903 = vpack.c.b16 %v900, %v899
      %v904 = vpack.c.b16 %v902, %v901
      %v923 = vunpack.c.l.b16 %v879
      %v924 = vunpack.c.l.b16 %v880
      %v925 = vunpack.c.l.b16 %v881
      %v926 = vunpack.c.l.b16 %v882
      %v927 = vunpack.c.l.b16 %v883
      %v928 = vunpack.c.l.b16 %v884
      %v929 = vunpack.c.l.b16 %v885
      %v930 = vunpack.c.l.b16 %v886
      %v931 = vunpack.c.l.b16 %v887
      %v932 = vunpack.c.l.b16 %v888
      %v933 = vunpack.c.l.b16 %v889
      %v934 = vunpack.c.l.b16 %v890
      %v935 = vunpack.c.l.b16 %v891
      %v936 = vunpack.c.l.b16 %v892
      %v937 = vunpack.c.l.b16 %v893
      %v938 = vunpack.c.l.b16 %v894
      %v939 = vpack.c.b16 %v924, %v923
      %v940 = vpack.c.b16 %v926, %v925
      %v941 = vpack.c.b16 %v928, %v927
      %v942 = vpack.c.b16 %v930, %v929
      %v943 = vpack.c.b16 %v932, %v931
      %v944 = vpack.c.b16 %v934, %v933
      %v945 = vpack.c.b16 %v936, %v935
      %v946 = vpack.c.b16 %v938, %v937
      %955 = vmatprep.subr.bf16.mxu0 0
      %956 = vmatpush1.bf16.msra.mxu0 %v946
      %957 = vmatprep.subr.bf16.mxu0 0
      %958 = vmatpush1.bf16.msra.mxu0 %v945
      %959 = vmatprep.subr.bf16.mxu0 0
      %960 = vmatpush1.bf16.msra.mxu0 %v944
      %961 = vmatprep.subr.bf16.mxu0 0
      %962 = vmatpush1.bf16.msra.mxu0 %v943
      %963 = vmatprep.subr.bf16.mxu0 0
      %964 = vmatpush1.bf16.msra.mxu0 %v942
      %965 = vmatprep.subr.bf16.mxu0 0
      %966 = vmatpush1.bf16.msra.mxu0 %v941
      %967 = vmatprep.subr.bf16.mxu0 0
      %968 = vmatpush1.bf16.msra.mxu0 %v940
      %969 = vmatprep.subr.bf16.mxu0 0
      %970 = vmatpush1.bf16.msra.mxu0 %v939
      %971 = vmatprep.subr.bf16.mxu0 0
      %972 = vmatpush2.bf16.msra.mxu0 0
      %973 = vmatprep.subr.bf16.mxu0 0
      %974 = vmatpush2.bf16.msra.mxu0 0
      %975 = vmatprep.subr.bf16.mxu0 0
      %976 = vmatpush2.bf16.msra.mxu0 0
      %977 = vmatprep.subr.bf16.mxu0 0
      %978 = vmatpush2.bf16.msra.mxu0 0
      %979 = vmatprep.subr.bf16.mxu0 0
      %980 = vmatpush2.bf16.msra.mxu0 0
      %981 = vmatprep.subr.bf16.mxu0 0
      %982 = vmatpush2.bf16.msra.mxu0 0
      %983 = vmatprep.subr.bf16.mxu0 0
      %984 = vmatpush2.bf16.msra.mxu0 0
      %985 = vmatprep.subr.bf16.mxu0 0
      %986 = vmatpush2.bf16.msra.mxu0 0
      %987 = vmatprep.mubr.bf16.mxu0 0
      %988 = vmatmul.mubr.bf16.gmra.mxu0 %v903
      %v989 = vpop.f32.mrf.mxu0
      %v990 = vadd.f32 0.0, %v989
      %v991 = vpop.f32.mrf.mxu0
      %v992 = vpop.f32.mrf.mxu0
      %v993 = vadd.f32 0.0, %v992
      %v994 = vpop.f32.mrf.mxu0
      %995 = vmatprep.mubr.bf16.mxu0 0
      %996 = vmatmul.mubr.bf16.gmra.mxu0 %v904
      %v997 = vpop.f32.mrf.mxu0
      %v998 = vadd.f32 0.0, %v997
      %v999 = vpop.f32.mrf.mxu0
      %v1000 = vpop.f32.mrf.mxu0
      %v1001 = vadd.f32 0.0, %v1000
      %v1002 = vpop.f32.mrf.mxu0
      %1003 = vdwg.mxu0
      %v1004 = vadd.f32 %v869, %v990
      %v1005 = vadd.f32 %v870, %v993
      %v1006 = vadd.f32 %v871, %v998
      %v1007 = vadd.f32 %v872, %v1001
      %v1008 = vld [vmem:[%s197 + $0x8] sm:$0xf]
      %v1009 = vld [vmem:[%s197 + $0xc] sm:$0xf]
      %v1010 = vld [vmem:[%s197 + $0x10] sm:$0xf]
      %v1011 = vld [vmem:[%s197 + $0x14] sm:$0xf]
      %s1012 = scalar_lea.vmem %s1, 384
      %v1013 = vld [vmem:[%s1012] sm:$0xf]
      %v1014 = vld [vmem:[%s1012 + $0x4] sm:$0xf]
      %v1015 = vld [vmem:[%s1012 + $0x8] sm:$0xf]
      %v1016 = vld [vmem:[%s1012 + $0xc] sm:$0xf]
      %v1017 = vld [vmem:[%s1012 + $0x10] sm:$0xf]
      %v1018 = vld [vmem:[%s1012 + $0x14] sm:$0xf]
      %v1019 = vld [vmem:[%s1012 + $0x18] sm:$0xf]
      %v1020 = vld [vmem:[%s1012 + $0x1c] sm:$0xf]
      %v1021 = vld [vmem:[%s1012 + $0x20] sm:$0xf]
      %v1022 = vld [vmem:[%s1012 + $0x24] sm:$0xf]
      %v1023 = vld [vmem:[%s1012 + $0x28] sm:$0xf]
      %v1024 = vld [vmem:[%s1012 + $0x2c] sm:$0xf]
      %v1025 = vld [vmem:[%s1012 + $0x30] sm:$0xf]
      %v1026 = vld [vmem:[%s1012 + $0x34] sm:$0xf]
      %v1027 = vld [vmem:[%s1012 + $0x38] sm:$0xf]
      %v1028 = vld [vmem:[%s1012 + $0x3c] sm:$0xf]
      %v1033 = vunpack.c.l.b16 %v1008
      %v1034 = vunpack.c.l.b16 %v1009
      %v1035 = vunpack.c.l.b16 %v1010
      %v1036 = vunpack.c.l.b16 %v1011
      %v1037 = vpack.c.b16 %v1034, %v1033
      %v1038 = vpack.c.b16 %v1036, %v1035
      %v1057 = vunpack.c.l.b16 %v1013
      %v1058 = vunpack.c.l.b16 %v1014
      %v1059 = vunpack.c.l.b16 %v1015
      %v1060 = vunpack.c.l.b16 %v1016
      %v1061 = vunpack.c.l.b16 %v1017
      %v1062 = vunpack.c.l.b16 %v1018
      %v1063 = vunpack.c.l.b16 %v1019
      %v1064 = vunpack.c.l.b16 %v1020
      %v1065 = vunpack.c.l.b16 %v1021
      %v1066 = vunpack.c.l.b16 %v1022
      %v1067 = vunpack.c.l.b16 %v1023
      %v1068 = vunpack.c.l.b16 %v1024
      %v1069 = vunpack.c.l.b16 %v1025
      %v1070 = vunpack.c.l.b16 %v1026
      %v1071 = vunpack.c.l.b16 %v1027
      %v1072 = vunpack.c.l.b16 %v1028
      %v1073 = vpack.c.b16 %v1058, %v1057
      %v1074 = vpack.c.b16 %v1060, %v1059
      %v1075 = vpack.c.b16 %v1062, %v1061
      %v1076 = vpack.c.b16 %v1064, %v1063
      %v1077 = vpack.c.b16 %v1066, %v1065
      %v1078 = vpack.c.b16 %v1068, %v1067
      %v1079 = vpack.c.b16 %v1070, %v1069
      %v1080 = vpack.c.b16 %v1072, %v1071
      %1089 = vmatprep.subr.bf16.mxu0 0
      %1090 = vmatpush1.bf16.msra.mxu0 %v1080
      %1091 = vmatprep.subr.bf16.mxu0 0
      %1092 = vmatpush1.bf16.msra.mxu0 %v1079
      %1093 = vmatprep.subr.bf16.mxu0 0
      %1094 = vmatpush1.bf16.msra.mxu0 %v1078
      %1095 = vmatprep.subr.bf16.mxu0 0
      %1096 = vmatpush1.bf16.msra.mxu0 %v1077
      %1097 = vmatprep.subr.bf16.mxu0 0
      %1098 = vmatpush1.bf16.msra.mxu0 %v1076
      %1099 = vmatprep.subr.bf16.mxu0 0
      %1100 = vmatpush1.bf16.msra.mxu0 %v1075
      %1101 = vmatprep.subr.bf16.mxu0 0
      %1102 = vmatpush1.bf16.msra.mxu0 %v1074
      %1103 = vmatprep.subr.bf16.mxu0 0
      %1104 = vmatpush1.bf16.msra.mxu0 %v1073
      %1105 = vmatprep.subr.bf16.mxu0 0
      %1106 = vmatpush2.bf16.msra.mxu0 0
      %1107 = vmatprep.subr.bf16.mxu0 0
      %1108 = vmatpush2.bf16.msra.mxu0 0
      %1109 = vmatprep.subr.bf16.mxu0 0
      %1110 = vmatpush2.bf16.msra.mxu0 0
      %1111 = vmatprep.subr.bf16.mxu0 0
      %1112 = vmatpush2.bf16.msra.mxu0 0
      %1113 = vmatprep.subr.bf16.mxu0 0
      %1114 = vmatpush2.bf16.msra.mxu0 0
      %1115 = vmatprep.subr.bf16.mxu0 0
      %1116 = vmatpush2.bf16.msra.mxu0 0
      %1117 = vmatprep.subr.bf16.mxu0 0
      %1118 = vmatpush2.bf16.msra.mxu0 0
      %1119 = vmatprep.subr.bf16.mxu0 0
      %1120 = vmatpush2.bf16.msra.mxu0 0
      %1121 = vmatprep.mubr.bf16.mxu0 0
      %1122 = vmatmul.mubr.bf16.gmra.mxu0 %v1037
      %v1123 = vpop.f32.mrf.mxu0
      %v1124 = vadd.f32 0.0, %v1123
      %v1125 = vpop.f32.mrf.mxu0
      %v1126 = vpop.f32.mrf.mxu0
      %v1127 = vadd.f32 0.0, %v1126
      %v1128 = vpop.f32.mrf.mxu0
      %1129 = vmatprep.mubr.bf16.mxu0 0
      %1130 = vmatmul.mubr.bf16.gmra.mxu0 %v1038
      %v1131 = vpop.f32.mrf.mxu0
      %v1132 = vadd.f32 0.0, %v1131
      %v1133 = vpop.f32.mrf.mxu0
      %v1134 = vpop.f32.mrf.mxu0
      %v1135 = vadd.f32 0.0, %v1134
      %v1136 = vpop.f32.mrf.mxu0
      %1137 = vdwg.mxu0
      %v1138 = vadd.f32 %v1004, %v1124
      %v1139 = vadd.f32 %v1005, %v1127
      %v1140 = vadd.f32 %v1006, %v1132
      %v1141 = vadd.f32 %v1007, %v1135
      %v1142 = vld [vmem:[%s228 + $0x8] sm:$0xf]
      %v1143 = vld [vmem:[%s228 + $0xc] sm:$0xf]
      %v1144 = vld [vmem:[%s228 + $0x10] sm:$0xf]
      %v1145 = vld [vmem:[%s228 + $0x14] sm:$0xf]
      %s1146 = scalar_lea.vmem %s1, 448
      %v1147 = vld [vmem:[%s1146] sm:$0xf]
      %v1148 = vld [vmem:[%s1146 + $0x4] sm:$0xf]
      %v1149 = vld [vmem:[%s1146 + $0x8] sm:$0xf]
      %v1150 = vld [vmem:[%s1146 + $0xc] sm:$0xf]
      %v1151 = vld [vmem:[%s1146 + $0x10] sm:$0xf]
      %v1152 = vld [vmem:[%s1146 + $0x14] sm:$0xf]
      %v1153 = vld [vmem:[%s1146 + $0x18] sm:$0xf]
      %v1154 = vld [vmem:[%s1146 + $0x1c] sm:$0xf]
      %v1155 = vld [vmem:[%s1146 + $0x20] sm:$0xf]
      %v1156 = vld [vmem:[%s1146 + $0x24] sm:$0xf]
      %v1157 = vld [vmem:[%s1146 + $0x28] sm:$0xf]
      %v1158 = vld [vmem:[%s1146 + $0x2c] sm:$0xf]
      %v1159 = vld [vmem:[%s1146 + $0x30] sm:$0xf]
      %v1160 = vld [vmem:[%s1146 + $0x34] sm:$0xf]
      %v1161 = vld [vmem:[%s1146 + $0x38] sm:$0xf]
      %v1162 = vld [vmem:[%s1146 + $0x3c] sm:$0xf]
      %v1167 = vunpack.c.l.b16 %v1142
      %v1168 = vunpack.c.l.b16 %v1143
      %v1169 = vunpack.c.l.b16 %v1144
      %v1170 = vunpack.c.l.b16 %v1145
      %v1171 = vpack.c.b16 %v1168, %v1167
      %v1172 = vpack.c.b16 %v1170, %v1169
      %v1191 = vunpack.c.l.b16 %v1147
      %v1192 = vunpack.c.l.b16 %v1148
      %v1193 = vunpack.c.l.b16 %v1149
      %v1194 = vunpack.c.l.b16 %v1150
      %v1195 = vunpack.c.l.b16 %v1151
      %v1196 = vunpack.c.l.b16 %v1152
      %v1197 = vunpack.c.l.b16 %v1153
      %v1198 = vunpack.c.l.b16 %v1154
      %v1199 = vunpack.c.l.b16 %v1155
      %v1200 = vunpack.c.l.b16 %v1156
      %v1201 = vunpack.c.l.b16 %v1157
      %v1202 = vunpack.c.l.b16 %v1158
      %v1203 = vunpack.c.l.b16 %v1159
      %v1204 = vunpack.c.l.b16 %v1160
      %v1205 = vunpack.c.l.b16 %v1161
      %v1206 = vunpack.c.l.b16 %v1162
      %v1207 = vpack.c.b16 %v1192, %v1191
      %v1208 = vpack.c.b16 %v1194, %v1193
      %v1209 = vpack.c.b16 %v1196, %v1195
      %v1210 = vpack.c.b16 %v1198, %v1197
      %v1211 = vpack.c.b16 %v1200, %v1199
      %v1212 = vpack.c.b16 %v1202, %v1201
      %v1213 = vpack.c.b16 %v1204, %v1203
      %v1214 = vpack.c.b16 %v1206, %v1205
      %1223 = vmatprep.subr.bf16.mxu0 0
      %1224 = vmatpush1.bf16.msra.mxu0 %v1214
      %1225 = vmatprep.subr.bf16.mxu0 0
      %1226 = vmatpush1.bf16.msra.mxu0 %v1213
      %1227 = vmatprep.subr.bf16.mxu0 0
      %1228 = vmatpush1.bf16.msra.mxu0 %v1212
      %1229 = vmatprep.subr.bf16.mxu0 0
      %1230 = vmatpush1.bf16.msra.mxu0 %v1211
      %1231 = vmatprep.subr.bf16.mxu0 0
      %1232 = vmatpush1.bf16.msra.mxu0 %v1210
      %1233 = vmatprep.subr.bf16.mxu0 0
      %1234 = vmatpush1.bf16.msra.mxu0 %v1209
      %1235 = vmatprep.subr.bf16.mxu0 0
      %1236 = vmatpush1.bf16.msra.mxu0 %v1208
      %1237 = vmatprep.subr.bf16.mxu0 0
      %1238 = vmatpush1.bf16.msra.mxu0 %v1207
      %1239 = vmatprep.subr.bf16.mxu0 0
      %1240 = vmatpush2.bf16.msra.mxu0 0
      %1241 = vmatprep.subr.bf16.mxu0 0
      %1242 = vmatpush2.bf16.msra.mxu0 0
      %1243 = vmatprep.subr.bf16.mxu0 0
      %1244 = vmatpush2.bf16.msra.mxu0 0
      %1245 = vmatprep.subr.bf16.mxu0 0
      %1246 = vmatpush2.bf16.msra.mxu0 0
      %1247 = vmatprep.subr.bf16.mxu0 0
      %1248 = vmatpush2.bf16.msra.mxu0 0
      %1249 = vmatprep.subr.bf16.mxu0 0
      %1250 = vmatpush2.bf16.msra.mxu0 0
      %1251 = vmatprep.subr.bf16.mxu0 0
      %1252 = vmatpush2.bf16.msra.mxu0 0
      %1253 = vmatprep.subr.bf16.mxu0 0
      %1254 = vmatpush2.bf16.msra.mxu0 0
      %1255 = vmatprep.mubr.bf16.mxu0 0
      %1256 = vmatmul.mubr.bf16.gmra.mxu0 %v1171
      %v1257 = vpop.f32.mrf.mxu0
      %v1258 = vadd.f32 0.0, %v1257
      %v1259 = vpop.f32.mrf.mxu0
      %v1260 = vpop.f32.mrf.mxu0
      %v1261 = vadd.f32 0.0, %v1260
      %v1262 = vpop.f32.mrf.mxu0
      %1263 = vmatprep.mubr.bf16.mxu0 0
      %1264 = vmatmul.mubr.bf16.gmra.mxu0 %v1172
      %v1265 = vpop.f32.mrf.mxu0
      %v1266 = vadd.f32 0.0, %v1265
      %v1267 = vpop.f32.mrf.mxu0
      %v1268 = vpop.f32.mrf.mxu0
      %v1269 = vadd.f32 0.0, %v1268
      %v1270 = vpop.f32.mrf.mxu0
      %1271 = vdwg.mxu0
      %v1272 = vadd.f32 %v1138, %v1258
      %v1273 = vadd.f32 %v1139, %v1261
      %v1274 = vadd.f32 %v1140, %v1266
      %v1275 = vadd.f32 %v1141, %v1269
      %v1276 = vld [vmem:[%s468 + $0x8] sm:$0xf]
      %v1277 = vld [vmem:[%s468 + $0xc] sm:$0xf]
      %v1278 = vld [vmem:[%s468 + $0x10] sm:$0xf]
      %v1279 = vld [vmem:[%s468 + $0x14] sm:$0xf]
      %s1280 = scalar_lea.vmem %s1, 512
      %v1281 = vld [vmem:[%s1280] sm:$0xf]
      %v1282 = vld [vmem:[%s1280 + $0x4] sm:$0xf]
      %v1283 = vld [vmem:[%s1280 + $0x8] sm:$0xf]
      %v1284 = vld [vmem:[%s1280 + $0xc] sm:$0xf]
      %v1285 = vld [vmem:[%s1280 + $0x10] sm:$0xf]
      %v1286 = vld [vmem:[%s1280 + $0x14] sm:$0xf]
      %v1287 = vld [vmem:[%s1280 + $0x18] sm:$0xf]
      %v1288 = vld [vmem:[%s1280 + $0x1c] sm:$0xf]
      %v1289 = vld [vmem:[%s1280 + $0x20] sm:$0xf]
      %v1290 = vld [vmem:[%s1280 + $0x24] sm:$0xf]
      %v1291 = vld [vmem:[%s1280 + $0x28] sm:$0xf]
      %v1292 = vld [vmem:[%s1280 + $0x2c] sm:$0xf]
      %v1293 = vld [vmem:[%s1280 + $0x30] sm:$0xf]
      %v1294 = vld [vmem:[%s1280 + $0x34] sm:$0xf]
      %v1295 = vld [vmem:[%s1280 + $0x38] sm:$0xf]
      %v1296 = vld [vmem:[%s1280 + $0x3c] sm:$0xf]
      %v1301 = vunpack.c.l.b16 %v1276
      %v1302 = vunpack.c.l.b16 %v1277
      %v1303 = vunpack.c.l.b16 %v1278
      %v1304 = vunpack.c.l.b16 %v1279
      %v1305 = vpack.c.b16 %v1302, %v1301
      %v1306 = vpack.c.b16 %v1304, %v1303
      %v1325 = vunpack.c.l.b16 %v1281
      %v1326 = vunpack.c.l.b16 %v1282
      %v1327 = vunpack.c.l.b16 %v1283
      %v1328 = vunpack.c.l.b16 %v1284
      %v1329 = vunpack.c.l.b16 %v1285
      %v1330 = vunpack.c.l.b16 %v1286
      %v1331 = vunpack.c.l.b16 %v1287
      %v1332 = vunpack.c.l.b16 %v1288
      %v1333 = vunpack.c.l.b16 %v1289
      %v1334 = vunpack.c.l.b16 %v1290
      %v1335 = vunpack.c.l.b16 %v1291
      %v1336 = vunpack.c.l.b16 %v1292
      %v1337 = vunpack.c.l.b16 %v1293
      %v1338 = vunpack.c.l.b16 %v1294
      %v1339 = vunpack.c.l.b16 %v1295
      %v1340 = vunpack.c.l.b16 %v1296
      %v1341 = vpack.c.b16 %v1326, %v1325
      %v1342 = vpack.c.b16 %v1328, %v1327
      %v1343 = vpack.c.b16 %v1330, %v1329
      %v1344 = vpack.c.b16 %v1332, %v1331
      %v1345 = vpack.c.b16 %v1334, %v1333
      %v1346 = vpack.c.b16 %v1336, %v1335
      %v1347 = vpack.c.b16 %v1338, %v1337
      %v1348 = vpack.c.b16 %v1340, %v1339
      %1357 = vmatprep.subr.bf16.mxu0 0
      %1358 = vmatpush1.bf16.msra.mxu0 %v1348
      %1359 = vmatprep.subr.bf16.mxu0 0
      %1360 = vmatpush1.bf16.msra.mxu0 %v1347
      %1361 = vmatprep.subr.bf16.mxu0 0
      %1362 = vmatpush1.bf16.msra.mxu0 %v1346
      %1363 = vmatprep.subr.bf16.mxu0 0
      %1364 = vmatpush1.bf16.msra.mxu0 %v1345
      %1365 = vmatprep.subr.bf16.mxu0 0
      %1366 = vmatpush1.bf16.msra.mxu0 %v1344
      %1367 = vmatprep.subr.bf16.mxu0 0
      %1368 = vmatpush1.bf16.msra.mxu0 %v1343
      %1369 = vmatprep.subr.bf16.mxu0 0
      %1370 = vmatpush1.bf16.msra.mxu0 %v1342
      %1371 = vmatprep.subr.bf16.mxu0 0
      %1372 = vmatpush1.bf16.msra.mxu0 %v1341
      %1373 = vmatprep.subr.bf16.mxu0 0
      %1374 = vmatpush2.bf16.msra.mxu0 0
      %1375 = vmatprep.subr.bf16.mxu0 0
      %1376 = vmatpush2.bf16.msra.mxu0 0
      %1377 = vmatprep.subr.bf16.mxu0 0
      %1378 = vmatpush2.bf16.msra.mxu0 0
      %1379 = vmatprep.subr.bf16.mxu0 0
      %1380 = vmatpush2.bf16.msra.mxu0 0
      %1381 = vmatprep.subr.bf16.mxu0 0
      %1382 = vmatpush2.bf16.msra.mxu0 0
      %1383 = vmatprep.subr.bf16.mxu0 0
      %1384 = vmatpush2.bf16.msra.mxu0 0
      %1385 = vmatprep.subr.bf16.mxu0 0
      %1386 = vmatpush2.bf16.msra.mxu0 0
      %1387 = vmatprep.subr.bf16.mxu0 0
      %1388 = vmatpush2.bf16.msra.mxu0 0
      %1389 = vmatprep.mubr.bf16.mxu0 0
      %1390 = vmatmul.mubr.bf16.gmra.mxu0 %v1305
      %v1391 = vpop.f32.mrf.mxu0
      %v1392 = vadd.f32 0.0, %v1391
      %v1393 = vpop.f32.mrf.mxu0
      %v1394 = vpop.f32.mrf.mxu0
      %v1395 = vadd.f32 0.0, %v1394
      %v1396 = vpop.f32.mrf.mxu0
      %1397 = vmatprep.mubr.bf16.mxu0 0
      %1398 = vmatmul.mubr.bf16.gmra.mxu0 %v1306
      %v1399 = vpop.f32.mrf.mxu0
      %v1400 = vadd.f32 0.0, %v1399
      %v1401 = vpop.f32.mrf.mxu0
      %v1402 = vpop.f32.mrf.mxu0
      %v1403 = vadd.f32 0.0, %v1402
      %v1404 = vpop.f32.mrf.mxu0
      %1405 = vdwg.mxu0
      %v1406 = vadd.f32 %v1272, %v1392
      %v1407 = vadd.f32 %v1273, %v1395
      %v1408 = vadd.f32 %v1274, %v1400
      %v1409 = vadd.f32 %v1275, %v1403
      %v1410 = vld [vmem:[%s2] sm:$0x1]
      %v1412 = vlaneseq
      %v1413 = vshrl.u32 %v1412, 7
      %v1414 = vsub.s32 0, %v1413
      %v1415 = vrot.slane %v1410, %v1414
      %v1417 = vadd.f32 %v1406, %v1415
      %v1418 = vadd.f32 %v1407, %v1415
      %v1419 = vadd.f32 %v1408, %v1415
      %v1420 = vadd.f32 %v1409, %v1415
      %v1421 = vmax.f32 %v1417, 0.0
      %v1422 = vmax.f32 %v1418, 0.0
      %v1423 = vmax.f32 %v1419, 0.0
      %v1424 = vmax.f32 %v1420, 0.0
      %v1425 = vpack.c.bf16 %v1422, %v1421
      %v1426 = vpack.c.bf16 %v1424, %v1423
      %v1429 = vunpack.c.l.b16 %v1425
      %v1430 = vunpack.c.h.b16 %v1425
      %v1431 = vunpack.c.l.b16 %v1426
      %v1432 = vunpack.c.h.b16 %v1426
      %v1433 = vpack.c.b16 %v1429, %v1429
      %v1434 = vpack.c.b16 %v1430, %v1430
      %v1435 = vpack.c.b16 %v1431, %v1431
      %v1436 = vpack.c.b16 %v1432, %v1432
      %1441 = vst [vmem:[%s206] sm:$0xf] %v1433
      %1442 = vst [vmem:[%s206 + $0x4] sm:$0xf] %v1434
      %1443 = vst [vmem:[%s206 + $0x8] sm:$0xf] %v1435
      %1444 = vst [vmem:[%s206 + $0xc] sm:$0xf] %v1436
      %p1445 = scmp.lt.s32.totalorder %s18, 1
      %s1446 = scalar_select %p1445, %s18, 1
      %p1447 = scmp.lt.s32.totalorder %s19, 0
      %s1448 = scalar_select %p1447, %s19, 0
      %s1449 = smul.addr %s1448, 4
      %s1450 = smul.addr %s1446, 4
      %s1451 = sadd.s32 %s1449, %s1450
      %s1452 = smul.addr %s1451, 4
      %s1453 = scalar_lea.vmem %s3, %s1452
      // Predicated region
      $region33: #{geo_localization_forward.6} parent=31 // pred_check
        %p1454 = pneg %p116
      $region34: #{geo_localization_forward.6} parent=31 // pred_check_branch
        %1456 = sbr.rel (%p1454) target = $region36
      $region35: #{geo_localization_forward.6} parent=31 // pred_region
        _
      $region36: #{geo_localization_forward.6} parent=31 // pred_fallthru
        _
    $region32: #{geo_localization_forward.6} parent=5 // pred_fallthru
      _
    %p1457 = scmp.le.s32.totalorder 2, %s9
    // Predicated region
    $region37: #{geo_localization_forward.6} parent=5 // pred_check
      %p1458 = pneg %p1457
    $region38: #{geo_localization_forward.6} parent=5 // pred_check_branch
      %1460 = sbr.rel (%p1458) target = $region40
    $region39: #{geo_localization_forward.6} parent=5 // pred_region
      %s1461 = ssub.s32 %s9, 2
      // Predicated region
      $region41: #{geo_localization_forward.6} parent=39 // pred_check
        %p1462 = pneg %p122
      $region42: #{geo_localization_forward.6} parent=39 // pred_check_branch
        %1464 = sbr.rel (%p1462) target = $region44
      $region43: #{geo_localization_forward.6} parent=39 // pred_region
        %p1465 = scmp.lt.s32.totalorder %s20, 1
        %s1466 = scalar_select %p1465, %s20, 1
        %p1467 = scmp.lt.s32.totalorder %s21, 0
        %s1468 = scalar_select %p1467, %s21, 0
        %s1469 = smul.addr %s1468, 4
        %s1470 = smul.addr %s1466, 4
        %s1471 = sadd.s32 %s1469, %s1470
        %s1472 = smul.addr %s1471, 4
        %s1473 = scalar_lea.vmem %s3, %s1472
      $region44: #{geo_localization_forward.6} parent=39 // pred_fallthru
        _
    $region40: #{geo_localization_forward.6} parent=5 // pred_fallthru
      _
  $region6: #{geo_localization_forward.6} parent=0 // loop_footer
    %s13 = sadd.s32 1, %s9
  $region7: #{geo_localization_forward.6} parent=0 // loop_footer_branch
    %8 = sbr.rel target = $region3
  $region8: #{geo_localization_forward.6} parent=0 // loop_exit
    _

</llo_original>
